<compile_context>
chip_gen: v7x
topology: tpu7x:2x2x1
jax: 0.10.0
libtpu: 0.0.40
codegen_flags: <defaults>
</compile_context>

<pallas_src>
import math
import functools

import jax
import jax.numpy as jnp
from jax.experimental import pallas as pl
from jax.experimental.pallas import tpu as pltpu


# --------------------------------------------------------------------------- #
# In-kernel helpers
# --------------------------------------------------------------------------- #
def _ln(v, g, b, eps):
    """LayerNorm over the last axis (f32 math, matches nn.LayerNorm eps=1e-5)."""
    mu = jnp.mean(v, axis=-1, keepdims=True)
    vc = v - mu
    var = jnp.mean(vc * vc, axis=-1, keepdims=True)
    return vc * jax.lax.rsqrt(var + eps) * g + b


def _mm(a, w):
    """Matmul with bf16 MXU operands and f32 accumulation (weight cast is a
    trace-time no-op for the pre-cast bf16 weights)."""
    return jnp.dot(a.astype(jnp.bfloat16), w.astype(jnp.bfloat16),
                   preferred_element_type=jnp.float32)


def _lrelu(x):
    # TODO(synk): mattstools.DenseNetwork source not provided; assumed
    # Linear -> LeakyReLU(slope 0.1) -> Linear with ctxt concatenated at input.
    return jnp.maximum(x, 0.1 * x)


def _rows(per_batch, seq_len):
    """Expand a per-batch (Bt, F) row to (Bt*seq_len, F) rows (batch-major)."""
    bt, f = per_batch.shape
    if bt == 1:
        return per_batch                         # broadcasts against (S, F)
    return jnp.broadcast_to(per_batch[:, None, :],
                            (bt, seq_len, f)).reshape(bt * seq_len, f)


# --------------------------------------------------------------------------- #
# BlockSpec helpers (grid = (num_batch_blocks,))
# --------------------------------------------------------------------------- #
def _batch_spec(block_shape):
    n = len(block_shape)
    return pl.BlockSpec(block_shape, lambda b: (b,) + (0,) * (n - 1))


def _full_spec(shape):
    n = len(shape)
    return pl.BlockSpec(shape, lambda b: (0,) * n)


def _pick_bt(batch):
    """Batch elements per grid step: keep >= 2 grid steps where possible (v7x
    has 2 TensorCores) while batching rows for the MXU when batch is large."""
    if batch <= 2:
        return 1
    for bt in (8, 4, 2):
        if batch % bt == 0 and batch // bt >= 2:
            return bt
    return 1


# --------------------------------------------------------------------------- #
# The single fused kernel
# --------------------------------------------------------------------------- #
def _fused_tvd_kernel(
    # per-batch inputs
    noise_ref, mask_ref, vec_ref, vec_cb_ref, dense_cb_ref, out_cb_ref,
    # input vector embedder
    vec_w1_ref, vec_w2_ref, vec_b2_ref,
    # stacked decoder layers
    presa_g, presa_b, qkv_w, qkv_b, saln_g, saln_b, saout_w, saout_b,
    prec2_g, prec2_b, cav_w, cav_b, caln_g, caln_b, caout_w, caout_b,
    prenn_g, prenn_b, dnn_w1x, dnn_w2, dnn_b2,
    # final norm + output embedder
    fin_g, fin_b, out_w1x, out_w2, out_b2,
    # output
    o_ref,
    *, num_heads, num_layers, eps):
    """Whole FullTransformerVectorDecoder forward for one batch block."""
    Bt, S, D = noise_ref.shape
    R = Bt * S
    dh = D // num_heads
    scale = 1.0 / math.sqrt(dh)

    # ---- input vector embedder (DenseNetwork) -> length-1 kv sequence -------
    v_in = vec_ref[...].reshape(Bt, -1).astype(jnp.float32)        # (Bt, inpt)
    h0 = _lrelu(_mm(v_in, vec_w1_ref[...])
                + vec_cb_ref[...].reshape(Bt, -1).astype(jnp.float32))
    kv = _mm(h0, vec_w2_ref[...]) + vec_b2_ref[...]                # (Bt, D)

    # ---- q-sequence: gaussian noise scaled by the mask -----------------------
    mask = mask_ref[...].astype(jnp.float32).reshape(R, 1)
    x = noise_ref[...].astype(jnp.float32).reshape(R, D) * mask

    dense_cb = dense_cb_ref[...].astype(jnp.float32)               # (Bt, L, Hd)

    # ---- decoder layers (static unroll, weights stay VMEM-resident) ---------
    for l in range(num_layers):
        # ----- self-attention block -----
        xn = _ln(x, presa_g[l], presa_b[l], eps)
        qkv = _mm(xn, qkv_w[l]) + qkv_b[l]                         # (R, 3D)
        per_batch = []
        for b in range(Bt):
            r0 = b * S
            q_b = qkv[r0:r0 + S, 0 * D:1 * D]
            k_b = qkv[r0:r0 + S, 1 * D:2 * D]
            v_b = qkv[r0:r0 + S, 2 * D:3 * D]
            heads = []
            for hh in range(num_heads):
                c0 = hh * dh
                qh = (q_b[:, c0:c0 + dh] * scale).astype(jnp.bfloat16)
                kh = k_b[:, c0:c0 + dh].astype(jnp.bfloat16)
                vh = v_b[:, c0:c0 + dh]
                s = jax.lax.dot_general(qh, kh, (((1,), (1,)), ((), ())),
                                        preferred_element_type=jnp.float32)
                s = s - jnp.max(s, axis=-1, keepdims=True)
                p = jnp.exp(s)
                p = p * pl.reciprocal(jnp.sum(p, axis=-1, keepdims=True),
                                      approx=True)
                heads.append(_mm(p, vh))                           # (S, dh)
            per_batch.append(jnp.concatenate(heads, axis=-1))      # (S, D)
        a = per_batch[0] if Bt == 1 else jnp.concatenate(per_batch, axis=0)
        a = _ln(a, saln_g[l], saln_b[l], eps)
        x = x + _mm(a, saout_w[l]) + saout_b[l]

        # ----- cross-attention block (kv length 1 -> softmax == 1) -----------
        # q/k projections and norm_preC1 are dead compute and skipped.
        kvn = _ln(kv, prec2_g[l], prec2_b[l], eps)                 # (Bt, D)
        v1 = _mm(kvn, cav_w[l]) + cav_b[l]
        v1 = _ln(v1, caln_g[l], caln_b[l], eps)
        add = _mm(v1, caout_w[l]) + caout_b[l]                     # (Bt, D)
        x = x + _rows(add, S)

        # ----- dense network block --------------------------------------------
        xn = _ln(x, prenn_g[l], prenn_b[l], eps)
        h1 = _lrelu(_mm(xn, dnn_w1x[l]) + _rows(dense_cb[:, l, :], S))
        x = x + _mm(h1, dnn_w2[l]) + dnn_b2[l]

    # ---- final norm + output embedder + mask fill ----------------------------
    xf = _ln(x, fin_g[...], fin_b[...], eps)
    h1 = _lrelu(_mm(xf, out_w1x[...])
                + _rows(out_cb_ref[...].reshape(Bt, -1).astype(jnp.float32), S))
    y = _mm(h1, out_w2[...]) + out_b2[...]                         # (R, outp)
    y = y * mask
    o_ref[...] = y.reshape(Bt, S, -1).astype(o_ref.dtype)


# --------------------------------------------------------------------------- #
# One-time weight preparation (outside jit): stack layers, pre-cast to bf16
# --------------------------------------------------------------------------- #
def prepare_params(params, inpt_dim, model_dim):
    D = model_dim
    bf = lambda a: a.astype(jnp.bfloat16)
    r1 = lambda a: a.reshape(1, -1)
    layers = params["layers"]
    st = lambda fn: jnp.stack([fn(p) for p in layers])
    strow = lambda fn: st(fn)[:, None, :]                  # (L, 1, F)

    ve, oe = params["vec_embd"], params["outp_embd"]
    dnn_w1 = st(lambda p: p["dense"]["lin1"]["w"])         # (L, D+C, Hd)

    return {
        # input vector embedder
        "vec_w1x": bf(ve["lin1"]["w"][:inpt_dim]),
        "vec_w1c": ve["lin1"]["w"][inpt_dim:],
        "vec_b1":  r1(ve["lin1"]["b"]),
        "vec_w2":  bf(ve["lin2"]["w"]),
        "vec_b2":  r1(ve["lin2"]["b"]),
        # stacked decoder layers
        "presa_g": strow(lambda p: p["norm_preSA"]["g"]),
        "presa_b": strow(lambda p: p["norm_preSA"]["b"]),
        "qkv_w":   bf(st(lambda p: p["self_attn"]["all"]["w"])),
        "qkv_b":   strow(lambda p: p["self_attn"]["all"]["b"]),
        "saln_g":  strow(lambda p: p["self_attn"]["ln"]["g"]),
        "saln_b":  strow(lambda p: p["self_attn"]["ln"]["b"]),
        "saout_w": bf(st(lambda p: p["self_attn"]["out"]["w"])),
        "saout_b": strow(lambda p: p["self_attn"]["out"]["b"]),
        "prec2_g": strow(lambda p: p["norm_preC2"]["g"]),
        "prec2_b": strow(lambda p: p["norm_preC2"]["b"]),
        "cav_w":   bf(st(lambda p: p["cross_attn"]["v"]["w"])),
        "cav_b":   strow(lambda p: p["cross_attn"]["v"]["b"]),
        "caln_g":  strow(lambda p: p["cross_attn"]["ln"]["g"]),
        "caln_b":  strow(lambda p: p["cross_attn"]["ln"]["b"]),
        "caout_w": bf(st(lambda p: p["cross_attn"]["out"]["w"])),
        "caout_b": strow(lambda p: p["cross_attn"]["out"]["b"]),
        "prenn_g": strow(lambda p: p["norm_preNN"]["g"]),
        "prenn_b": strow(lambda p: p["norm_preNN"]["b"]),
        "dnn_w1x": bf(dnn_w1[:, :D, :]),
        "dnn_w1c": dnn_w1[:, D:, :],
        "dnn_b1":  strow(lambda p: p["dense"]["lin1"]["b"]),
        "dnn_w2":  bf(st(lambda p: p["dense"]["lin2"]["w"])),
        "dnn_b2":  strow(lambda p: p["dense"]["lin2"]["b"]),
        # final norm + output embedder
        "fin_g":   r1(params["final_norm"]["g"]),
        "fin_b":   r1(params["final_norm"]["b"]),
        "out_w1x": bf(oe["lin1"]["w"][:D]),
        "out_w1c": oe["lin1"]["w"][D:],
        "out_b1":  r1(oe["lin1"]["b"]),
        "out_w2":  bf(oe["lin2"]["w"]),
        "out_b2":  r1(oe["lin2"]["b"]),
    }


# --------------------------------------------------------------------------- #
# Forward pass: one pallas_call
# --------------------------------------------------------------------------- #
def full_transformer_vector_decoder(prep, vec, mask, ctxt, noise_key, *,
                                    model_dim, num_heads):
    B, S = mask.shape
    D = model_dim
    L = prep["qkv_w"].shape[0]
    inpt = prep["vec_w1x"].shape[0]
    outp = prep["out_w2"].shape[1]

    mask3 = mask.astype(jnp.float32)[..., None]                       # (B, S, 1)
    noise = jax.random.normal(noise_key, (B, S, D), jnp.float32)      # q_seq init
    vec3 = vec.reshape(B, 1, inpt)

    # ctxt contribution of every DenseNetwork first layer, hoisted out of the
    # kernel (C is tiny, so these would be wasted MXU pushes per grid step).
    vec_cb = (ctxt @ prep["vec_w1c"] + prep["vec_b1"])[:, None, :]    # (B, 1, Hv)
    out_cb = (ctxt @ prep["out_w1c"] + prep["out_b1"])[:, None, :]    # (B, 1, Ho)
    dense_cb = (jnp.einsum("bc,lch->blh", ctxt, prep["dnn_w1c"])
                + prep["dnn_b1"].transpose(1, 0, 2))                  # (B, L, Hd)

    Bt = _pick_bt(B)
    assert B % Bt == 0
    grid = (B // Bt,)

    batch_inputs = [noise, mask3, vec3, vec_cb, dense_cb, out_cb]
    weight_keys = ["vec_w1x", "vec_w2", "vec_b2",
                   "presa_g", "presa_b", "qkv_w", "qkv_b",
                   "saln_g", "saln_b", "saout_w", "saout_b",
                   "prec2_g", "prec2_b", "cav_w", "cav_b",
                   "caln_g", "caln_b", "caout_w", "caout_b",
                   "prenn_g", "prenn_b", "dnn_w1x", "dnn_w2", "dnn_b2",
                   "fin_g", "fin_b", "out_w1x", "out_w2", "out_b2"]
    weight_inputs = [prep[k] for k in weight_keys]

    in_specs = ([_batch_spec((Bt,) + a.shape[1:]) for a in batch_inputs]
                + [_full_spec(a.shape) for a in weight_inputs])

    kernel = functools.partial(_fused_tvd_kernel, num_heads=num_heads,
                               num_layers=L, eps=1e-5)
    return pl.pallas_call(
        kernel,
        grid=grid,
        in_specs=in_specs,
        out_specs=_batch_spec((Bt, S, outp)),
        out_shape=jax.ShapeDtypeStruct((B, S, outp), vec.dtype),
        compiler_params=pltpu.CompilerParams(
            dimension_semantics=("parallel",),
            vmem_limit_bytes=32 * 1024 * 1024),
    )(*batch_inputs, *weight_inputs)


# --------------------------------------------------------------------------- #
# Parameter initialisation (deterministic, synthetic)
# --------------------------------------------------------------------------- #
def init_linear_params(key, din, dout):
    kw, kb = jax.random.split(key)
    lim = 1.0 / math.sqrt(din)
    return {"w": jax.random.uniform(kw, (din, dout), jnp.float32, -lim, lim),
            "b": jax.random.uniform(kb, (dout,), jnp.float32, -lim, lim)}


def init_layernorm_params(d):
    return {"g": jnp.ones((d,), jnp.float32), "b": jnp.zeros((d,), jnp.float32)}


def init_dense_network(key, inpt_dim, outp_dim, ctxt_dim, hddn_dim):
    k1, k2 = jax.random.split(key)
    return {"lin1": init_linear_params(k1, inpt_dim + ctxt_dim, hddn_dim),
            "lin2": init_linear_params(k2, hddn_dim, outp_dim)}


def init_mha(key, model_dim, do_casual):
    keys = jax.random.split(key, 4)
    p = {"ln": init_layernorm_params(model_dim),
         "out": init_linear_params(keys[0], model_dim, model_dim)}
    if do_casual:
        p["all"] = init_linear_params(keys[1], model_dim, 3 * model_dim)
    else:
        # q/k exist for structural parity with the PyTorch module but are dead
        # compute for the length-1 kv sequence and never enter the kernel.
        p["q"] = init_linear_params(keys[1], model_dim, model_dim)
        p["k"] = init_linear_params(keys[2], model_dim, model_dim)
        p["v"] = init_linear_params(keys[3], model_dim, model_dim)
    return p


def init_decoder_layer(key, model_dim, ctxt_dim, hddn_dim):
    keys = jax.random.split(key, 3)
    return {
        "self_attn": init_mha(keys[0], model_dim, True),
        "cross_attn": init_mha(keys[1], model_dim, False),
        "dense": init_dense_network(keys[2], model_dim, model_dim, ctxt_dim, hddn_dim),
        "norm_preSA": init_layernorm_params(model_dim),
        "norm_preC1": init_layernorm_params(model_dim),   # dead for length-1 kv
        "norm_preC2": init_layernorm_params(model_dim),
        "norm_preNN": init_layernorm_params(model_dim),
    }


def init_full_tvd(key, inpt_dim, outp_dim, ctxt_dim, model_dim, num_layers, hddn_dim):
    keys = jax.random.split(key, num_layers + 2)
    return {
        "vec_embd": init_dense_network(keys[0], inpt_dim, model_dim, ctxt_dim, hddn_dim),
        "layers": [init_decoder_layer(keys[1 + i], model_dim, ctxt_dim, hddn_dim)
                   for i in range(num_layers)],
        "final_norm": init_layernorm_params(model_dim),
        "outp_embd": init_dense_network(keys[-1], model_dim, outp_dim, ctxt_dim, hddn_dim),
    }


# --------------------------------------------------------------------------- #
# Main
# --------------------------------------------------------------------------- #
if __name__ == "__main__":
    INPT_DIM, OUTP_DIM, CTXT_DIM = 10, 6, 4
    MODEL_DIM, NUM_LAYERS, NUM_HEADS, HDDN = 64, 2, 4, 32
    B, S = 2, 8

    root = jax.random.PRNGKey(0)
    k_param, k_vec, k_ctxt, k_noise = jax.random.split(root, 4)

    params = init_full_tvd(k_param, INPT_DIM, OUTP_DIM, CTXT_DIM,
                           MODEL_DIM, NUM_LAYERS, HDDN)
    prep = prepare_params(params, INPT_DIM, MODEL_DIM)

    vec = jax.random.normal(k_vec, (B, INPT_DIM), jnp.float32)
    ctxt = jax.random.normal(k_ctxt, (B, CTXT_DIM), jnp.float32)
    mask = jnp.arange(S)[None, :] < jnp.array([[S], [S - 3]])          # (B, S) bool

    fwd = jax.jit(functools.partial(full_transformer_vector_decoder,
                                    model_dim=MODEL_DIM, num_heads=NUM_HEADS))
    out = fwd(prep, vec, mask, ctxt, k_noise)
    jax.block_until_ready(out)
    assert out.shape == (B, S, OUTP_DIM)
    assert bool(jnp.all(jnp.isfinite(out)))
    print("KERNEL_OK")
</pallas_src>

<mosaic_0001>
module attributes {stable_mosaic.version = 11 : i64} {
  func.func @_fused_tvd_kernel(%arg0: i32, %arg1: memref<1x8x64xf32, #tpu.memory_space<vmem>>, %arg2: memref<1x8x1xf32, #tpu.memory_space<vmem>>, %arg3: memref<1x1x10xf32, #tpu.memory_space<vmem>>, %arg4: memref<1x1x32xf32, #tpu.memory_space<vmem>>, %arg5: memref<1x2x32xf32, #tpu.memory_space<vmem>>, %arg6: memref<1x1x32xf32, #tpu.memory_space<vmem>>, %arg7: memref<10x32xbf16, #tpu.memory_space<vmem>>, %arg8: memref<32x64xbf16, #tpu.memory_space<vmem>>, %arg9: memref<1x64xf32, #tpu.memory_space<vmem>>, %arg10: memref<2x1x64xf32, #tpu.memory_space<vmem>>, %arg11: memref<2x1x64xf32, #tpu.memory_space<vmem>>, %arg12: memref<2x64x192xbf16, #tpu.memory_space<vmem>>, %arg13: memref<2x1x192xf32, #tpu.memory_space<vmem>>, %arg14: memref<2x1x64xf32, #tpu.memory_space<vmem>>, %arg15: memref<2x1x64xf32, #tpu.memory_space<vmem>>, %arg16: memref<2x64x64xbf16, #tpu.memory_space<vmem>>, %arg17: memref<2x1x64xf32, #tpu.memory_space<vmem>>, %arg18: memref<2x1x64xf32, #tpu.memory_space<vmem>>, %arg19: memref<2x1x64xf32, #tpu.memory_space<vmem>>, %arg20: memref<2x64x64xbf16, #tpu.memory_space<vmem>>, %arg21: memref<2x1x64xf32, #tpu.memory_space<vmem>>, %arg22: memref<2x1x64xf32, #tpu.memory_space<vmem>>, %arg23: memref<2x1x64xf32, #tpu.memory_space<vmem>>, %arg24: memref<2x64x64xbf16, #tpu.memory_space<vmem>>, %arg25: memref<2x1x64xf32, #tpu.memory_space<vmem>>, %arg26: memref<2x1x64xf32, #tpu.memory_space<vmem>>, %arg27: memref<2x1x64xf32, #tpu.memory_space<vmem>>, %arg28: memref<2x64x32xbf16, #tpu.memory_space<vmem>>, %arg29: memref<2x32x64xbf16, #tpu.memory_space<vmem>>, %arg30: memref<2x1x64xf32, #tpu.memory_space<vmem>>, %arg31: memref<1x64xf32, #tpu.memory_space<vmem>>, %arg32: memref<1x64xf32, #tpu.memory_space<vmem>>, %arg33: memref<64x32xbf16, #tpu.memory_space<vmem>>, %arg34: memref<32x6xbf16, #tpu.memory_space<vmem>>, %arg35: memref<1x6xf32, #tpu.memory_space<vmem>>, %arg36: memref<1x8x6xf32, #tpu.memory_space<vmem>>) attributes {dimension_semantics = [#tpu.dimension_semantics<parallel>], iteration_bounds = array<i64: 2>, scalar_prefetch = 0 : i64, scratch_operands = 0 : i64, tpu.core_type = #tpu.core_type<tc>, window_params = [{transform_indices = @transform_0, window_bounds = array<i64: 1, 8, 64>}, {transform_indices = @transform_1, window_bounds = array<i64: 1, 8, 1>}, {transform_indices = @transform_2, window_bounds = array<i64: 1, 1, 10>}, {transform_indices = @transform_3, window_bounds = array<i64: 1, 1, 32>}, {transform_indices = @transform_4, window_bounds = array<i64: 1, 2, 32>}, {transform_indices = @transform_5, window_bounds = array<i64: 1, 1, 32>}, {pipeline_mode = #tpu.pipeline_mode<synchronous>, transform_indices = @transform_6, window_bounds = array<i64: 10, 32>}, {pipeline_mode = #tpu.pipeline_mode<synchronous>, transform_indices = @transform_7, window_bounds = array<i64: 32, 64>}, {pipeline_mode = #tpu.pipeline_mode<synchronous>, transform_indices = @transform_8, window_bounds = array<i64: 1, 64>}, {pipeline_mode = #tpu.pipeline_mode<synchronous>, transform_indices = @transform_9, window_bounds = array<i64: 2, 1, 64>}, {pipeline_mode = #tpu.pipeline_mode<synchronous>, transform_indices = @transform_10, window_bounds = array<i64: 2, 1, 64>}, {pipeline_mode = #tpu.pipeline_mode<synchronous>, transform_indices = @transform_11, window_bounds = array<i64: 2, 64, 192>}, {pipeline_mode = #tpu.pipeline_mode<synchronous>, transform_indices = @transform_12, window_bounds = array<i64: 2, 1, 192>}, {pipeline_mode = #tpu.pipeline_mode<synchronous>, transform_indices = @transform_13, window_bounds = array<i64: 2, 1, 64>}, {pipeline_mode = #tpu.pipeline_mode<synchronous>, transform_indices = @transform_14, window_bounds = array<i64: 2, 1, 64>}, {pipeline_mode = #tpu.pipeline_mode<synchronous>, transform_indices = @transform_15, window_bounds = array<i64: 2, 64, 64>}, {pipeline_mode = #tpu.pipeline_mode<synchronous>, transform_indices = @transform_16, window_bounds = array<i64: 2, 1, 64>}, {pipeline_mode = #tpu.pipeline_mode<synchronous>, transform_indices = @transform_17, window_bounds = array<i64: 2, 1, 64>}, {pipeline_mode = #tpu.pipeline_mode<synchronous>, transform_indices = @transform_18, window_bounds = array<i64: 2, 1, 64>}, {pipeline_mode = #tpu.pipeline_mode<synchronous>, transform_indices = @transform_19, window_bounds = array<i64: 2, 64, 64>}, {pipeline_mode = #tpu.pipeline_mode<synchronous>, transform_indices = @transform_20, window_bounds = array<i64: 2, 1, 64>}, {pipeline_mode = #tpu.pipeline_mode<synchronous>, transform_indices = @transform_21, window_bounds = array<i64: 2, 1, 64>}, {pipeline_mode = #tpu.pipeline_mode<synchronous>, transform_indices = @transform_22, window_bounds = array<i64: 2, 1, 64>}, {pipeline_mode = #tpu.pipeline_mode<synchronous>, transform_indices = @transform_23, window_bounds = array<i64: 2, 64, 64>}, {pipeline_mode = #tpu.pipeline_mode<synchronous>, transform_indices = @transform_24, window_bounds = array<i64: 2, 1, 64>}, {pipeline_mode = #tpu.pipeline_mode<synchronous>, transform_indices = @transform_25, window_bounds = array<i64: 2, 1, 64>}, {pipeline_mode = #tpu.pipeline_mode<synchronous>, transform_indices = @transform_26, window_bounds = array<i64: 2, 1, 64>}, {pipeline_mode = #tpu.pipeline_mode<synchronous>, transform_indices = @transform_27, window_bounds = array<i64: 2, 64, 32>}, {pipeline_mode = #tpu.pipeline_mode<synchronous>, transform_indices = @transform_28, window_bounds = array<i64: 2, 32, 64>}, {pipeline_mode = #tpu.pipeline_mode<synchronous>, transform_indices = @transform_29, window_bounds = array<i64: 2, 1, 64>}, {pipeline_mode = #tpu.pipeline_mode<synchronous>, transform_indices = @transform_30, window_bounds = array<i64: 1, 64>}, {pipeline_mode = #tpu.pipeline_mode<synchronous>, transform_indices = @transform_31, window_bounds = array<i64: 1, 64>}, {pipeline_mode = #tpu.pipeline_mode<synchronous>, transform_indices = @transform_32, window_bounds = array<i64: 64, 32>}, {pipeline_mode = #tpu.pipeline_mode<synchronous>, transform_indices = @transform_33, window_bounds = array<i64: 32, 6>}, {pipeline_mode = #tpu.pipeline_mode<synchronous>, transform_indices = @transform_34, window_bounds = array<i64: 1, 6>}, {transform_indices = @transform_35, window_bounds = array<i64: 1, 8, 6>}]} {
    %c0 = arith.constant 0 : index
    %c0_0 = arith.constant 0 : index
    %c0_1 = arith.constant 0 : index
    %0 = vector.load %arg3[%c0, %c0_0, %c0_1] : memref<1x1x10xf32, #tpu.memory_space<vmem>>, vector<1x1x10xf32>
    %1 = vector.shape_cast %0 : vector<1x1x10xf32> to vector<1x10xf32>
    %c0_2 = arith.constant 0 : index
    %c0_3 = arith.constant 0 : index
    %2 = vector.load %arg7[%c0_2, %c0_3] : memref<10x32xbf16, #tpu.memory_space<vmem>>, vector<10x32xbf16>
    %3 = arith.truncf %1 : vector<1x10xf32> to vector<1x10xbf16>
    %cst = arith.constant dense<0.000000e+00> : vector<1x32xf32>
    %4 = tpu.matmul %3, %2, %cst {dimension_numbers = #tpu.dot_dimension_numbers<[1], [0], [0], [1], [0, 0, 1, 1], [], []>} : vector<1x10xbf16>, vector<10x32xbf16>, vector<1x32xf32> -> vector<1x32xf32>
    %c0_4 = arith.constant 0 : index
    %c0_5 = arith.constant 0 : index
    %c0_6 = arith.constant 0 : index
    %5 = vector.load %arg4[%c0_4, %c0_5, %c0_6] : memref<1x1x32xf32, #tpu.memory_space<vmem>>, vector<1x1x32xf32>
    %6 = vector.shape_cast %5 : vector<1x1x32xf32> to vector<1x32xf32>
    %7 = arith.addf %4, %6 : vector<1x32xf32>
    %cst_7 = arith.constant 1.000000e-01 : f32
    %8 = vector.broadcast %cst_7 : f32 to vector<1x32xf32>
    %9 = arith.mulf %8, %7 : vector<1x32xf32>
    %10 = arith.maximumf %7, %9 : vector<1x32xf32>
    %c0_8 = arith.constant 0 : index
    %c0_9 = arith.constant 0 : index
    %11 = vector.load %arg8[%c0_8, %c0_9] : memref<32x64xbf16, #tpu.memory_space<vmem>>, vector<32x64xbf16>
    %12 = arith.truncf %10 : vector<1x32xf32> to vector<1x32xbf16>
    %cst_10 = arith.constant dense<0.000000e+00> : vector<1x64xf32>
    %13 = tpu.matmul %12, %11, %cst_10 {dimension_numbers = #tpu.dot_dimension_numbers<[1], [0], [0], [1], [0, 0, 1, 1], [], []>} : vector<1x32xbf16>, vector<32x64xbf16>, vector<1x64xf32> -> vector<1x64xf32>
    %c0_11 = arith.constant 0 : index
    %c0_12 = arith.constant 0 : index
    %14 = vector.load %arg9[%c0_11, %c0_12] : memref<1x64xf32, #tpu.memory_space<vmem>>, vector<1x64xf32>
    %15 = arith.addf %13, %14 : vector<1x64xf32>
    %c0_13 = arith.constant 0 : index
    %c0_14 = arith.constant 0 : index
    %c0_15 = arith.constant 0 : index
    %16 = vector.load %arg2[%c0_13, %c0_14, %c0_15] : memref<1x8x1xf32, #tpu.memory_space<vmem>>, vector<1x8x1xf32>
    %17 = vector.shape_cast %16 : vector<1x8x1xf32> to vector<8x1xf32>
    %c0_16 = arith.constant 0 : index
    %c0_17 = arith.constant 0 : index
    %c0_18 = arith.constant 0 : index
    %18 = vector.load %arg1[%c0_16, %c0_17, %c0_18] : memref<1x8x64xf32, #tpu.memory_space<vmem>>, vector<1x8x64xf32>
    %19 = vector.shape_cast %18 : vector<1x8x64xf32> to vector<8x64xf32>
    %20 = vector.broadcast %17 : vector<8x1xf32> to vector<8x64xf32>
    %21 = arith.mulf %19, %20 : vector<8x64xf32>
    %c0_19 = arith.constant 0 : index
    %c0_20 = arith.constant 0 : index
    %c0_21 = arith.constant 0 : index
    %22 = vector.load %arg5[%c0_19, %c0_20, %c0_21] : memref<1x2x32xf32, #tpu.memory_space<vmem>>, vector<1x2x32xf32>
    %c0_22 = arith.constant 0 : index
    %c0_23 = arith.constant 0 : index
    %c0_24 = arith.constant 0 : index
    %23 = vector.load %arg10[%c0_22, %c0_23, %c0_24] : memref<2x1x64xf32, #tpu.memory_space<vmem>>, vector<1x1x64xf32>
    %24 = vector.shape_cast %23 : vector<1x1x64xf32> to vector<1x64xf32>
    %c0_25 = arith.constant 0 : index
    %c0_26 = arith.constant 0 : index
    %c0_27 = arith.constant 0 : index
    %25 = vector.load %arg11[%c0_25, %c0_26, %c0_27] : memref<2x1x64xf32, #tpu.memory_space<vmem>>, vector<1x1x64xf32>
    %26 = vector.shape_cast %25 : vector<1x1x64xf32> to vector<1x64xf32>
    %cst_28 = arith.constant dense<0.000000e+00> : vector<8xf32>
    %27 = vector.multi_reduction <add>, %21, %cst_28 [1] : vector<8x64xf32> to vector<8xf32>
    %28 = vector.shape_cast %27 : vector<8xf32> to vector<8x1xf32>
    %cst_29 = arith.constant 6.400000e+01 : f32
    %29 = vector.broadcast %cst_29 : f32 to vector<8x1xf32>
    %30 = arith.divf %28, %29 : vector<8x1xf32>
    %31 = vector.broadcast %30 : vector<8x1xf32> to vector<8x64xf32>
    %32 = arith.subf %21, %31 : vector<8x64xf32>
    %33 = arith.mulf %32, %32 : vector<8x64xf32>
    %cst_30 = arith.constant dense<0.000000e+00> : vector<8xf32>
    %34 = vector.multi_reduction <add>, %33, %cst_30 [1] : vector<8x64xf32> to vector<8xf32>
    %35 = vector.shape_cast %34 : vector<8xf32> to vector<8x1xf32>
    %cst_31 = arith.constant 6.400000e+01 : f32
    %36 = vector.broadcast %cst_31 : f32 to vector<8x1xf32>
    %37 = arith.divf %35, %36 : vector<8x1xf32>
    %cst_32 = arith.constant 9.99999974E-6 : f32
    %38 = vector.broadcast %cst_32 : f32 to vector<8x1xf32>
    %39 = arith.addf %37, %38 : vector<8x1xf32>
    %40 = math.rsqrt %39 : vector<8x1xf32>
    %41 = vector.broadcast %40 : vector<8x1xf32> to vector<8x64xf32>
    %42 = arith.mulf %32, %41 : vector<8x64xf32>
    %43 = vector.broadcast %24 : vector<1x64xf32> to vector<8x64xf32>
    %44 = arith.mulf %42, %43 : vector<8x64xf32>
    %45 = vector.broadcast %26 : vector<1x64xf32> to vector<8x64xf32>
    %46 = arith.addf %44, %45 : vector<8x64xf32>
    %c0_33 = arith.constant 0 : index
    %c0_34 = arith.constant 0 : index
    %c0_35 = arith.constant 0 : index
    %47 = vector.load %arg12[%c0_33, %c0_34, %c0_35] : memref<2x64x192xbf16, #tpu.memory_space<vmem>>, vector<1x64x192xbf16>
    %48 = vector.shape_cast %47 : vector<1x64x192xbf16> to vector<64x192xbf16>
    %49 = arith.truncf %46 : vector<8x64xf32> to vector<8x64xbf16>
    %cst_36 = arith.constant dense<0.000000e+00> : vector<8x192xf32>
    %50 = tpu.matmul %49, %48, %cst_36 {dimension_numbers = #tpu.dot_dimension_numbers<[1], [0], [0], [1], [0, 0, 1, 1], [], []>} : vector<8x64xbf16>, vector<64x192xbf16>, vector<8x192xf32> -> vector<8x192xf32>
    %c0_37 = arith.constant 0 : index
    %c0_38 = arith.constant 0 : index
    %c0_39 = arith.constant 0 : index
    %51 = vector.load %arg13[%c0_37, %c0_38, %c0_39] : memref<2x1x192xf32, #tpu.memory_space<vmem>>, vector<1x1x192xf32>
    %52 = vector.shape_cast %51 : vector<1x1x192xf32> to vector<1x192xf32>
    %53 = vector.broadcast %52 : vector<1x192xf32> to vector<8x192xf32>
    %54 = arith.addf %50, %53 : vector<8x192xf32>
    %55 = vector.extract_strided_slice %54 {offsets = [0, 0], sizes = [8, 64], strides = [1, 1]} : vector<8x192xf32> to vector<8x64xf32>
    %56 = vector.extract_strided_slice %54 {offsets = [0, 64], sizes = [8, 64], strides = [1, 1]} : vector<8x192xf32> to vector<8x64xf32>
    %57 = vector.extract_strided_slice %54 {offsets = [0, 128], sizes = [8, 64], strides = [1, 1]} : vector<8x192xf32> to vector<8x64xf32>
    %58 = vector.extract_strided_slice %55 {offsets = [0, 0], sizes = [8, 16], strides = [1, 1]} : vector<8x64xf32> to vector<8x16xf32>
    %cst_40 = arith.constant 2.500000e-01 : f32
    %59 = vector.broadcast %cst_40 : f32 to vector<8x16xf32>
    %60 = arith.mulf %58, %59 : vector<8x16xf32>
    %61 = arith.truncf %60 : vector<8x16xf32> to vector<8x16xbf16>
    %62 = vector.extract_strided_slice %56 {offsets = [0, 0], sizes = [8, 16], strides = [1, 1]} : vector<8x64xf32> to vector<8x16xf32>
    %63 = arith.truncf %62 : vector<8x16xf32> to vector<8x16xbf16>
    %64 = vector.extract_strided_slice %57 {offsets = [0, 0], sizes = [8, 16], strides = [1, 1]} : vector<8x64xf32> to vector<8x16xf32>
    %cst_41 = arith.constant dense<0.000000e+00> : vector<8x8xf32>
    %65 = tpu.matmul %61, %63, %cst_41 {dimension_numbers = #tpu.dot_dimension_numbers<[1], [1], [0], [0], [0, 0, 1, 0], [], []>} : vector<8x16xbf16>, vector<8x16xbf16>, vector<8x8xf32> -> vector<8x8xf32>
    %cst_42 = arith.constant dense<0xFF800000> : vector<8xf32>
    %66 = vector.multi_reduction <maximumf>, %65, %cst_42 [1] : vector<8x8xf32> to vector<8xf32>
    %67 = vector.shape_cast %66 : vector<8xf32> to vector<8x1xf32>
    %68 = vector.broadcast %67 : vector<8x1xf32> to vector<8x8xf32>
    %69 = arith.subf %65, %68 : vector<8x8xf32>
    %70 = math.exp %69 : vector<8x8xf32>
    %cst_43 = arith.constant dense<0.000000e+00> : vector<8xf32>
    %71 = vector.multi_reduction <add>, %70, %cst_43 [1] : vector<8x8xf32> to vector<8xf32>
    %72 = vector.shape_cast %71 : vector<8xf32> to vector<8x1xf32>
    %73 = tpu.reciprocal %72 {approx = true} : vector<8x1xf32> -> vector<8x1xf32>
    %74 = vector.broadcast %73 : vector<8x1xf32> to vector<8x8xf32>
    %75 = arith.mulf %70, %74 : vector<8x8xf32>
    %76 = arith.truncf %75 : vector<8x8xf32> to vector<8x8xbf16>
    %77 = arith.truncf %64 : vector<8x16xf32> to vector<8x16xbf16>
    %cst_44 = arith.constant dense<0.000000e+00> : vector<8x16xf32>
    %78 = tpu.matmul %76, %77, %cst_44 {dimension_numbers = #tpu.dot_dimension_numbers<[1], [0], [0], [1], [0, 0, 1, 1], [], []>} : vector<8x8xbf16>, vector<8x16xbf16>, vector<8x16xf32> -> vector<8x16xf32>
    %79 = vector.extract_strided_slice %55 {offsets = [0, 16], sizes = [8, 16], strides = [1, 1]} : vector<8x64xf32> to vector<8x16xf32>
    %cst_45 = arith.constant 2.500000e-01 : f32
    %80 = vector.broadcast %cst_45 : f32 to vector<8x16xf32>
    %81 = arith.mulf %79, %80 : vector<8x16xf32>
    %82 = arith.truncf %81 : vector<8x16xf32> to vector<8x16xbf16>
    %83 = vector.extract_strided_slice %56 {offsets = [0, 16], sizes = [8, 16], strides = [1, 1]} : vector<8x64xf32> to vector<8x16xf32>
    %84 = arith.truncf %83 : vector<8x16xf32> to vector<8x16xbf16>
    %85 = vector.extract_strided_slice %57 {offsets = [0, 16], sizes = [8, 16], strides = [1, 1]} : vector<8x64xf32> to vector<8x16xf32>
    %cst_46 = arith.constant dense<0.000000e+00> : vector<8x8xf32>
    %86 = tpu.matmul %82, %84, %cst_46 {dimension_numbers = #tpu.dot_dimension_numbers<[1], [1], [0], [0], [0, 0, 1, 0], [], []>} : vector<8x16xbf16>, vector<8x16xbf16>, vector<8x8xf32> -> vector<8x8xf32>
    %cst_47 = arith.constant dense<0xFF800000> : vector<8xf32>
    %87 = vector.multi_reduction <maximumf>, %86, %cst_47 [1] : vector<8x8xf32> to vector<8xf32>
    %88 = vector.shape_cast %87 : vector<8xf32> to vector<8x1xf32>
    %89 = vector.broadcast %88 : vector<8x1xf32> to vector<8x8xf32>
    %90 = arith.subf %86, %89 : vector<8x8xf32>
    %91 = math.exp %90 : vector<8x8xf32>
    %cst_48 = arith.constant dense<0.000000e+00> : vector<8xf32>
    %92 = vector.multi_reduction <add>, %91, %cst_48 [1] : vector<8x8xf32> to vector<8xf32>
    %93 = vector.shape_cast %92 : vector<8xf32> to vector<8x1xf32>
    %94 = tpu.reciprocal %93 {approx = true} : vector<8x1xf32> -> vector<8x1xf32>
    %95 = vector.broadcast %94 : vector<8x1xf32> to vector<8x8xf32>
    %96 = arith.mulf %91, %95 : vector<8x8xf32>
    %97 = arith.truncf %96 : vector<8x8xf32> to vector<8x8xbf16>
    %98 = arith.truncf %85 : vector<8x16xf32> to vector<8x16xbf16>
    %cst_49 = arith.constant dense<0.000000e+00> : vector<8x16xf32>
    %99 = tpu.matmul %97, %98, %cst_49 {dimension_numbers = #tpu.dot_dimension_numbers<[1], [0], [0], [1], [0, 0, 1, 1], [], []>} : vector<8x8xbf16>, vector<8x16xbf16>, vector<8x16xf32> -> vector<8x16xf32>
    %100 = vector.extract_strided_slice %55 {offsets = [0, 32], sizes = [8, 16], strides = [1, 1]} : vector<8x64xf32> to vector<8x16xf32>
    %cst_50 = arith.constant 2.500000e-01 : f32
    %101 = vector.broadcast %cst_50 : f32 to vector<8x16xf32>
    %102 = arith.mulf %100, %101 : vector<8x16xf32>
    %103 = arith.truncf %102 : vector<8x16xf32> to vector<8x16xbf16>
    %104 = vector.extract_strided_slice %56 {offsets = [0, 32], sizes = [8, 16], strides = [1, 1]} : vector<8x64xf32> to vector<8x16xf32>
    %105 = arith.truncf %104 : vector<8x16xf32> to vector<8x16xbf16>
    %106 = vector.extract_strided_slice %57 {offsets = [0, 32], sizes = [8, 16], strides = [1, 1]} : vector<8x64xf32> to vector<8x16xf32>
    %cst_51 = arith.constant dense<0.000000e+00> : vector<8x8xf32>
    %107 = tpu.matmul %103, %105, %cst_51 {dimension_numbers = #tpu.dot_dimension_numbers<[1], [1], [0], [0], [0, 0, 1, 0], [], []>} : vector<8x16xbf16>, vector<8x16xbf16>, vector<8x8xf32> -> vector<8x8xf32>
    %cst_52 = arith.constant dense<0xFF800000> : vector<8xf32>
    %108 = vector.multi_reduction <maximumf>, %107, %cst_52 [1] : vector<8x8xf32> to vector<8xf32>
    %109 = vector.shape_cast %108 : vector<8xf32> to vector<8x1xf32>
    %110 = vector.broadcast %109 : vector<8x1xf32> to vector<8x8xf32>
    %111 = arith.subf %107, %110 : vector<8x8xf32>
    %112 = math.exp %111 : vector<8x8xf32>
    %cst_53 = arith.constant dense<0.000000e+00> : vector<8xf32>
    %113 = vector.multi_reduction <add>, %112, %cst_53 [1] : vector<8x8xf32> to vector<8xf32>
    %114 = vector.shape_cast %113 : vector<8xf32> to vector<8x1xf32>
    %115 = tpu.reciprocal %114 {approx = true} : vector<8x1xf32> -> vector<8x1xf32>
    %116 = vector.broadcast %115 : vector<8x1xf32> to vector<8x8xf32>
    %117 = arith.mulf %112, %116 : vector<8x8xf32>
    %118 = arith.truncf %117 : vector<8x8xf32> to vector<8x8xbf16>
    %119 = arith.truncf %106 : vector<8x16xf32> to vector<8x16xbf16>
    %cst_54 = arith.constant dense<0.000000e+00> : vector<8x16xf32>
    %120 = tpu.matmul %118, %119, %cst_54 {dimension_numbers = #tpu.dot_dimension_numbers<[1], [0], [0], [1], [0, 0, 1, 1], [], []>} : vector<8x8xbf16>, vector<8x16xbf16>, vector<8x16xf32> -> vector<8x16xf32>
    %121 = vector.extract_strided_slice %55 {offsets = [0, 48], sizes = [8, 16], strides = [1, 1]} : vector<8x64xf32> to vector<8x16xf32>
    %cst_55 = arith.constant 2.500000e-01 : f32
    %122 = vector.broadcast %cst_55 : f32 to vector<8x16xf32>
    %123 = arith.mulf %121, %122 : vector<8x16xf32>
    %124 = arith.truncf %123 : vector<8x16xf32> to vector<8x16xbf16>
    %125 = vector.extract_strided_slice %56 {offsets = [0, 48], sizes = [8, 16], strides = [1, 1]} : vector<8x64xf32> to vector<8x16xf32>
    %126 = arith.truncf %125 : vector<8x16xf32> to vector<8x16xbf16>
    %127 = vector.extract_strided_slice %57 {offsets = [0, 48], sizes = [8, 16], strides = [1, 1]} : vector<8x64xf32> to vector<8x16xf32>
    %cst_56 = arith.constant dense<0.000000e+00> : vector<8x8xf32>
    %128 = tpu.matmul %124, %126, %cst_56 {dimension_numbers = #tpu.dot_dimension_numbers<[1], [1], [0], [0], [0, 0, 1, 0], [], []>} : vector<8x16xbf16>, vector<8x16xbf16>, vector<8x8xf32> -> vector<8x8xf32>
    %cst_57 = arith.constant dense<0xFF800000> : vector<8xf32>
    %129 = vector.multi_reduction <maximumf>, %128, %cst_57 [1] : vector<8x8xf32> to vector<8xf32>
    %130 = vector.shape_cast %129 : vector<8xf32> to vector<8x1xf32>
    %131 = vector.broadcast %130 : vector<8x1xf32> to vector<8x8xf32>
    %132 = arith.subf %128, %131 : vector<8x8xf32>
    %133 = math.exp %132 : vector<8x8xf32>
    %cst_58 = arith.constant dense<0.000000e+00> : vector<8xf32>
    %134 = vector.multi_reduction <add>, %133, %cst_58 [1] : vector<8x8xf32> to vector<8xf32>
    %135 = vector.shape_cast %134 : vector<8xf32> to vector<8x1xf32>
    %136 = tpu.reciprocal %135 {approx = true} : vector<8x1xf32> -> vector<8x1xf32>
    %137 = vector.broadcast %136 : vector<8x1xf32> to vector<8x8xf32>
    %138 = arith.mulf %133, %137 : vector<8x8xf32>
    %139 = arith.truncf %138 : vector<8x8xf32> to vector<8x8xbf16>
    %140 = arith.truncf %127 : vector<8x16xf32> to vector<8x16xbf16>
    %cst_59 = arith.constant dense<0.000000e+00> : vector<8x16xf32>
    %141 = tpu.matmul %139, %140, %cst_59 {dimension_numbers = #tpu.dot_dimension_numbers<[1], [0], [0], [1], [0, 0, 1, 1], [], []>} : vector<8x8xbf16>, vector<8x16xbf16>, vector<8x16xf32> -> vector<8x16xf32>
    %142 = tpu.concatenate %78, %99, %120, %141 in 1 : vector<8x16xf32>, vector<8x16xf32>, vector<8x16xf32>, vector<8x16xf32> -> vector<8x64xf32>
    %c0_60 = arith.constant 0 : index
    %c0_61 = arith.constant 0 : index
    %c0_62 = arith.constant 0 : index
    %143 = vector.load %arg14[%c0_60, %c0_61, %c0_62] : memref<2x1x64xf32, #tpu.memory_space<vmem>>, vector<1x1x64xf32>
    %144 = vector.shape_cast %143 : vector<1x1x64xf32> to vector<1x64xf32>
    %c0_63 = arith.constant 0 : index
    %c0_64 = arith.constant 0 : index
    %c0_65 = arith.constant 0 : index
    %145 = vector.load %arg15[%c0_63, %c0_64, %c0_65] : memref<2x1x64xf32, #tpu.memory_space<vmem>>, vector<1x1x64xf32>
    %146 = vector.shape_cast %145 : vector<1x1x64xf32> to vector<1x64xf32>
    %cst_66 = arith.constant dense<0.000000e+00> : vector<8xf32>
    %147 = vector.multi_reduction <add>, %142, %cst_66 [1] : vector<8x64xf32> to vector<8xf32>
    %148 = vector.shape_cast %147 : vector<8xf32> to vector<8x1xf32>
    %cst_67 = arith.constant 6.400000e+01 : f32
    %149 = vector.broadcast %cst_67 : f32 to vector<8x1xf32>
    %150 = arith.divf %148, %149 : vector<8x1xf32>
    %151 = vector.broadcast %150 : vector<8x1xf32> to vector<8x64xf32>
    %152 = arith.subf %142, %151 : vector<8x64xf32>
    %153 = arith.mulf %152, %152 : vector<8x64xf32>
    %cst_68 = arith.constant dense<0.000000e+00> : vector<8xf32>
    %154 = vector.multi_reduction <add>, %153, %cst_68 [1] : vector<8x64xf32> to vector<8xf32>
    %155 = vector.shape_cast %154 : vector<8xf32> to vector<8x1xf32>
    %cst_69 = arith.constant 6.400000e+01 : f32
    %156 = vector.broadcast %cst_69 : f32 to vector<8x1xf32>
    %157 = arith.divf %155, %156 : vector<8x1xf32>
    %cst_70 = arith.constant 9.99999974E-6 : f32
    %158 = vector.broadcast %cst_70 : f32 to vector<8x1xf32>
    %159 = arith.addf %157, %158 : vector<8x1xf32>
    %160 = math.rsqrt %159 : vector<8x1xf32>
    %161 = vector.broadcast %160 : vector<8x1xf32> to vector<8x64xf32>
    %162 = arith.mulf %152, %161 : vector<8x64xf32>
    %163 = vector.broadcast %144 : vector<1x64xf32> to vector<8x64xf32>
    %164 = arith.mulf %162, %163 : vector<8x64xf32>
    %165 = vector.broadcast %146 : vector<1x64xf32> to vector<8x64xf32>
    %166 = arith.addf %164, %165 : vector<8x64xf32>
    %c0_71 = arith.constant 0 : index
    %c0_72 = arith.constant 0 : index
    %c0_73 = arith.constant 0 : index
    %167 = vector.load %arg16[%c0_71, %c0_72, %c0_73] : memref<2x64x64xbf16, #tpu.memory_space<vmem>>, vector<1x64x64xbf16>
    %168 = vector.shape_cast %167 : vector<1x64x64xbf16> to vector<64x64xbf16>
    %169 = arith.truncf %166 : vector<8x64xf32> to vector<8x64xbf16>
    %cst_74 = arith.constant dense<0.000000e+00> : vector<8x64xf32>
    %170 = tpu.matmul %169, %168, %cst_74 {dimension_numbers = #tpu.dot_dimension_numbers<[1], [0], [0], [1], [0, 0, 1, 1], [], []>} : vector<8x64xbf16>, vector<64x64xbf16>, vector<8x64xf32> -> vector<8x64xf32>
    %171 = arith.addf %21, %170 : vector<8x64xf32>
    %c0_75 = arith.constant 0 : index
    %c0_76 = arith.constant 0 : index
    %c0_77 = arith.constant 0 : index
    %172 = vector.load %arg17[%c0_75, %c0_76, %c0_77] : memref<2x1x64xf32, #tpu.memory_space<vmem>>, vector<1x1x64xf32>
    %173 = vector.shape_cast %172 : vector<1x1x64xf32> to vector<1x64xf32>
    %174 = vector.broadcast %173 : vector<1x64xf32> to vector<8x64xf32>
    %175 = arith.addf %171, %174 : vector<8x64xf32>
    %c0_78 = arith.constant 0 : index
    %c0_79 = arith.constant 0 : index
    %c0_80 = arith.constant 0 : index
    %176 = vector.load %arg18[%c0_78, %c0_79, %c0_80] : memref<2x1x64xf32, #tpu.memory_space<vmem>>, vector<1x1x64xf32>
    %177 = vector.shape_cast %176 : vector<1x1x64xf32> to vector<1x64xf32>
    %c0_81 = arith.constant 0 : index
    %c0_82 = arith.constant 0 : index
    %c0_83 = arith.constant 0 : index
    %178 = vector.load %arg19[%c0_81, %c0_82, %c0_83] : memref<2x1x64xf32, #tpu.memory_space<vmem>>, vector<1x1x64xf32>
    %179 = vector.shape_cast %178 : vector<1x1x64xf32> to vector<1x64xf32>
    %cst_84 = arith.constant dense<0.000000e+00> : vector<1xf32>
    %180 = vector.multi_reduction <add>, %15, %cst_84 [1] : vector<1x64xf32> to vector<1xf32>
    %181 = vector.shape_cast %180 : vector<1xf32> to vector<1x1xf32>
    %cst_85 = arith.constant 6.400000e+01 : f32
    %182 = vector.broadcast %cst_85 : f32 to vector<1x1xf32>
    %183 = arith.divf %181, %182 : vector<1x1xf32>
    %184 = vector.broadcast %183 : vector<1x1xf32> to vector<1x64xf32>
    %185 = arith.subf %15, %184 : vector<1x64xf32>
    %186 = arith.mulf %185, %185 : vector<1x64xf32>
    %cst_86 = arith.constant dense<0.000000e+00> : vector<1xf32>
    %187 = vector.multi_reduction <add>, %186, %cst_86 [1] : vector<1x64xf32> to vector<1xf32>
    %188 = vector.shape_cast %187 : vector<1xf32> to vector<1x1xf32>
    %cst_87 = arith.constant 6.400000e+01 : f32
    %189 = vector.broadcast %cst_87 : f32 to vector<1x1xf32>
    %190 = arith.divf %188, %189 : vector<1x1xf32>
    %cst_88 = arith.constant 9.99999974E-6 : f32
    %191 = vector.broadcast %cst_88 : f32 to vector<1x1xf32>
    %192 = arith.addf %190, %191 : vector<1x1xf32>
    %193 = math.rsqrt %192 : vector<1x1xf32>
    %194 = vector.broadcast %193 : vector<1x1xf32> to vector<1x64xf32>
    %195 = arith.mulf %185, %194 : vector<1x64xf32>
    %196 = arith.mulf %195, %177 : vector<1x64xf32>
    %197 = arith.addf %196, %179 : vector<1x64xf32>
    %c0_89 = arith.constant 0 : index
    %c0_90 = arith.constant 0 : index
    %c0_91 = arith.constant 0 : index
    %198 = vector.load %arg20[%c0_89, %c0_90, %c0_91] : memref<2x64x64xbf16, #tpu.memory_space<vmem>>, vector<1x64x64xbf16>
    %199 = vector.shape_cast %198 : vector<1x64x64xbf16> to vector<64x64xbf16>
    %200 = arith.truncf %197 : vector<1x64xf32> to vector<1x64xbf16>
    %cst_92 = arith.constant dense<0.000000e+00> : vector<1x64xf32>
    %201 = tpu.matmul %200, %199, %cst_92 {dimension_numbers = #tpu.dot_dimension_numbers<[1], [0], [0], [1], [0, 0, 1, 1], [], []>} : vector<1x64xbf16>, vector<64x64xbf16>, vector<1x64xf32> -> vector<1x64xf32>
    %c0_93 = arith.constant 0 : index
    %c0_94 = arith.constant 0 : index
    %c0_95 = arith.constant 0 : index
    %202 = vector.load %arg21[%c0_93, %c0_94, %c0_95] : memref<2x1x64xf32, #tpu.memory_space<vmem>>, vector<1x1x64xf32>
    %203 = vector.shape_cast %202 : vector<1x1x64xf32> to vector<1x64xf32>
    %204 = arith.addf %201, %203 : vector<1x64xf32>
    %c0_96 = arith.constant 0 : index
    %c0_97 = arith.constant 0 : index
    %c0_98 = arith.constant 0 : index
    %205 = vector.load %arg22[%c0_96, %c0_97, %c0_98] : memref<2x1x64xf32, #tpu.memory_space<vmem>>, vector<1x1x64xf32>
    %206 = vector.shape_cast %205 : vector<1x1x64xf32> to vector<1x64xf32>
    %c0_99 = arith.constant 0 : index
    %c0_100 = arith.constant 0 : index
    %c0_101 = arith.constant 0 : index
    %207 = vector.load %arg23[%c0_99, %c0_100, %c0_101] : memref<2x1x64xf32, #tpu.memory_space<vmem>>, vector<1x1x64xf32>
    %208 = vector.shape_cast %207 : vector<1x1x64xf32> to vector<1x64xf32>
    %cst_102 = arith.constant dense<0.000000e+00> : vector<1xf32>
    %209 = vector.multi_reduction <add>, %204, %cst_102 [1] : vector<1x64xf32> to vector<1xf32>
    %210 = vector.shape_cast %209 : vector<1xf32> to vector<1x1xf32>
    %cst_103 = arith.constant 6.400000e+01 : f32
    %211 = vector.broadcast %cst_103 : f32 to vector<1x1xf32>
    %212 = arith.divf %210, %211 : vector<1x1xf32>
    %213 = vector.broadcast %212 : vector<1x1xf32> to vector<1x64xf32>
    %214 = arith.subf %204, %213 : vector<1x64xf32>
    %215 = arith.mulf %214, %214 : vector<1x64xf32>
    %cst_104 = arith.constant dense<0.000000e+00> : vector<1xf32>
    %216 = vector.multi_reduction <add>, %215, %cst_104 [1] : vector<1x64xf32> to vector<1xf32>
    %217 = vector.shape_cast %216 : vector<1xf32> to vector<1x1xf32>
    %cst_105 = arith.constant 6.400000e+01 : f32
    %218 = vector.broadcast %cst_105 : f32 to vector<1x1xf32>
    %219 = arith.divf %217, %218 : vector<1x1xf32>
    %cst_106 = arith.constant 9.99999974E-6 : f32
    %220 = vector.broadcast %cst_106 : f32 to vector<1x1xf32>
    %221 = arith.addf %219, %220 : vector<1x1xf32>
    %222 = math.rsqrt %221 : vector<1x1xf32>
    %223 = vector.broadcast %222 : vector<1x1xf32> to vector<1x64xf32>
    %224 = arith.mulf %214, %223 : vector<1x64xf32>
    %225 = arith.mulf %224, %206 : vector<1x64xf32>
    %226 = arith.addf %225, %208 : vector<1x64xf32>
    %c0_107 = arith.constant 0 : index
    %c0_108 = arith.constant 0 : index
    %c0_109 = arith.constant 0 : index
    %227 = vector.load %arg24[%c0_107, %c0_108, %c0_109] : memref<2x64x64xbf16, #tpu.memory_space<vmem>>, vector<1x64x64xbf16>
    %228 = vector.shape_cast %227 : vector<1x64x64xbf16> to vector<64x64xbf16>
    %229 = arith.truncf %226 : vector<1x64xf32> to vector<1x64xbf16>
    %cst_110 = arith.constant dense<0.000000e+00> : vector<1x64xf32>
    %230 = tpu.matmul %229, %228, %cst_110 {dimension_numbers = #tpu.dot_dimension_numbers<[1], [0], [0], [1], [0, 0, 1, 1], [], []>} : vector<1x64xbf16>, vector<64x64xbf16>, vector<1x64xf32> -> vector<1x64xf32>
    %c0_111 = arith.constant 0 : index
    %c0_112 = arith.constant 0 : index
    %c0_113 = arith.constant 0 : index
    %231 = vector.load %arg25[%c0_111, %c0_112, %c0_113] : memref<2x1x64xf32, #tpu.memory_space<vmem>>, vector<1x1x64xf32>
    %232 = vector.shape_cast %231 : vector<1x1x64xf32> to vector<1x64xf32>
    %233 = arith.addf %230, %232 : vector<1x64xf32>
    %234 = vector.broadcast %233 : vector<1x64xf32> to vector<8x64xf32>
    %235 = arith.addf %175, %234 : vector<8x64xf32>
    %c0_114 = arith.constant 0 : index
    %c0_115 = arith.constant 0 : index
    %c0_116 = arith.constant 0 : index
    %236 = vector.load %arg26[%c0_114, %c0_115, %c0_116] : memref<2x1x64xf32, #tpu.memory_space<vmem>>, vector<1x1x64xf32>
    %237 = vector.shape_cast %236 : vector<1x1x64xf32> to vector<1x64xf32>
    %c0_117 = arith.constant 0 : index
    %c0_118 = arith.constant 0 : index
    %c0_119 = arith.constant 0 : index
    %238 = vector.load %arg27[%c0_117, %c0_118, %c0_119] : memref<2x1x64xf32, #tpu.memory_space<vmem>>, vector<1x1x64xf32>
    %239 = vector.shape_cast %238 : vector<1x1x64xf32> to vector<1x64xf32>
    %cst_120 = arith.constant dense<0.000000e+00> : vector<8xf32>
    %240 = vector.multi_reduction <add>, %235, %cst_120 [1] : vector<8x64xf32> to vector<8xf32>
    %241 = vector.shape_cast %240 : vector<8xf32> to vector<8x1xf32>
    %cst_121 = arith.constant 6.400000e+01 : f32
    %242 = vector.broadcast %cst_121 : f32 to vector<8x1xf32>
    %243 = arith.divf %241, %242 : vector<8x1xf32>
    %244 = vector.broadcast %243 : vector<8x1xf32> to vector<8x64xf32>
    %245 = arith.subf %235, %244 : vector<8x64xf32>
    %246 = arith.mulf %245, %245 : vector<8x64xf32>
    %cst_122 = arith.constant dense<0.000000e+00> : vector<8xf32>
    %247 = vector.multi_reduction <add>, %246, %cst_122 [1] : vector<8x64xf32> to vector<8xf32>
    %248 = vector.shape_cast %247 : vector<8xf32> to vector<8x1xf32>
    %cst_123 = arith.constant 6.400000e+01 : f32
    %249 = vector.broadcast %cst_123 : f32 to vector<8x1xf32>
    %250 = arith.divf %248, %249 : vector<8x1xf32>
    %cst_124 = arith.constant 9.99999974E-6 : f32
    %251 = vector.broadcast %cst_124 : f32 to vector<8x1xf32>
    %252 = arith.addf %250, %251 : vector<8x1xf32>
    %253 = math.rsqrt %252 : vector<8x1xf32>
    %254 = vector.broadcast %253 : vector<8x1xf32> to vector<8x64xf32>
    %255 = arith.mulf %245, %254 : vector<8x64xf32>
    %256 = vector.broadcast %237 : vector<1x64xf32> to vector<8x64xf32>
    %257 = arith.mulf %255, %256 : vector<8x64xf32>
    %258 = vector.broadcast %239 : vector<1x64xf32> to vector<8x64xf32>
    %259 = arith.addf %257, %258 : vector<8x64xf32>
    %c0_125 = arith.constant 0 : index
    %c0_126 = arith.constant 0 : index
    %c0_127 = arith.constant 0 : index
    %260 = vector.load %arg28[%c0_125, %c0_126, %c0_127] : memref<2x64x32xbf16, #tpu.memory_space<vmem>>, vector<1x64x32xbf16>
    %261 = vector.shape_cast %260 : vector<1x64x32xbf16> to vector<64x32xbf16>
    %262 = arith.truncf %259 : vector<8x64xf32> to vector<8x64xbf16>
    %cst_128 = arith.constant dense<0.000000e+00> : vector<8x32xf32>
    %263 = tpu.matmul %262, %261, %cst_128 {dimension_numbers = #tpu.dot_dimension_numbers<[1], [0], [0], [1], [0, 0, 1, 1], [], []>} : vector<8x64xbf16>, vector<64x32xbf16>, vector<8x32xf32> -> vector<8x32xf32>
    %264 = vector.extract_strided_slice %22 {offsets = [0, 0, 0], sizes = [1, 1, 32], strides = [1, 1, 1]} : vector<1x2x32xf32> to vector<1x1x32xf32>
    %265 = vector.shape_cast %264 : vector<1x1x32xf32> to vector<1x32xf32>
    %266 = vector.broadcast %265 : vector<1x32xf32> to vector<8x32xf32>
    %267 = arith.addf %263, %266 : vector<8x32xf32>
    %cst_129 = arith.constant 1.000000e-01 : f32
    %268 = vector.broadcast %cst_129 : f32 to vector<8x32xf32>
    %269 = arith.mulf %268, %267 : vector<8x32xf32>
    %270 = arith.maximumf %267, %269 : vector<8x32xf32>
    %c0_130 = arith.constant 0 : index
    %c0_131 = arith.constant 0 : index
    %c0_132 = arith.constant 0 : index
    %271 = vector.load %arg29[%c0_130, %c0_131, %c0_132] : memref<2x32x64xbf16, #tpu.memory_space<vmem>>, vector<1x32x64xbf16>
    %272 = vector.shape_cast %271 : vector<1x32x64xbf16> to vector<32x64xbf16>
    %273 = arith.truncf %270 : vector<8x32xf32> to vector<8x32xbf16>
    %cst_133 = arith.constant dense<0.000000e+00> : vector<8x64xf32>
    %274 = tpu.matmul %273, %272, %cst_133 {dimension_numbers = #tpu.dot_dimension_numbers<[1], [0], [0], [1], [0, 0, 1, 1], [], []>} : vector<8x32xbf16>, vector<32x64xbf16>, vector<8x64xf32> -> vector<8x64xf32>
    %275 = arith.addf %235, %274 : vector<8x64xf32>
    %c0_134 = arith.constant 0 : index
    %c0_135 = arith.constant 0 : index
    %c0_136 = arith.constant 0 : index
    %276 = vector.load %arg30[%c0_134, %c0_135, %c0_136] : memref<2x1x64xf32, #tpu.memory_space<vmem>>, vector<1x1x64xf32>
    %277 = vector.shape_cast %276 : vector<1x1x64xf32> to vector<1x64xf32>
    %278 = vector.broadcast %277 : vector<1x64xf32> to vector<8x64xf32>
    %279 = arith.addf %275, %278 : vector<8x64xf32>
    %c1 = arith.constant 1 : index
    %c0_137 = arith.constant 0 : index
    %c0_138 = arith.constant 0 : index
    %280 = vector.load %arg10[%c1, %c0_137, %c0_138] : memref<2x1x64xf32, #tpu.memory_space<vmem>>, vector<1x1x64xf32>
    %281 = vector.shape_cast %280 : vector<1x1x64xf32> to vector<1x64xf32>
    %c1_139 = arith.constant 1 : index
    %c0_140 = arith.constant 0 : index
    %c0_141 = arith.constant 0 : index
    %282 = vector.load %arg11[%c1_139, %c0_140, %c0_141] : memref<2x1x64xf32, #tpu.memory_space<vmem>>, vector<1x1x64xf32>
    %283 = vector.shape_cast %282 : vector<1x1x64xf32> to vector<1x64xf32>
    %cst_142 = arith.constant dense<0.000000e+00> : vector<8xf32>
    %284 = vector.multi_reduction <add>, %279, %cst_142 [1] : vector<8x64xf32> to vector<8xf32>
    %285 = vector.shape_cast %284 : vector<8xf32> to vector<8x1xf32>
    %cst_143 = arith.constant 6.400000e+01 : f32
    %286 = vector.broadcast %cst_143 : f32 to vector<8x1xf32>
    %287 = arith.divf %285, %286 : vector<8x1xf32>
    %288 = vector.broadcast %287 : vector<8x1xf32> to vector<8x64xf32>
    %289 = arith.subf %279, %288 : vector<8x64xf32>
    %290 = arith.mulf %289, %289 : vector<8x64xf32>
    %cst_144 = arith.constant dense<0.000000e+00> : vector<8xf32>
    %291 = vector.multi_reduction <add>, %290, %cst_144 [1] : vector<8x64xf32> to vector<8xf32>
    %292 = vector.shape_cast %291 : vector<8xf32> to vector<8x1xf32>
    %cst_145 = arith.constant 6.400000e+01 : f32
    %293 = vector.broadcast %cst_145 : f32 to vector<8x1xf32>
    %294 = arith.divf %292, %293 : vector<8x1xf32>
    %cst_146 = arith.constant 9.99999974E-6 : f32
    %295 = vector.broadcast %cst_146 : f32 to vector<8x1xf32>
    %296 = arith.addf %294, %295 : vector<8x1xf32>
    %297 = math.rsqrt %296 : vector<8x1xf32>
    %298 = vector.broadcast %297 : vector<8x1xf32> to vector<8x64xf32>
    %299 = arith.mulf %289, %298 : vector<8x64xf32>
    %300 = vector.broadcast %281 : vector<1x64xf32> to vector<8x64xf32>
    %301 = arith.mulf %299, %300 : vector<8x64xf32>
    %302 = vector.broadcast %283 : vector<1x64xf32> to vector<8x64xf32>
    %303 = arith.addf %301, %302 : vector<8x64xf32>
    %c1_147 = arith.constant 1 : index
    %c0_148 = arith.constant 0 : index
    %c0_149 = arith.constant 0 : index
    %304 = vector.load %arg12[%c1_147, %c0_148, %c0_149] : memref<2x64x192xbf16, #tpu.memory_space<vmem>>, vector<1x64x192xbf16>
    %305 = vector.shape_cast %304 : vector<1x64x192xbf16> to vector<64x192xbf16>
    %306 = arith.truncf %303 : vector<8x64xf32> to vector<8x64xbf16>
    %cst_150 = arith.constant dense<0.000000e+00> : vector<8x192xf32>
    %307 = tpu.matmul %306, %305, %cst_150 {dimension_numbers = #tpu.dot_dimension_numbers<[1], [0], [0], [1], [0, 0, 1, 1], [], []>} : vector<8x64xbf16>, vector<64x192xbf16>, vector<8x192xf32> -> vector<8x192xf32>
    %c1_151 = arith.constant 1 : index
    %c0_152 = arith.constant 0 : index
    %c0_153 = arith.constant 0 : index
    %308 = vector.load %arg13[%c1_151, %c0_152, %c0_153] : memref<2x1x192xf32, #tpu.memory_space<vmem>>, vector<1x1x192xf32>
    %309 = vector.shape_cast %308 : vector<1x1x192xf32> to vector<1x192xf32>
    %310 = vector.broadcast %309 : vector<1x192xf32> to vector<8x192xf32>
    %311 = arith.addf %307, %310 : vector<8x192xf32>
    %312 = vector.extract_strided_slice %311 {offsets = [0, 0], sizes = [8, 64], strides = [1, 1]} : vector<8x192xf32> to vector<8x64xf32>
    %313 = vector.extract_strided_slice %311 {offsets = [0, 64], sizes = [8, 64], strides = [1, 1]} : vector<8x192xf32> to vector<8x64xf32>
    %314 = vector.extract_strided_slice %311 {offsets = [0, 128], sizes = [8, 64], strides = [1, 1]} : vector<8x192xf32> to vector<8x64xf32>
    %315 = vector.extract_strided_slice %312 {offsets = [0, 0], sizes = [8, 16], strides = [1, 1]} : vector<8x64xf32> to vector<8x16xf32>
    %cst_154 = arith.constant 2.500000e-01 : f32
    %316 = vector.broadcast %cst_154 : f32 to vector<8x16xf32>
    %317 = arith.mulf %315, %316 : vector<8x16xf32>
    %318 = arith.truncf %317 : vector<8x16xf32> to vector<8x16xbf16>
    %319 = vector.extract_strided_slice %313 {offsets = [0, 0], sizes = [8, 16], strides = [1, 1]} : vector<8x64xf32> to vector<8x16xf32>
    %320 = arith.truncf %319 : vector<8x16xf32> to vector<8x16xbf16>
    %321 = vector.extract_strided_slice %314 {offsets = [0, 0], sizes = [8, 16], strides = [1, 1]} : vector<8x64xf32> to vector<8x16xf32>
    %cst_155 = arith.constant dense<0.000000e+00> : vector<8x8xf32>
    %322 = tpu.matmul %318, %320, %cst_155 {dimension_numbers = #tpu.dot_dimension_numbers<[1], [1], [0], [0], [0, 0, 1, 0], [], []>} : vector<8x16xbf16>, vector<8x16xbf16>, vector<8x8xf32> -> vector<8x8xf32>
    %cst_156 = arith.constant dense<0xFF800000> : vector<8xf32>
    %323 = vector.multi_reduction <maximumf>, %322, %cst_156 [1] : vector<8x8xf32> to vector<8xf32>
    %324 = vector.shape_cast %323 : vector<8xf32> to vector<8x1xf32>
    %325 = vector.broadcast %324 : vector<8x1xf32> to vector<8x8xf32>
    %326 = arith.subf %322, %325 : vector<8x8xf32>
    %327 = math.exp %326 : vector<8x8xf32>
    %cst_157 = arith.constant dense<0.000000e+00> : vector<8xf32>
    %328 = vector.multi_reduction <add>, %327, %cst_157 [1] : vector<8x8xf32> to vector<8xf32>
    %329 = vector.shape_cast %328 : vector<8xf32> to vector<8x1xf32>
    %330 = tpu.reciprocal %329 {approx = true} : vector<8x1xf32> -> vector<8x1xf32>
    %331 = vector.broadcast %330 : vector<8x1xf32> to vector<8x8xf32>
    %332 = arith.mulf %327, %331 : vector<8x8xf32>
    %333 = arith.truncf %332 : vector<8x8xf32> to vector<8x8xbf16>
    %334 = arith.truncf %321 : vector<8x16xf32> to vector<8x16xbf16>
    %cst_158 = arith.constant dense<0.000000e+00> : vector<8x16xf32>
    %335 = tpu.matmul %333, %334, %cst_158 {dimension_numbers = #tpu.dot_dimension_numbers<[1], [0], [0], [1], [0, 0, 1, 1], [], []>} : vector<8x8xbf16>, vector<8x16xbf16>, vector<8x16xf32> -> vector<8x16xf32>
    %336 = vector.extract_strided_slice %312 {offsets = [0, 16], sizes = [8, 16], strides = [1, 1]} : vector<8x64xf32> to vector<8x16xf32>
    %cst_159 = arith.constant 2.500000e-01 : f32
    %337 = vector.broadcast %cst_159 : f32 to vector<8x16xf32>
    %338 = arith.mulf %336, %337 : vector<8x16xf32>
    %339 = arith.truncf %338 : vector<8x16xf32> to vector<8x16xbf16>
    %340 = vector.extract_strided_slice %313 {offsets = [0, 16], sizes = [8, 16], strides = [1, 1]} : vector<8x64xf32> to vector<8x16xf32>
    %341 = arith.truncf %340 : vector<8x16xf32> to vector<8x16xbf16>
    %342 = vector.extract_strided_slice %314 {offsets = [0, 16], sizes = [8, 16], strides = [1, 1]} : vector<8x64xf32> to vector<8x16xf32>
    %cst_160 = arith.constant dense<0.000000e+00> : vector<8x8xf32>
    %343 = tpu.matmul %339, %341, %cst_160 {dimension_numbers = #tpu.dot_dimension_numbers<[1], [1], [0], [0], [0, 0, 1, 0], [], []>} : vector<8x16xbf16>, vector<8x16xbf16>, vector<8x8xf32> -> vector<8x8xf32>
    %cst_161 = arith.constant dense<0xFF800000> : vector<8xf32>
    %344 = vector.multi_reduction <maximumf>, %343, %cst_161 [1] : vector<8x8xf32> to vector<8xf32>
    %345 = vector.shape_cast %344 : vector<8xf32> to vector<8x1xf32>
    %346 = vector.broadcast %345 : vector<8x1xf32> to vector<8x8xf32>
    %347 = arith.subf %343, %346 : vector<8x8xf32>
    %348 = math.exp %347 : vector<8x8xf32>
    %cst_162 = arith.constant dense<0.000000e+00> : vector<8xf32>
    %349 = vector.multi_reduction <add>, %348, %cst_162 [1] : vector<8x8xf32> to vector<8xf32>
    %350 = vector.shape_cast %349 : vector<8xf32> to vector<8x1xf32>
    %351 = tpu.reciprocal %350 {approx = true} : vector<8x1xf32> -> vector<8x1xf32>
    %352 = vector.broadcast %351 : vector<8x1xf32> to vector<8x8xf32>
    %353 = arith.mulf %348, %352 : vector<8x8xf32>
    %354 = arith.truncf %353 : vector<8x8xf32> to vector<8x8xbf16>
    %355 = arith.truncf %342 : vector<8x16xf32> to vector<8x16xbf16>
    %cst_163 = arith.constant dense<0.000000e+00> : vector<8x16xf32>
    %356 = tpu.matmul %354, %355, %cst_163 {dimension_numbers = #tpu.dot_dimension_numbers<[1], [0], [0], [1], [0, 0, 1, 1], [], []>} : vector<8x8xbf16>, vector<8x16xbf16>, vector<8x16xf32> -> vector<8x16xf32>
    %357 = vector.extract_strided_slice %312 {offsets = [0, 32], sizes = [8, 16], strides = [1, 1]} : vector<8x64xf32> to vector<8x16xf32>
    %cst_164 = arith.constant 2.500000e-01 : f32
    %358 = vector.broadcast %cst_164 : f32 to vector<8x16xf32>
    %359 = arith.mulf %357, %358 : vector<8x16xf32>
    %360 = arith.truncf %359 : vector<8x16xf32> to vector<8x16xbf16>
    %361 = vector.extract_strided_slice %313 {offsets = [0, 32], sizes = [8, 16], strides = [1, 1]} : vector<8x64xf32> to vector<8x16xf32>
    %362 = arith.truncf %361 : vector<8x16xf32> to vector<8x16xbf16>
    %363 = vector.extract_strided_slice %314 {offsets = [0, 32], sizes = [8, 16], strides = [1, 1]} : vector<8x64xf32> to vector<8x16xf32>
    %cst_165 = arith.constant dense<0.000000e+00> : vector<8x8xf32>
    %364 = tpu.matmul %360, %362, %cst_165 {dimension_numbers = #tpu.dot_dimension_numbers<[1], [1], [0], [0], [0, 0, 1, 0], [], []>} : vector<8x16xbf16>, vector<8x16xbf16>, vector<8x8xf32> -> vector<8x8xf32>
    %cst_166 = arith.constant dense<0xFF800000> : vector<8xf32>
    %365 = vector.multi_reduction <maximumf>, %364, %cst_166 [1] : vector<8x8xf32> to vector<8xf32>
    %366 = vector.shape_cast %365 : vector<8xf32> to vector<8x1xf32>
    %367 = vector.broadcast %366 : vector<8x1xf32> to vector<8x8xf32>
    %368 = arith.subf %364, %367 : vector<8x8xf32>
    %369 = math.exp %368 : vector<8x8xf32>
    %cst_167 = arith.constant dense<0.000000e+00> : vector<8xf32>
    %370 = vector.multi_reduction <add>, %369, %cst_167 [1] : vector<8x8xf32> to vector<8xf32>
    %371 = vector.shape_cast %370 : vector<8xf32> to vector<8x1xf32>
    %372 = tpu.reciprocal %371 {approx = true} : vector<8x1xf32> -> vector<8x1xf32>
    %373 = vector.broadcast %372 : vector<8x1xf32> to vector<8x8xf32>
    %374 = arith.mulf %369, %373 : vector<8x8xf32>
    %375 = arith.truncf %374 : vector<8x8xf32> to vector<8x8xbf16>
    %376 = arith.truncf %363 : vector<8x16xf32> to vector<8x16xbf16>
    %cst_168 = arith.constant dense<0.000000e+00> : vector<8x16xf32>
    %377 = tpu.matmul %375, %376, %cst_168 {dimension_numbers = #tpu.dot_dimension_numbers<[1], [0], [0], [1], [0, 0, 1, 1], [], []>} : vector<8x8xbf16>, vector<8x16xbf16>, vector<8x16xf32> -> vector<8x16xf32>
    %378 = vector.extract_strided_slice %312 {offsets = [0, 48], sizes = [8, 16], strides = [1, 1]} : vector<8x64xf32> to vector<8x16xf32>
    %cst_169 = arith.constant 2.500000e-01 : f32
    %379 = vector.broadcast %cst_169 : f32 to vector<8x16xf32>
    %380 = arith.mulf %378, %379 : vector<8x16xf32>
    %381 = arith.truncf %380 : vector<8x16xf32> to vector<8x16xbf16>
    %382 = vector.extract_strided_slice %313 {offsets = [0, 48], sizes = [8, 16], strides = [1, 1]} : vector<8x64xf32> to vector<8x16xf32>
    %383 = arith.truncf %382 : vector<8x16xf32> to vector<8x16xbf16>
    %384 = vector.extract_strided_slice %314 {offsets = [0, 48], sizes = [8, 16], strides = [1, 1]} : vector<8x64xf32> to vector<8x16xf32>
    %cst_170 = arith.constant dense<0.000000e+00> : vector<8x8xf32>
    %385 = tpu.matmul %381, %383, %cst_170 {dimension_numbers = #tpu.dot_dimension_numbers<[1], [1], [0], [0], [0, 0, 1, 0], [], []>} : vector<8x16xbf16>, vector<8x16xbf16>, vector<8x8xf32> -> vector<8x8xf32>
    %cst_171 = arith.constant dense<0xFF800000> : vector<8xf32>
    %386 = vector.multi_reduction <maximumf>, %385, %cst_171 [1] : vector<8x8xf32> to vector<8xf32>
    %387 = vector.shape_cast %386 : vector<8xf32> to vector<8x1xf32>
    %388 = vector.broadcast %387 : vector<8x1xf32> to vector<8x8xf32>
    %389 = arith.subf %385, %388 : vector<8x8xf32>
    %390 = math.exp %389 : vector<8x8xf32>
    %cst_172 = arith.constant dense<0.000000e+00> : vector<8xf32>
    %391 = vector.multi_reduction <add>, %390, %cst_172 [1] : vector<8x8xf32> to vector<8xf32>
    %392 = vector.shape_cast %391 : vector<8xf32> to vector<8x1xf32>
    %393 = tpu.reciprocal %392 {approx = true} : vector<8x1xf32> -> vector<8x1xf32>
    %394 = vector.broadcast %393 : vector<8x1xf32> to vector<8x8xf32>
    %395 = arith.mulf %390, %394 : vector<8x8xf32>
    %396 = arith.truncf %395 : vector<8x8xf32> to vector<8x8xbf16>
    %397 = arith.truncf %384 : vector<8x16xf32> to vector<8x16xbf16>
    %cst_173 = arith.constant dense<0.000000e+00> : vector<8x16xf32>
    %398 = tpu.matmul %396, %397, %cst_173 {dimension_numbers = #tpu.dot_dimension_numbers<[1], [0], [0], [1], [0, 0, 1, 1], [], []>} : vector<8x8xbf16>, vector<8x16xbf16>, vector<8x16xf32> -> vector<8x16xf32>
    %399 = tpu.concatenate %335, %356, %377, %398 in 1 : vector<8x16xf32>, vector<8x16xf32>, vector<8x16xf32>, vector<8x16xf32> -> vector<8x64xf32>
    %c1_174 = arith.constant 1 : index
    %c0_175 = arith.constant 0 : index
    %c0_176 = arith.constant 0 : index
    %400 = vector.load %arg14[%c1_174, %c0_175, %c0_176] : memref<2x1x64xf32, #tpu.memory_space<vmem>>, vector<1x1x64xf32>
    %401 = vector.shape_cast %400 : vector<1x1x64xf32> to vector<1x64xf32>
    %c1_177 = arith.constant 1 : index
    %c0_178 = arith.constant 0 : index
    %c0_179 = arith.constant 0 : index
    %402 = vector.load %arg15[%c1_177, %c0_178, %c0_179] : memref<2x1x64xf32, #tpu.memory_space<vmem>>, vector<1x1x64xf32>
    %403 = vector.shape_cast %402 : vector<1x1x64xf32> to vector<1x64xf32>
    %cst_180 = arith.constant dense<0.000000e+00> : vector<8xf32>
    %404 = vector.multi_reduction <add>, %399, %cst_180 [1] : vector<8x64xf32> to vector<8xf32>
    %405 = vector.shape_cast %404 : vector<8xf32> to vector<8x1xf32>
    %cst_181 = arith.constant 6.400000e+01 : f32
    %406 = vector.broadcast %cst_181 : f32 to vector<8x1xf32>
    %407 = arith.divf %405, %406 : vector<8x1xf32>
    %408 = vector.broadcast %407 : vector<8x1xf32> to vector<8x64xf32>
    %409 = arith.subf %399, %408 : vector<8x64xf32>
    %410 = arith.mulf %409, %409 : vector<8x64xf32>
    %cst_182 = arith.constant dense<0.000000e+00> : vector<8xf32>
    %411 = vector.multi_reduction <add>, %410, %cst_182 [1] : vector<8x64xf32> to vector<8xf32>
    %412 = vector.shape_cast %411 : vector<8xf32> to vector<8x1xf32>
    %cst_183 = arith.constant 6.400000e+01 : f32
    %413 = vector.broadcast %cst_183 : f32 to vector<8x1xf32>
    %414 = arith.divf %412, %413 : vector<8x1xf32>
    %cst_184 = arith.constant 9.99999974E-6 : f32
    %415 = vector.broadcast %cst_184 : f32 to vector<8x1xf32>
    %416 = arith.addf %414, %415 : vector<8x1xf32>
    %417 = math.rsqrt %416 : vector<8x1xf32>
    %418 = vector.broadcast %417 : vector<8x1xf32> to vector<8x64xf32>
    %419 = arith.mulf %409, %418 : vector<8x64xf32>
    %420 = vector.broadcast %401 : vector<1x64xf32> to vector<8x64xf32>
    %421 = arith.mulf %419, %420 : vector<8x64xf32>
    %422 = vector.broadcast %403 : vector<1x64xf32> to vector<8x64xf32>
    %423 = arith.addf %421, %422 : vector<8x64xf32>
    %c1_185 = arith.constant 1 : index
    %c0_186 = arith.constant 0 : index
    %c0_187 = arith.constant 0 : index
    %424 = vector.load %arg16[%c1_185, %c0_186, %c0_187] : memref<2x64x64xbf16, #tpu.memory_space<vmem>>, vector<1x64x64xbf16>
    %425 = vector.shape_cast %424 : vector<1x64x64xbf16> to vector<64x64xbf16>
    %426 = arith.truncf %423 : vector<8x64xf32> to vector<8x64xbf16>
    %cst_188 = arith.constant dense<0.000000e+00> : vector<8x64xf32>
    %427 = tpu.matmul %426, %425, %cst_188 {dimension_numbers = #tpu.dot_dimension_numbers<[1], [0], [0], [1], [0, 0, 1, 1], [], []>} : vector<8x64xbf16>, vector<64x64xbf16>, vector<8x64xf32> -> vector<8x64xf32>
    %428 = arith.addf %279, %427 : vector<8x64xf32>
    %c1_189 = arith.constant 1 : index
    %c0_190 = arith.constant 0 : index
    %c0_191 = arith.constant 0 : index
    %429 = vector.load %arg17[%c1_189, %c0_190, %c0_191] : memref<2x1x64xf32, #tpu.memory_space<vmem>>, vector<1x1x64xf32>
    %430 = vector.shape_cast %429 : vector<1x1x64xf32> to vector<1x64xf32>
    %431 = vector.broadcast %430 : vector<1x64xf32> to vector<8x64xf32>
    %432 = arith.addf %428, %431 : vector<8x64xf32>
    %c1_192 = arith.constant 1 : index
    %c0_193 = arith.constant 0 : index
    %c0_194 = arith.constant 0 : index
    %433 = vector.load %arg18[%c1_192, %c0_193, %c0_194] : memref<2x1x64xf32, #tpu.memory_space<vmem>>, vector<1x1x64xf32>
    %434 = vector.shape_cast %433 : vector<1x1x64xf32> to vector<1x64xf32>
    %c1_195 = arith.constant 1 : index
    %c0_196 = arith.constant 0 : index
    %c0_197 = arith.constant 0 : index
    %435 = vector.load %arg19[%c1_195, %c0_196, %c0_197] : memref<2x1x64xf32, #tpu.memory_space<vmem>>, vector<1x1x64xf32>
    %436 = vector.shape_cast %435 : vector<1x1x64xf32> to vector<1x64xf32>
    %cst_198 = arith.constant dense<0.000000e+00> : vector<1xf32>
    %437 = vector.multi_reduction <add>, %15, %cst_198 [1] : vector<1x64xf32> to vector<1xf32>
    %438 = vector.shape_cast %437 : vector<1xf32> to vector<1x1xf32>
    %cst_199 = arith.constant 6.400000e+01 : f32
    %439 = vector.broadcast %cst_199 : f32 to vector<1x1xf32>
    %440 = arith.divf %438, %439 : vector<1x1xf32>
    %441 = vector.broadcast %440 : vector<1x1xf32> to vector<1x64xf32>
    %442 = arith.subf %15, %441 : vector<1x64xf32>
    %443 = arith.mulf %442, %442 : vector<1x64xf32>
    %cst_200 = arith.constant dense<0.000000e+00> : vector<1xf32>
    %444 = vector.multi_reduction <add>, %443, %cst_200 [1] : vector<1x64xf32> to vector<1xf32>
    %445 = vector.shape_cast %444 : vector<1xf32> to vector<1x1xf32>
    %cst_201 = arith.constant 6.400000e+01 : f32
    %446 = vector.broadcast %cst_201 : f32 to vector<1x1xf32>
    %447 = arith.divf %445, %446 : vector<1x1xf32>
    %cst_202 = arith.constant 9.99999974E-6 : f32
    %448 = vector.broadcast %cst_202 : f32 to vector<1x1xf32>
    %449 = arith.addf %447, %448 : vector<1x1xf32>
    %450 = math.rsqrt %449 : vector<1x1xf32>
    %451 = vector.broadcast %450 : vector<1x1xf32> to vector<1x64xf32>
    %452 = arith.mulf %442, %451 : vector<1x64xf32>
    %453 = arith.mulf %452, %434 : vector<1x64xf32>
    %454 = arith.addf %453, %436 : vector<1x64xf32>
    %c1_203 = arith.constant 1 : index
    %c0_204 = arith.constant 0 : index
    %c0_205 = arith.constant 0 : index
    %455 = vector.load %arg20[%c1_203, %c0_204, %c0_205] : memref<2x64x64xbf16, #tpu.memory_space<vmem>>, vector<1x64x64xbf16>
    %456 = vector.shape_cast %455 : vector<1x64x64xbf16> to vector<64x64xbf16>
    %457 = arith.truncf %454 : vector<1x64xf32> to vector<1x64xbf16>
    %cst_206 = arith.constant dense<0.000000e+00> : vector<1x64xf32>
    %458 = tpu.matmul %457, %456, %cst_206 {dimension_numbers = #tpu.dot_dimension_numbers<[1], [0], [0], [1], [0, 0, 1, 1], [], []>} : vector<1x64xbf16>, vector<64x64xbf16>, vector<1x64xf32> -> vector<1x64xf32>
    %c1_207 = arith.constant 1 : index
    %c0_208 = arith.constant 0 : index
    %c0_209 = arith.constant 0 : index
    %459 = vector.load %arg21[%c1_207, %c0_208, %c0_209] : memref<2x1x64xf32, #tpu.memory_space<vmem>>, vector<1x1x64xf32>
    %460 = vector.shape_cast %459 : vector<1x1x64xf32> to vector<1x64xf32>
    %461 = arith.addf %458, %460 : vector<1x64xf32>
    %c1_210 = arith.constant 1 : index
    %c0_211 = arith.constant 0 : index
    %c0_212 = arith.constant 0 : index
    %462 = vector.load %arg22[%c1_210, %c0_211, %c0_212] : memref<2x1x64xf32, #tpu.memory_space<vmem>>, vector<1x1x64xf32>
    %463 = vector.shape_cast %462 : vector<1x1x64xf32> to vector<1x64xf32>
    %c1_213 = arith.constant 1 : index
    %c0_214 = arith.constant 0 : index
    %c0_215 = arith.constant 0 : index
    %464 = vector.load %arg23[%c1_213, %c0_214, %c0_215] : memref<2x1x64xf32, #tpu.memory_space<vmem>>, vector<1x1x64xf32>
    %465 = vector.shape_cast %464 : vector<1x1x64xf32> to vector<1x64xf32>
    %cst_216 = arith.constant dense<0.000000e+00> : vector<1xf32>
    %466 = vector.multi_reduction <add>, %461, %cst_216 [1] : vector<1x64xf32> to vector<1xf32>
    %467 = vector.shape_cast %466 : vector<1xf32> to vector<1x1xf32>
    %cst_217 = arith.constant 6.400000e+01 : f32
    %468 = vector.broadcast %cst_217 : f32 to vector<1x1xf32>
    %469 = arith.divf %467, %468 : vector<1x1xf32>
    %470 = vector.broadcast %469 : vector<1x1xf32> to vector<1x64xf32>
    %471 = arith.subf %461, %470 : vector<1x64xf32>
    %472 = arith.mulf %471, %471 : vector<1x64xf32>
    %cst_218 = arith.constant dense<0.000000e+00> : vector<1xf32>
    %473 = vector.multi_reduction <add>, %472, %cst_218 [1] : vector<1x64xf32> to vector<1xf32>
    %474 = vector.shape_cast %473 : vector<1xf32> to vector<1x1xf32>
    %cst_219 = arith.constant 6.400000e+01 : f32
    %475 = vector.broadcast %cst_219 : f32 to vector<1x1xf32>
    %476 = arith.divf %474, %475 : vector<1x1xf32>
    %cst_220 = arith.constant 9.99999974E-6 : f32
    %477 = vector.broadcast %cst_220 : f32 to vector<1x1xf32>
    %478 = arith.addf %476, %477 : vector<1x1xf32>
    %479 = math.rsqrt %478 : vector<1x1xf32>
    %480 = vector.broadcast %479 : vector<1x1xf32> to vector<1x64xf32>
    %481 = arith.mulf %471, %480 : vector<1x64xf32>
    %482 = arith.mulf %481, %463 : vector<1x64xf32>
    %483 = arith.addf %482, %465 : vector<1x64xf32>
    %c1_221 = arith.constant 1 : index
    %c0_222 = arith.constant 0 : index
    %c0_223 = arith.constant 0 : index
    %484 = vector.load %arg24[%c1_221, %c0_222, %c0_223] : memref<2x64x64xbf16, #tpu.memory_space<vmem>>, vector<1x64x64xbf16>
    %485 = vector.shape_cast %484 : vector<1x64x64xbf16> to vector<64x64xbf16>
    %486 = arith.truncf %483 : vector<1x64xf32> to vector<1x64xbf16>
    %cst_224 = arith.constant dense<0.000000e+00> : vector<1x64xf32>
    %487 = tpu.matmul %486, %485, %cst_224 {dimension_numbers = #tpu.dot_dimension_numbers<[1], [0], [0], [1], [0, 0, 1, 1], [], []>} : vector<1x64xbf16>, vector<64x64xbf16>, vector<1x64xf32> -> vector<1x64xf32>
    %c1_225 = arith.constant 1 : index
    %c0_226 = arith.constant 0 : index
    %c0_227 = arith.constant 0 : index
    %488 = vector.load %arg25[%c1_225, %c0_226, %c0_227] : memref<2x1x64xf32, #tpu.memory_space<vmem>>, vector<1x1x64xf32>
    %489 = vector.shape_cast %488 : vector<1x1x64xf32> to vector<1x64xf32>
    %490 = arith.addf %487, %489 : vector<1x64xf32>
    %491 = vector.broadcast %490 : vector<1x64xf32> to vector<8x64xf32>
    %492 = arith.addf %432, %491 : vector<8x64xf32>
    %c1_228 = arith.constant 1 : index
    %c0_229 = arith.constant 0 : index
    %c0_230 = arith.constant 0 : index
    %493 = vector.load %arg26[%c1_228, %c0_229, %c0_230] : memref<2x1x64xf32, #tpu.memory_space<vmem>>, vector<1x1x64xf32>
    %494 = vector.shape_cast %493 : vector<1x1x64xf32> to vector<1x64xf32>
    %c1_231 = arith.constant 1 : index
    %c0_232 = arith.constant 0 : index
    %c0_233 = arith.constant 0 : index
    %495 = vector.load %arg27[%c1_231, %c0_232, %c0_233] : memref<2x1x64xf32, #tpu.memory_space<vmem>>, vector<1x1x64xf32>
    %496 = vector.shape_cast %495 : vector<1x1x64xf32> to vector<1x64xf32>
    %cst_234 = arith.constant dense<0.000000e+00> : vector<8xf32>
    %497 = vector.multi_reduction <add>, %492, %cst_234 [1] : vector<8x64xf32> to vector<8xf32>
    %498 = vector.shape_cast %497 : vector<8xf32> to vector<8x1xf32>
    %cst_235 = arith.constant 6.400000e+01 : f32
    %499 = vector.broadcast %cst_235 : f32 to vector<8x1xf32>
    %500 = arith.divf %498, %499 : vector<8x1xf32>
    %501 = vector.broadcast %500 : vector<8x1xf32> to vector<8x64xf32>
    %502 = arith.subf %492, %501 : vector<8x64xf32>
    %503 = arith.mulf %502, %502 : vector<8x64xf32>
    %cst_236 = arith.constant dense<0.000000e+00> : vector<8xf32>
    %504 = vector.multi_reduction <add>, %503, %cst_236 [1] : vector<8x64xf32> to vector<8xf32>
    %505 = vector.shape_cast %504 : vector<8xf32> to vector<8x1xf32>
    %cst_237 = arith.constant 6.400000e+01 : f32
    %506 = vector.broadcast %cst_237 : f32 to vector<8x1xf32>
    %507 = arith.divf %505, %506 : vector<8x1xf32>
    %cst_238 = arith.constant 9.99999974E-6 : f32
    %508 = vector.broadcast %cst_238 : f32 to vector<8x1xf32>
    %509 = arith.addf %507, %508 : vector<8x1xf32>
    %510 = math.rsqrt %509 : vector<8x1xf32>
    %511 = vector.broadcast %510 : vector<8x1xf32> to vector<8x64xf32>
    %512 = arith.mulf %502, %511 : vector<8x64xf32>
    %513 = vector.broadcast %494 : vector<1x64xf32> to vector<8x64xf32>
    %514 = arith.mulf %512, %513 : vector<8x64xf32>
    %515 = vector.broadcast %496 : vector<1x64xf32> to vector<8x64xf32>
    %516 = arith.addf %514, %515 : vector<8x64xf32>
    %c1_239 = arith.constant 1 : index
    %c0_240 = arith.constant 0 : index
    %c0_241 = arith.constant 0 : index
    %517 = vector.load %arg28[%c1_239, %c0_240, %c0_241] : memref<2x64x32xbf16, #tpu.memory_space<vmem>>, vector<1x64x32xbf16>
    %518 = vector.shape_cast %517 : vector<1x64x32xbf16> to vector<64x32xbf16>
    %519 = arith.truncf %516 : vector<8x64xf32> to vector<8x64xbf16>
    %cst_242 = arith.constant dense<0.000000e+00> : vector<8x32xf32>
    %520 = tpu.matmul %519, %518, %cst_242 {dimension_numbers = #tpu.dot_dimension_numbers<[1], [0], [0], [1], [0, 0, 1, 1], [], []>} : vector<8x64xbf16>, vector<64x32xbf16>, vector<8x32xf32> -> vector<8x32xf32>
    %521 = vector.extract_strided_slice %22 {offsets = [0, 1, 0], sizes = [1, 1, 32], strides = [1, 1, 1]} : vector<1x2x32xf32> to vector<1x1x32xf32>
    %522 = vector.shape_cast %521 : vector<1x1x32xf32> to vector<1x32xf32>
    %523 = vector.broadcast %522 : vector<1x32xf32> to vector<8x32xf32>
    %524 = arith.addf %520, %523 : vector<8x32xf32>
    %cst_243 = arith.constant 1.000000e-01 : f32
    %525 = vector.broadcast %cst_243 : f32 to vector<8x32xf32>
    %526 = arith.mulf %525, %524 : vector<8x32xf32>
    %527 = arith.maximumf %524, %526 : vector<8x32xf32>
    %c1_244 = arith.constant 1 : index
    %c0_245 = arith.constant 0 : index
    %c0_246 = arith.constant 0 : index
    %528 = vector.load %arg29[%c1_244, %c0_245, %c0_246] : memref<2x32x64xbf16, #tpu.memory_space<vmem>>, vector<1x32x64xbf16>
    %529 = vector.shape_cast %528 : vector<1x32x64xbf16> to vector<32x64xbf16>
    %530 = arith.truncf %527 : vector<8x32xf32> to vector<8x32xbf16>
    %cst_247 = arith.constant dense<0.000000e+00> : vector<8x64xf32>
    %531 = tpu.matmul %530, %529, %cst_247 {dimension_numbers = #tpu.dot_dimension_numbers<[1], [0], [0], [1], [0, 0, 1, 1], [], []>} : vector<8x32xbf16>, vector<32x64xbf16>, vector<8x64xf32> -> vector<8x64xf32>
    %532 = arith.addf %492, %531 : vector<8x64xf32>
    %c1_248 = arith.constant 1 : index
    %c0_249 = arith.constant 0 : index
    %c0_250 = arith.constant 0 : index
    %533 = vector.load %arg30[%c1_248, %c0_249, %c0_250] : memref<2x1x64xf32, #tpu.memory_space<vmem>>, vector<1x1x64xf32>
    %534 = vector.shape_cast %533 : vector<1x1x64xf32> to vector<1x64xf32>
    %535 = vector.broadcast %534 : vector<1x64xf32> to vector<8x64xf32>
    %536 = arith.addf %532, %535 : vector<8x64xf32>
    %c0_251 = arith.constant 0 : index
    %c0_252 = arith.constant 0 : index
    %537 = vector.load %arg31[%c0_251, %c0_252] : memref<1x64xf32, #tpu.memory_space<vmem>>, vector<1x64xf32>
    %c0_253 = arith.constant 0 : index
    %c0_254 = arith.constant 0 : index
    %538 = vector.load %arg32[%c0_253, %c0_254] : memref<1x64xf32, #tpu.memory_space<vmem>>, vector<1x64xf32>
    %cst_255 = arith.constant dense<0.000000e+00> : vector<8xf32>
    %539 = vector.multi_reduction <add>, %536, %cst_255 [1] : vector<8x64xf32> to vector<8xf32>
    %540 = vector.shape_cast %539 : vector<8xf32> to vector<8x1xf32>
    %cst_256 = arith.constant 6.400000e+01 : f32
    %541 = vector.broadcast %cst_256 : f32 to vector<8x1xf32>
    %542 = arith.divf %540, %541 : vector<8x1xf32>
    %543 = vector.broadcast %542 : vector<8x1xf32> to vector<8x64xf32>
    %544 = arith.subf %536, %543 : vector<8x64xf32>
    %545 = arith.mulf %544, %544 : vector<8x64xf32>
    %cst_257 = arith.constant dense<0.000000e+00> : vector<8xf32>
    %546 = vector.multi_reduction <add>, %545, %cst_257 [1] : vector<8x64xf32> to vector<8xf32>
    %547 = vector.shape_cast %546 : vector<8xf32> to vector<8x1xf32>
    %cst_258 = arith.constant 6.400000e+01 : f32
    %548 = vector.broadcast %cst_258 : f32 to vector<8x1xf32>
    %549 = arith.divf %547, %548 : vector<8x1xf32>
    %cst_259 = arith.constant 9.99999974E-6 : f32
    %550 = vector.broadcast %cst_259 : f32 to vector<8x1xf32>
    %551 = arith.addf %549, %550 : vector<8x1xf32>
    %552 = math.rsqrt %551 : vector<8x1xf32>
    %553 = vector.broadcast %552 : vector<8x1xf32> to vector<8x64xf32>
    %554 = arith.mulf %544, %553 : vector<8x64xf32>
    %555 = vector.broadcast %537 : vector<1x64xf32> to vector<8x64xf32>
    %556 = arith.mulf %554, %555 : vector<8x64xf32>
    %557 = vector.broadcast %538 : vector<1x64xf32> to vector<8x64xf32>
    %558 = arith.addf %556, %557 : vector<8x64xf32>
    %c0_260 = arith.constant 0 : index
    %c0_261 = arith.constant 0 : index
    %559 = vector.load %arg33[%c0_260, %c0_261] : memref<64x32xbf16, #tpu.memory_space<vmem>>, vector<64x32xbf16>
    %560 = arith.truncf %558 : vector<8x64xf32> to vector<8x64xbf16>
    %cst_262 = arith.constant dense<0.000000e+00> : vector<8x32xf32>
    %561 = tpu.matmul %560, %559, %cst_262 {dimension_numbers = #tpu.dot_dimension_numbers<[1], [0], [0], [1], [0, 0, 1, 1], [], []>} : vector<8x64xbf16>, vector<64x32xbf16>, vector<8x32xf32> -> vector<8x32xf32>
    %c0_263 = arith.constant 0 : index
    %c0_264 = arith.constant 0 : index
    %c0_265 = arith.constant 0 : index
    %562 = vector.load %arg6[%c0_263, %c0_264, %c0_265] : memref<1x1x32xf32, #tpu.memory_space<vmem>>, vector<1x1x32xf32>
    %563 = vector.shape_cast %562 : vector<1x1x32xf32> to vector<1x32xf32>
    %564 = vector.broadcast %563 : vector<1x32xf32> to vector<8x32xf32>
    %565 = arith.addf %561, %564 : vector<8x32xf32>
    %cst_266 = arith.constant 1.000000e-01 : f32
    %566 = vector.broadcast %cst_266 : f32 to vector<8x32xf32>
    %567 = arith.mulf %566, %565 : vector<8x32xf32>
    %568 = arith.maximumf %565, %567 : vector<8x32xf32>
    %c0_267 = arith.constant 0 : index
    %c0_268 = arith.constant 0 : index
    %569 = vector.load %arg34[%c0_267, %c0_268] : memref<32x6xbf16, #tpu.memory_space<vmem>>, vector<32x6xbf16>
    %570 = arith.truncf %568 : vector<8x32xf32> to vector<8x32xbf16>
    %cst_269 = arith.constant dense<0.000000e+00> : vector<8x6xf32>
    %571 = tpu.matmul %570, %569, %cst_269 {dimension_numbers = #tpu.dot_dimension_numbers<[1], [0], [0], [1], [0, 0, 1, 1], [], []>} : vector<8x32xbf16>, vector<32x6xbf16>, vector<8x6xf32> -> vector<8x6xf32>
    %c0_270 = arith.constant 0 : index
    %c0_271 = arith.constant 0 : index
    %572 = vector.load %arg35[%c0_270, %c0_271] : memref<1x6xf32, #tpu.memory_space<vmem>>, vector<1x6xf32>
    %573 = vector.broadcast %572 : vector<1x6xf32> to vector<8x6xf32>
    %574 = arith.addf %571, %573 : vector<8x6xf32>
    %575 = vector.broadcast %17 : vector<8x1xf32> to vector<8x6xf32>
    %576 = arith.mulf %574, %575 : vector<8x6xf32>
    %577 = vector.shape_cast %576 : vector<8x6xf32> to vector<1x8x6xf32>
    %c0_272 = arith.constant 0 : index
    %c0_273 = arith.constant 0 : index
    %c0_274 = arith.constant 0 : index
    %578 = vector.load %arg36[%c0_272, %c0_273, %c0_274] : memref<1x8x6xf32, #tpu.memory_space<vmem>>, vector<1x8x6xf32>
    tpu.vector_store %arg36[%c0_272, %c0_273, %c0_274], %577 {strides = array<i32>} : memref<1x8x6xf32, #tpu.memory_space<vmem>>, vector<1x8x6xf32>,
    return
  }
  func.func @transform_0(%arg0: i32) -> (i32, i32, i32) {
    %c0_i32 = arith.constant 0 : i32
    %c0_i32_0 = arith.constant 0 : i32
    %c0_i32_1 = arith.constant 0 : i32
    return %arg0, %c0_i32, %c0_i32_0 : i32, i32, i32
  }
  func.func @transform_1(%arg0: i32) -> (i32, i32, i32) {
    %c0_i32 = arith.constant 0 : i32
    %c0_i32_0 = arith.constant 0 : i32
    %c0_i32_1 = arith.constant 0 : i32
    return %arg0, %c0_i32, %c0_i32_0 : i32, i32, i32
  }
  func.func @transform_2(%arg0: i32) -> (i32, i32, i32) {
    %c0_i32 = arith.constant 0 : i32
    %c0_i32_0 = arith.constant 0 : i32
    %c0_i32_1 = arith.constant 0 : i32
    return %arg0, %c0_i32, %c0_i32_0 : i32, i32, i32
  }
  func.func @transform_3(%arg0: i32) -> (i32, i32, i32) {
    %c0_i32 = arith.constant 0 : i32
    %c0_i32_0 = arith.constant 0 : i32
    %c0_i32_1 = arith.constant 0 : i32
    return %arg0, %c0_i32, %c0_i32_0 : i32, i32, i32
  }
  func.func @transform_4(%arg0: i32) -> (i32, i32, i32) {
    %c0_i32 = arith.constant 0 : i32
    %c0_i32_0 = arith.constant 0 : i32
    %c0_i32_1 = arith.constant 0 : i32
    return %arg0, %c0_i32, %c0_i32_0 : i32, i32, i32
  }
  func.func @transform_5(%arg0: i32) -> (i32, i32, i32) {
    %c0_i32 = arith.constant 0 : i32
    %c0_i32_0 = arith.constant 0 : i32
    %c0_i32_1 = arith.constant 0 : i32
    return %arg0, %c0_i32, %c0_i32_0 : i32, i32, i32
  }
  func.func @transform_6(%arg0: i32) -> (i32, i32) {
    %c0_i32 = arith.constant 0 : i32
    %c0_i32_0 = arith.constant 0 : i32
    %c0_i32_1 = arith.constant 0 : i32
    return %c0_i32, %c0_i32_0 : i32, i32
  }
  func.func @transform_7(%arg0: i32) -> (i32, i32) {
    %c0_i32 = arith.constant 0 : i32
    %c0_i32_0 = arith.constant 0 : i32
    %c0_i32_1 = arith.constant 0 : i32
    return %c0_i32, %c0_i32_0 : i32, i32
  }
  func.func @transform_8(%arg0: i32) -> (i32, i32) {
    %c0_i32 = arith.constant 0 : i32
    %c0_i32_0 = arith.constant 0 : i32
    %c0_i32_1 = arith.constant 0 : i32
    return %c0_i32, %c0_i32_0 : i32, i32
  }
  func.func @transform_9(%arg0: i32) -> (i32, i32, i32) {
    %c0_i32 = arith.constant 0 : i32
    %c0_i32_0 = arith.constant 0 : i32
    %c0_i32_1 = arith.constant 0 : i32
    %c0_i32_2 = arith.constant 0 : i32
    return %c0_i32, %c0_i32_0, %c0_i32_1 : i32, i32, i32
  }
  func.func @transform_10(%arg0: i32) -> (i32, i32, i32) {
    %c0_i32 = arith.constant 0 : i32
    %c0_i32_0 = arith.constant 0 : i32
    %c0_i32_1 = arith.constant 0 : i32
    %c0_i32_2 = arith.constant 0 : i32
    return %c0_i32, %c0_i32_0, %c0_i32_1 : i32, i32, i32
  }
  func.func @transform_11(%arg0: i32) -> (i32, i32, i32) {
    %c0_i32 = arith.constant 0 : i32
    %c0_i32_0 = arith.constant 0 : i32
    %c0_i32_1 = arith.constant 0 : i32
    %c0_i32_2 = arith.constant 0 : i32
    return %c0_i32, %c0_i32_0, %c0_i32_1 : i32, i32, i32
  }
  func.func @transform_12(%arg0: i32) -> (i32, i32, i32) {
    %c0_i32 = arith.constant 0 : i32
    %c0_i32_0 = arith.constant 0 : i32
    %c0_i32_1 = arith.constant 0 : i32
    %c0_i32_2 = arith.constant 0 : i32
    return %c0_i32, %c0_i32_0, %c0_i32_1 : i32, i32, i32
  }
  func.func @transform_13(%arg0: i32) -> (i32, i32, i32) {
    %c0_i32 = arith.constant 0 : i32
    %c0_i32_0 = arith.constant 0 : i32
    %c0_i32_1 = arith.constant 0 : i32
    %c0_i32_2 = arith.constant 0 : i32
    return %c0_i32, %c0_i32_0, %c0_i32_1 : i32, i32, i32
  }
  func.func @transform_14(%arg0: i32) -> (i32, i32, i32) {
    %c0_i32 = arith.constant 0 : i32
    %c0_i32_0 = arith.constant 0 : i32
    %c0_i32_1 = arith.constant 0 : i32
    %c0_i32_2 = arith.constant 0 : i32
    return %c0_i32, %c0_i32_0, %c0_i32_1 : i32, i32, i32
  }
  func.func @transform_15(%arg0: i32) -> (i32, i32, i32) {
    %c0_i32 = arith.constant 0 : i32
    %c0_i32_0 = arith.constant 0 : i32
    %c0_i32_1 = arith.constant 0 : i32
    %c0_i32_2 = arith.constant 0 : i32
    return %c0_i32, %c0_i32_0, %c0_i32_1 : i32, i32, i32
  }
  func.func @transform_16(%arg0: i32) -> (i32, i32, i32) {
    %c0_i32 = arith.constant 0 : i32
    %c0_i32_0 = arith.constant 0 : i32
    %c0_i32_1 = arith.constant 0 : i32
    %c0_i32_2 = arith.constant 0 : i32
    return %c0_i32, %c0_i32_0, %c0_i32_1 : i32, i32, i32
  }
  func.func @transform_17(%arg0: i32) -> (i32, i32, i32) {
    %c0_i32 = arith.constant 0 : i32
    %c0_i32_0 = arith.constant 0 : i32
    %c0_i32_1 = arith.constant 0 : i32
    %c0_i32_2 = arith.constant 0 : i32
    return %c0_i32, %c0_i32_0, %c0_i32_1 : i32, i32, i32
  }
  func.func @transform_18(%arg0: i32) -> (i32, i32, i32) {
    %c0_i32 = arith.constant 0 : i32
    %c0_i32_0 = arith.constant 0 : i32
    %c0_i32_1 = arith.constant 0 : i32
    %c0_i32_2 = arith.constant 0 : i32
    return %c0_i32, %c0_i32_0, %c0_i32_1 : i32, i32, i32
  }
  func.func @transform_19(%arg0: i32) -> (i32, i32, i32) {
    %c0_i32 = arith.constant 0 : i32
    %c0_i32_0 = arith.constant 0 : i32
    %c0_i32_1 = arith.constant 0 : i32
    %c0_i32_2 = arith.constant 0 : i32
    return %c0_i32, %c0_i32_0, %c0_i32_1 : i32, i32, i32
  }
  func.func @transform_20(%arg0: i32) -> (i32, i32, i32) {
    %c0_i32 = arith.constant 0 : i32
    %c0_i32_0 = arith.constant 0 : i32
    %c0_i32_1 = arith.constant 0 : i32
    %c0_i32_2 = arith.constant 0 : i32
    return %c0_i32, %c0_i32_0, %c0_i32_1 : i32, i32, i32
  }
  func.func @transform_21(%arg0: i32) -> (i32, i32, i32) {
    %c0_i32 = arith.constant 0 : i32
    %c0_i32_0 = arith.constant 0 : i32
    %c0_i32_1 = arith.constant 0 : i32
    %c0_i32_2 = arith.constant 0 : i32
    return %c0_i32, %c0_i32_0, %c0_i32_1 : i32, i32, i32
  }
  func.func @transform_22(%arg0: i32) -> (i32, i32, i32) {
    %c0_i32 = arith.constant 0 : i32
    %c0_i32_0 = arith.constant 0 : i32
    %c0_i32_1 = arith.constant 0 : i32
    %c0_i32_2 = arith.constant 0 : i32
    return %c0_i32, %c0_i32_0, %c0_i32_1 : i32, i32, i32
  }
  func.func @transform_23(%arg0: i32) -> (i32, i32, i32) {
    %c0_i32 = arith.constant 0 : i32
    %c0_i32_0 = arith.constant 0 : i32
    %c0_i32_1 = arith.constant 0 : i32
    %c0_i32_2 = arith.constant 0 : i32
    return %c0_i32, %c0_i32_0, %c0_i32_1 : i32, i32, i32
  }
  func.func @transform_24(%arg0: i32) -> (i32, i32, i32) {
    %c0_i32 = arith.constant 0 : i32
    %c0_i32_0 = arith.constant 0 : i32
    %c0_i32_1 = arith.constant 0 : i32
    %c0_i32_2 = arith.constant 0 : i32
    return %c0_i32, %c0_i32_0, %c0_i32_1 : i32, i32, i32
  }
  func.func @transform_25(%arg0: i32) -> (i32, i32, i32) {
    %c0_i32 = arith.constant 0 : i32
    %c0_i32_0 = arith.constant 0 : i32
    %c0_i32_1 = arith.constant 0 : i32
    %c0_i32_2 = arith.constant 0 : i32
    return %c0_i32, %c0_i32_0, %c0_i32_1 : i32, i32, i32
  }
  func.func @transform_26(%arg0: i32) -> (i32, i32, i32) {
    %c0_i32 = arith.constant 0 : i32
    %c0_i32_0 = arith.constant 0 : i32
    %c0_i32_1 = arith.constant 0 : i32
    %c0_i32_2 = arith.constant 0 : i32
    return %c0_i32, %c0_i32_0, %c0_i32_1 : i32, i32, i32
  }
  func.func @transform_27(%arg0: i32) -> (i32, i32, i32) {
    %c0_i32 = arith.constant 0 : i32
    %c0_i32_0 = arith.constant 0 : i32
    %c0_i32_1 = arith.constant 0 : i32
    %c0_i32_2 = arith.constant 0 : i32
    return %c0_i32, %c0_i32_0, %c0_i32_1 : i32, i32, i32
  }
  func.func @transform_28(%arg0: i32) -> (i32, i32, i32) {
    %c0_i32 = arith.constant 0 : i32
    %c0_i32_0 = arith.constant 0 : i32
    %c0_i32_1 = arith.constant 0 : i32
    %c0_i32_2 = arith.constant 0 : i32
    return %c0_i32, %c0_i32_0, %c0_i32_1 : i32, i32, i32
  }
  func.func @transform_29(%arg0: i32) -> (i32, i32, i32) {
    %c0_i32 = arith.constant 0 : i32
    %c0_i32_0 = arith.constant 0 : i32
    %c0_i32_1 = arith.constant 0 : i32
    %c0_i32_2 = arith.constant 0 : i32
    return %c0_i32, %c0_i32_0, %c0_i32_1 : i32, i32, i32
  }
  func.func @transform_30(%arg0: i32) -> (i32, i32) {
    %c0_i32 = arith.constant 0 : i32
    %c0_i32_0 = arith.constant 0 : i32
    %c0_i32_1 = arith.constant 0 : i32
    return %c0_i32, %c0_i32_0 : i32, i32
  }
  func.func @transform_31(%arg0: i32) -> (i32, i32) {
    %c0_i32 = arith.constant 0 : i32
    %c0_i32_0 = arith.constant 0 : i32
    %c0_i32_1 = arith.constant 0 : i32
    return %c0_i32, %c0_i32_0 : i32, i32
  }
  func.func @transform_32(%arg0: i32) -> (i32, i32) {
    %c0_i32 = arith.constant 0 : i32
    %c0_i32_0 = arith.constant 0 : i32
    %c0_i32_1 = arith.constant 0 : i32
    return %c0_i32, %c0_i32_0 : i32, i32
  }
  func.func @transform_33(%arg0: i32) -> (i32, i32) {
    %c0_i32 = arith.constant 0 : i32
    %c0_i32_0 = arith.constant 0 : i32
    %c0_i32_1 = arith.constant 0 : i32
    return %c0_i32, %c0_i32_0 : i32, i32
  }
  func.func @transform_34(%arg0: i32) -> (i32, i32) {
    %c0_i32 = arith.constant 0 : i32
    %c0_i32_0 = arith.constant 0 : i32
    %c0_i32_1 = arith.constant 0 : i32
    return %c0_i32, %c0_i32_0 : i32, i32
  }
  func.func @transform_35(%arg0: i32) -> (i32, i32, i32) {
    %c0_i32 = arith.constant 0 : i32
    %c0_i32_0 = arith.constant 0 : i32
    %c0_i32_1 = arith.constant 0 : i32
    return %arg0, %c0_i32, %c0_i32_0 : i32, i32, i32
  }
}

</mosaic_0001>

<llo_original>
// kernel: full_transformer_vector_decoder.1
$region0: #{full_transformer_vector_decoder.1}
  #allocation0 [shape = 'u32[]', space=smem, size = 0x4, offset = 0x4, fixed_abs, tag = 'smem constant byte address 0x4 - core index']
  #allocation1 [shape = 'u32[144,128]{1,0:T(1,128)}', space=vmem, size = 0x12000, scoped, tag = 'internal scratch']
  %s0 = inlined_call_operand.smem [shape: u32[36], index: -1, kind: input, shape index: {}]
  %s1 = sld [smem:[%s0]]
  %s2 = scalar_lea.smem %s0, 1
  %s3 = sld [smem:[%s2]]
  %s4 = scalar_lea.smem %s0, 2
  %s5 = sld [smem:[%s4]]
  %s6 = scalar_lea.smem %s0, 3
  %s7 = sld [smem:[%s6]]
  %s8 = scalar_lea.smem %s0, 4
  %s9 = sld [smem:[%s8]]
  %s10 = scalar_lea.smem %s0, 5
  %s11 = sld [smem:[%s10]]
  %s12 = scalar_lea.smem %s0, 6
  %s13 = sld [smem:[%s12]]
  %s14 = scalar_lea.smem %s0, 7
  %s15 = sld [smem:[%s14]]
  %s16 = scalar_lea.smem %s0, 8
  %s17 = sld [smem:[%s16]]
  %s18 = scalar_lea.smem %s0, 9
  %s19 = sld [smem:[%s18]]
  %s20 = scalar_lea.smem %s0, 10
  %s21 = sld [smem:[%s20]]
  %s22 = scalar_lea.smem %s0, 11
  %s23 = sld [smem:[%s22]]
  %s24 = scalar_lea.smem %s0, 12
  %s25 = sld [smem:[%s24]]
  %s26 = scalar_lea.smem %s0, 13
  %s27 = sld [smem:[%s26]]
  %s28 = scalar_lea.smem %s0, 14
  %s29 = sld [smem:[%s28]]
  %s30 = scalar_lea.smem %s0, 15
  %s31 = sld [smem:[%s30]]
  %s32 = scalar_lea.smem %s0, 16
  %s33 = sld [smem:[%s32]]
  %s34 = scalar_lea.smem %s0, 17
  %s35 = sld [smem:[%s34]]
  %s36 = scalar_lea.smem %s0, 18
  %s37 = sld [smem:[%s36]]
  %s38 = scalar_lea.smem %s0, 19
  %s39 = sld [smem:[%s38]]
  %s40 = scalar_lea.smem %s0, 20
  %s41 = sld [smem:[%s40]]
  %s42 = scalar_lea.smem %s0, 21
  %s43 = sld [smem:[%s42]]
  %s44 = scalar_lea.smem %s0, 22
  %s45 = sld [smem:[%s44]]
  %s46 = scalar_lea.smem %s0, 23
  %s47 = sld [smem:[%s46]]
  %s48 = scalar_lea.smem %s0, 24
  %s49 = sld [smem:[%s48]]
  %s50 = scalar_lea.smem %s0, 25
  %s51 = sld [smem:[%s50]]
  %s52 = scalar_lea.smem %s0, 26
  %s53 = sld [smem:[%s52]]
  %s54 = scalar_lea.smem %s0, 27
  %s55 = sld [smem:[%s54]]
  %s56 = scalar_lea.smem %s0, 28
  %s57 = sld [smem:[%s56]]
  %s58 = scalar_lea.smem %s0, 29
  %s59 = sld [smem:[%s58]]
  %s60 = scalar_lea.smem %s0, 30
  %s61 = sld [smem:[%s60]]
  %s62 = scalar_lea.smem %s0, 31
  %s63 = sld [smem:[%s62]]
  %s64 = scalar_lea.smem %s0, 32
  %s65 = sld [smem:[%s64]]
  %s66 = scalar_lea.smem %s0, 33
  %s67 = sld [smem:[%s66]]
  %s68 = scalar_lea.smem %s0, 34
  %s69 = sld [smem:[%s68]]
  %s70 = scalar_lea.smem %s0, 35
  %s71 = sld [smem:[%s70]]
  %s72 = sld [smem:[#allocation0]]
  $region217: #{full_transformer_vector_decoder.1} parent=0
    _
  %s74 = ssub.s32 1, %s72
  %s75 = scalar_select 0, %s74, %s72
  $region1: #{full_transformer_vector_decoder.1} parent=0
    #allocation2 [shape = 'u8[1024]{0}', space=vmem, size = 0x400, scoped, tag = 'input window, operand 2']
    #allocation3 [shape = 's32[2]{0}', space=sflag, size = 0x8, scoped, tag = 'scoped memory for full_transformer_vector_decoder.1']
    #allocation4 [shape = 'u8[4096]{0}', space=vmem, size = 0x1000, scoped, tag = 'input window, operand 6, single buffered']
    #allocation5 [shape = 's32[1]{0}', space=sflag, size = 0x4, scoped, tag = 'scoped memory for full_transformer_vector_decoder.1']
    #allocation6 [shape = 'u8[8192]{0}', space=vmem, size = 0x2000, scoped, tag = 'input window, operand 7, single buffered']
    #allocation7 [shape = 'u8[512]{0}', space=vmem, size = 0x400, scoped, tag = 'input window, operand 8, single buffered']
    #allocation8 [shape = 's32[1]{0}', space=sflag, size = 0x4, scoped, tag = 'scoped memory for full_transformer_vector_decoder.1']
    #allocation9 [shape = 'u8[1024]{0}', space=vmem, size = 0x400, scoped, tag = 'input window, operand 9, single buffered']
    #allocation10 [shape = 'u8[1024]{0}', space=vmem, size = 0x400, scoped, tag = 'input window, operand 10, single buffered']
    #allocation11 [shape = 's32[1]{0}', space=sflag, size = 0x4, scoped, tag = 'scoped memory for full_transformer_vector_decoder.1']
    #allocation12 [shape = 'u8[2048]{0}', space=vmem, size = 0x800, scoped, tag = 'input window, operand 12, single buffered']
    #allocation13 [shape = 'u8[1024]{0}', space=vmem, size = 0x400, scoped, tag = 'input window, operand 13, single buffered']
    #allocation14 [shape = 's32[1]{0}', space=sflag, size = 0x4, scoped, tag = 'scoped memory for full_transformer_vector_decoder.1']
    #allocation15 [shape = 'u8[1024]{0}', space=vmem, size = 0x400, scoped, tag = 'input window, operand 16, single buffered']
    #allocation16 [shape = 'u8[1024]{0}', space=vmem, size = 0x400, scoped, tag = 'input window, operand 17, single buffered']
    #allocation17 [shape = 's32[1]{0}', space=sflag, size = 0x4, scoped, tag = 'scoped memory for full_transformer_vector_decoder.1']
    #allocation18 [shape = 'u8[1024]{0}', space=vmem, size = 0x400, scoped, tag = 'input window, operand 18, single buffered']
    %76 = vsyncpa [#allocation3], 0
    %s77 = scalar_lea.sflag [#allocation3], 1
    %78 = vsyncpa %s77, 0
    %79 = vsyncpa [#allocation5], 0
    %80 = vsyncpa [#allocation8], 0
    %81 = vsyncpa [#allocation11], 0
    %82 = vsyncpa [#allocation14], 0
    %83 = vsyncpa [#allocation17], 0
    loop: start=0, step=1, limit=4
    $region2: #{full_transformer_vector_decoder.1} parent=1 // loop_pre_header
      _
    $region3: #{full_transformer_vector_decoder.1} parent=1 // loop_header
      %s85 = sphi 0, %s89
      %p86 = scmp.ge.s32.totalorder %s85, 4
      %s95 = sphi 0, %s97
      %s98 = sphi 0, %s95
      %s99 = sphi 0, %s98
      %s115 = sphi 0, %s99
      %s121 = sphi 0, %s123
      %s124 = sphi 0, %s121
      %s125 = sphi 0, %s124
      %s141 = sphi 0, %s125
      %s147 = sphi 0, %s149
      %s150 = sphi 0, %s147
      %s151 = sphi 0, %s150
      %s167 = sphi 0, %s151
      %s173 = sphi 0, %s175
      %s176 = sphi 0, %s173
      %s177 = sphi 0, %s176
      %s193 = sphi 0, %s177
      %s199 = sphi 0, %s201
      %s202 = sphi 0, %s199
      %s203 = sphi 0, %s202
      %s219 = sphi 0, %s203
      %s225 = sphi 0, %s227
      %s228 = sphi 0, %s225
      %s229 = sphi 0, %s228
      %s245 = sphi 0, %s229
      %s249 = sphi 0, %s249
      %s251 = sphi 0, %s249
      %s252 = sphi 0, %s251
      %s266 = sphi 0, %s252
      %s270 = sphi 0, %s270
      %s272 = sphi 0, %s270
      %s273 = sphi 0, %s272
      %s287 = sphi 0, %s273
      %s291 = sphi 0, %s291
      %s293 = sphi 0, %s291
      %s294 = sphi 0, %s293
      %s308 = sphi 0, %s294
      %s312 = sphi 0, %s312
      %s314 = sphi 0, %s312
      %s315 = sphi 0, %s314
      %s329 = sphi 0, %s315
      %s333 = sphi 0, %s333
      %s335 = sphi 0, %s333
      %s336 = sphi 0, %s335
      %s350 = sphi 0, %s336
      %s354 = sphi 0, %s354
      %s356 = sphi 0, %s354
      %s357 = sphi 0, %s356
      %s371 = sphi 0, %s357
      %s375 = sphi 0, %s375
      %s377 = sphi 0, %s375
      %s378 = sphi 0, %s377
      %s392 = sphi 0, %s378
      %s396 = sphi 0, %s396
      %s398 = sphi 0, %s396
      %s399 = sphi 0, %s398
      %s413 = sphi 0, %s399
      %s417 = sphi 0, %s417
      %s419 = sphi 0, %s417
      %s420 = sphi 0, %s419
      %s434 = sphi 0, %s420
      %s438 = sphi 0, %s438
      %s440 = sphi 0, %s438
      %s441 = sphi 0, %s440
      %s455 = sphi 0, %s441
      %s459 = sphi 0, %s459
      %s461 = sphi 0, %s459
      %s462 = sphi 0, %s461
      %s476 = sphi 0, %s462
      %s480 = sphi 0, %s480
      %s482 = sphi 0, %s480
      %s483 = sphi 0, %s482
      %s497 = sphi 0, %s483
      %s501 = sphi 0, %s501
      %s503 = sphi 0, %s501
      %s504 = sphi 0, %s503
      %s518 = sphi 0, %s504
      %s522 = sphi 0, %s522
      %s524 = sphi 0, %s522
      %s525 = sphi 0, %s524
      %s539 = sphi 0, %s525
      %s543 = sphi 0, %s543
      %s545 = sphi 0, %s543
      %s546 = sphi 0, %s545
      %s560 = sphi 0, %s546
      %s564 = sphi 0, %s564
      %s566 = sphi 0, %s564
      %s567 = sphi 0, %s566
      %s581 = sphi 0, %s567
      %s585 = sphi 0, %s585
      %s587 = sphi 0, %s585
      %s588 = sphi 0, %s587
      %s602 = sphi 0, %s588
      %s606 = sphi 0, %s606
      %s608 = sphi 0, %s606
      %s609 = sphi 0, %s608
      %s623 = sphi 0, %s609
      %s627 = sphi 0, %s627
      %s629 = sphi 0, %s627
      %s630 = sphi 0, %s629
      %s644 = sphi 0, %s630
      %s648 = sphi 0, %s648
      %s650 = sphi 0, %s648
      %s651 = sphi 0, %s650
      %s665 = sphi 0, %s651
      %s669 = sphi 0, %s669
      %s671 = sphi 0, %s669
      %s672 = sphi 0, %s671
      %s686 = sphi 0, %s672
      %s690 = sphi 0, %s690
      %s692 = sphi 0, %s690
      %s693 = sphi 0, %s692
      %s707 = sphi 0, %s693
      %s711 = sphi 0, %s711
      %s713 = sphi 0, %s711
      %s714 = sphi 0, %s713
      %s728 = sphi 0, %s714
      %s732 = sphi 0, %s732
      %s734 = sphi 0, %s732
      %s735 = sphi 0, %s734
      %s749 = sphi 0, %s735
      %s753 = sphi 0, %s753
      %s755 = sphi 0, %s753
      %s756 = sphi 0, %s755
      %s770 = sphi 0, %s756
      %s774 = sphi 0, %s774
      %s776 = sphi 0, %s774
      %s777 = sphi 0, %s776
      %s791 = sphi 0, %s777
      %s795 = sphi 0, %s795
      %s797 = sphi 0, %s795
      %s798 = sphi 0, %s797
      %s812 = sphi 0, %s798
      %s816 = sphi 0, %s816
      %s818 = sphi 0, %s816
      %s819 = sphi 0, %s818
      %s833 = sphi 0, %s819
      %s837 = sphi 0, %s837
      %s839 = sphi 0, %s837
      %s840 = sphi 0, %s839
      %s854 = sphi 0, %s840
      %s860 = sphi 0, %s862
      %s863 = sphi 0, %s860
      %s864 = sphi 0, %s863
      %s880 = sphi 0, %s864
    $region4: #{full_transformer_vector_decoder.1} parent=1 // loop_header_branch
      %88 = sbr.rel (%p86) target = $region8
    $region5: #{full_transformer_vector_decoder.1} parent=1 // loop_body
      %s90 = ssub.s32 %s85, 1
      %s91 = ssub.s32 %s85, 2
      %s92 = sadd.s32 %s85, 1
      %s93 = ssub.s32 %s85, %s92
      %p94 = scmp.eq.s32.totalorder %s93, 0
      %s96 = sadd.s32 %s95, 1
      %s97 = scalar_select %p94, %s95, %s96
      %p100 = pneg %p94
      %p101 = scmp.eq.s32.totalorder %s85, 1
      %p102 = por %p100, %p101
      %p103 = scmp.ne.s32.totalorder %s95, %s98
      %p104 = scmp.eq.s32.totalorder %s85, 0
      %p105 = por %p103, %p104
      %p106 = scmp.ne.s32.totalorder %s95, %s98
      %p107 = scmp.eq.s32.totalorder %s90, 1
      %p108 = por %p106, %p107
      %p109 = scmp.ne.s32.totalorder %s98, %s99
      %p110 = scmp.eq.s32.totalorder %s90, 0
      %p111 = por %p109, %p110
      %p112 = scmp.ne.s32.totalorder %s98, %s99
      %p113 = scmp.eq.s32.totalorder %s91, 1
      %p114 = por %p112, %p113
      %p116 = scmp.ne.s32.totalorder %s99, %s115
      %p117 = scmp.eq.s32.totalorder %s91, 0
      %p118 = por %p116, %p117
      %s119 = ssub.s32 %s85, %s92
      %p120 = scmp.eq.s32.totalorder %s119, 0
      %s122 = sadd.s32 %s121, 1
      %s123 = scalar_select %p120, %s121, %s122
      %p126 = pneg %p120
      %p127 = scmp.eq.s32.totalorder %s85, 1
      %p128 = por %p126, %p127
      %p129 = scmp.ne.s32.totalorder %s121, %s124
      %p130 = scmp.eq.s32.totalorder %s85, 0
      %p131 = por %p129, %p130
      %p132 = scmp.ne.s32.totalorder %s121, %s124
      %p133 = scmp.eq.s32.totalorder %s90, 1
      %p134 = por %p132, %p133
      %p135 = scmp.ne.s32.totalorder %s124, %s125
      %p136 = scmp.eq.s32.totalorder %s90, 0
      %p137 = por %p135, %p136
      %p138 = scmp.ne.s32.totalorder %s124, %s125
      %p139 = scmp.eq.s32.totalorder %s91, 1
      %p140 = por %p138, %p139
      %p142 = scmp.ne.s32.totalorder %s125, %s141
      %p143 = scmp.eq.s32.totalorder %s91, 0
      %p144 = por %p142, %p143
      %s145 = ssub.s32 %s85, %s92
      %p146 = scmp.eq.s32.totalorder %s145, 0
      %s148 = sadd.s32 %s147, 1
      %s149 = scalar_select %p146, %s147, %s148
      %p152 = pneg %p146
      %p153 = scmp.eq.s32.totalorder %s85, 1
      %p154 = por %p152, %p153
      %p155 = scmp.ne.s32.totalorder %s147, %s150
      %p156 = scmp.eq.s32.totalorder %s85, 0
      %p157 = por %p155, %p156
      %p158 = scmp.ne.s32.totalorder %s147, %s150
      %p159 = scmp.eq.s32.totalorder %s90, 1
      %p160 = por %p158, %p159
      %p161 = scmp.ne.s32.totalorder %s150, %s151
      %p162 = scmp.eq.s32.totalorder %s90, 0
      %p163 = por %p161, %p162
      %p164 = scmp.ne.s32.totalorder %s150, %s151
      %p165 = scmp.eq.s32.totalorder %s91, 1
      %p166 = por %p164, %p165
      %p168 = scmp.ne.s32.totalorder %s151, %s167
      %p169 = scmp.eq.s32.totalorder %s91, 0
      %p170 = por %p168, %p169
      %s171 = ssub.s32 %s85, %s92
      %p172 = scmp.eq.s32.totalorder %s171, 0
      %s174 = sadd.s32 %s173, 1
      %s175 = scalar_select %p172, %s173, %s174
      %p178 = pneg %p172
      %p179 = scmp.eq.s32.totalorder %s85, 1
      %p180 = por %p178, %p179
      %p181 = scmp.ne.s32.totalorder %s173, %s176
      %p182 = scmp.eq.s32.totalorder %s85, 0
      %p183 = por %p181, %p182
      %p184 = scmp.ne.s32.totalorder %s173, %s176
      %p185 = scmp.eq.s32.totalorder %s90, 1
      %p186 = por %p184, %p185
      %p187 = scmp.ne.s32.totalorder %s176, %s177
      %p188 = scmp.eq.s32.totalorder %s90, 0
      %p189 = por %p187, %p188
      %p190 = scmp.ne.s32.totalorder %s176, %s177
      %p191 = scmp.eq.s32.totalorder %s91, 1
      %p192 = por %p190, %p191
      %p194 = scmp.ne.s32.totalorder %s177, %s193
      %p195 = scmp.eq.s32.totalorder %s91, 0
      %p196 = por %p194, %p195
      %s197 = ssub.s32 %s85, %s92
      %p198 = scmp.eq.s32.totalorder %s197, 0
      %s200 = sadd.s32 %s199, 1
      %s201 = scalar_select %p198, %s199, %s200
      %p204 = pneg %p198
      %p205 = scmp.eq.s32.totalorder %s85, 1
      %p206 = por %p204, %p205
      %p207 = scmp.ne.s32.totalorder %s199, %s202
      %p208 = scmp.eq.s32.totalorder %s85, 0
      %p209 = por %p207, %p208
      %p210 = scmp.ne.s32.totalorder %s199, %s202
      %p211 = scmp.eq.s32.totalorder %s90, 1
      %p212 = por %p210, %p211
      %p213 = scmp.ne.s32.totalorder %s202, %s203
      %p214 = scmp.eq.s32.totalorder %s90, 0
      %p215 = por %p213, %p214
      %p216 = scmp.ne.s32.totalorder %s202, %s203
      %p217 = scmp.eq.s32.totalorder %s91, 1
      %p218 = por %p216, %p217
      %p220 = scmp.ne.s32.totalorder %s203, %s219
      %p221 = scmp.eq.s32.totalorder %s91, 0
      %p222 = por %p220, %p221
      %s223 = ssub.s32 %s85, %s92
      %p224 = scmp.eq.s32.totalorder %s223, 0
      %s226 = sadd.s32 %s225, 1
      %s227 = scalar_select %p224, %s225, %s226
      %p230 = pneg %p224
      %p231 = scmp.eq.s32.totalorder %s85, 1
      %p232 = por %p230, %p231
      %p233 = scmp.ne.s32.totalorder %s225, %s228
      %p234 = scmp.eq.s32.totalorder %s85, 0
      %p235 = por %p233, %p234
      %p236 = scmp.ne.s32.totalorder %s225, %s228
      %p237 = scmp.eq.s32.totalorder %s90, 1
      %p238 = por %p236, %p237
      %p239 = scmp.ne.s32.totalorder %s228, %s229
      %p240 = scmp.eq.s32.totalorder %s90, 0
      %p241 = por %p239, %p240
      %p242 = scmp.ne.s32.totalorder %s228, %s229
      %p243 = scmp.eq.s32.totalorder %s91, 1
      %p244 = por %p242, %p243
      %p246 = scmp.ne.s32.totalorder %s229, %s245
      %p247 = scmp.eq.s32.totalorder %s91, 0
      %p248 = por %p246, %p247
      %s250 = sadd.s32 %s249, 1
      %p253 = scmp.eq.s32.totalorder %s85, 1
      %p254 = scmp.ne.s32.totalorder %s249, %s251
      %p255 = scmp.eq.s32.totalorder %s85, 0
      %p256 = por %p254, %p255
      %p257 = scmp.ne.s32.totalorder %s249, %s251
      %p258 = scmp.eq.s32.totalorder %s90, 1
      %p259 = por %p257, %p258
      %p260 = scmp.ne.s32.totalorder %s251, %s252
      %p261 = scmp.eq.s32.totalorder %s90, 0
      %p262 = por %p260, %p261
      %p263 = scmp.ne.s32.totalorder %s251, %s252
      %p264 = scmp.eq.s32.totalorder %s91, 1
      %p265 = por %p263, %p264
      %p267 = scmp.ne.s32.totalorder %s252, %s266
      %p268 = scmp.eq.s32.totalorder %s91, 0
      %p269 = por %p267, %p268
      %s271 = sadd.s32 %s270, 1
      %p274 = scmp.eq.s32.totalorder %s85, 1
      %p275 = scmp.ne.s32.totalorder %s270, %s272
      %p276 = scmp.eq.s32.totalorder %s85, 0
      %p277 = por %p275, %p276
      %p278 = scmp.ne.s32.totalorder %s270, %s272
      %p279 = scmp.eq.s32.totalorder %s90, 1
      %p280 = por %p278, %p279
      %p281 = scmp.ne.s32.totalorder %s272, %s273
      %p282 = scmp.eq.s32.totalorder %s90, 0
      %p283 = por %p281, %p282
      %p284 = scmp.ne.s32.totalorder %s272, %s273
      %p285 = scmp.eq.s32.totalorder %s91, 1
      %p286 = por %p284, %p285
      %p288 = scmp.ne.s32.totalorder %s273, %s287
      %p289 = scmp.eq.s32.totalorder %s91, 0
      %p290 = por %p288, %p289
      %s292 = sadd.s32 %s291, 1
      %p295 = scmp.eq.s32.totalorder %s85, 1
      %p296 = scmp.ne.s32.totalorder %s291, %s293
      %p297 = scmp.eq.s32.totalorder %s85, 0
      %p298 = por %p296, %p297
      %p299 = scmp.ne.s32.totalorder %s291, %s293
      %p300 = scmp.eq.s32.totalorder %s90, 1
      %p301 = por %p299, %p300
      %p302 = scmp.ne.s32.totalorder %s293, %s294
      %p303 = scmp.eq.s32.totalorder %s90, 0
      %p304 = por %p302, %p303
      %p305 = scmp.ne.s32.totalorder %s293, %s294
      %p306 = scmp.eq.s32.totalorder %s91, 1
      %p307 = por %p305, %p306
      %p309 = scmp.ne.s32.totalorder %s294, %s308
      %p310 = scmp.eq.s32.totalorder %s91, 0
      %p311 = por %p309, %p310
      %s313 = sadd.s32 %s312, 1
      %p316 = scmp.eq.s32.totalorder %s85, 1
      %p317 = scmp.ne.s32.totalorder %s312, %s314
      %p318 = scmp.eq.s32.totalorder %s85, 0
      %p319 = por %p317, %p318
      %p320 = scmp.ne.s32.totalorder %s312, %s314
      %p321 = scmp.eq.s32.totalorder %s90, 1
      %p322 = por %p320, %p321
      %p323 = scmp.ne.s32.totalorder %s314, %s315
      %p324 = scmp.eq.s32.totalorder %s90, 0
      %p325 = por %p323, %p324
      %p326 = scmp.ne.s32.totalorder %s314, %s315
      %p327 = scmp.eq.s32.totalorder %s91, 1
      %p328 = por %p326, %p327
      %p330 = scmp.ne.s32.totalorder %s315, %s329
      %p331 = scmp.eq.s32.totalorder %s91, 0
      %p332 = por %p330, %p331
      %s334 = sadd.s32 %s333, 1
      %p337 = scmp.eq.s32.totalorder %s85, 1
      %p338 = scmp.ne.s32.totalorder %s333, %s335
      %p339 = scmp.eq.s32.totalorder %s85, 0
      %p340 = por %p338, %p339
      %p341 = scmp.ne.s32.totalorder %s333, %s335
      %p342 = scmp.eq.s32.totalorder %s90, 1
      %p343 = por %p341, %p342
      %p344 = scmp.ne.s32.totalorder %s335, %s336
      %p345 = scmp.eq.s32.totalorder %s90, 0
      %p346 = por %p344, %p345
      %p347 = scmp.ne.s32.totalorder %s335, %s336
      %p348 = scmp.eq.s32.totalorder %s91, 1
      %p349 = por %p347, %p348
      %p351 = scmp.ne.s32.totalorder %s336, %s350
      %p352 = scmp.eq.s32.totalorder %s91, 0
      %p353 = por %p351, %p352
      %s355 = sadd.s32 %s354, 1
      %p358 = scmp.eq.s32.totalorder %s85, 1
      %p359 = scmp.ne.s32.totalorder %s354, %s356
      %p360 = scmp.eq.s32.totalorder %s85, 0
      %p361 = por %p359, %p360
      %p362 = scmp.ne.s32.totalorder %s354, %s356
      %p363 = scmp.eq.s32.totalorder %s90, 1
      %p364 = por %p362, %p363
      %p365 = scmp.ne.s32.totalorder %s356, %s357
      %p366 = scmp.eq.s32.totalorder %s90, 0
      %p367 = por %p365, %p366
      %p368 = scmp.ne.s32.totalorder %s356, %s357
      %p369 = scmp.eq.s32.totalorder %s91, 1
      %p370 = por %p368, %p369
      %p372 = scmp.ne.s32.totalorder %s357, %s371
      %p373 = scmp.eq.s32.totalorder %s91, 0
      %p374 = por %p372, %p373
      %s376 = sadd.s32 %s375, 1
      %p379 = scmp.eq.s32.totalorder %s85, 1
      %p380 = scmp.ne.s32.totalorder %s375, %s377
      %p381 = scmp.eq.s32.totalorder %s85, 0
      %p382 = por %p380, %p381
      %p383 = scmp.ne.s32.totalorder %s375, %s377
      %p384 = scmp.eq.s32.totalorder %s90, 1
      %p385 = por %p383, %p384
      %p386 = scmp.ne.s32.totalorder %s377, %s378
      %p387 = scmp.eq.s32.totalorder %s90, 0
      %p388 = por %p386, %p387
      %p389 = scmp.ne.s32.totalorder %s377, %s378
      %p390 = scmp.eq.s32.totalorder %s91, 1
      %p391 = por %p389, %p390
      %p393 = scmp.ne.s32.totalorder %s378, %s392
      %p394 = scmp.eq.s32.totalorder %s91, 0
      %p395 = por %p393, %p394
      %s397 = sadd.s32 %s396, 1
      %p400 = scmp.eq.s32.totalorder %s85, 1
      %p401 = scmp.ne.s32.totalorder %s396, %s398
      %p402 = scmp.eq.s32.totalorder %s85, 0
      %p403 = por %p401, %p402
      %p404 = scmp.ne.s32.totalorder %s396, %s398
      %p405 = scmp.eq.s32.totalorder %s90, 1
      %p406 = por %p404, %p405
      %p407 = scmp.ne.s32.totalorder %s398, %s399
      %p408 = scmp.eq.s32.totalorder %s90, 0
      %p409 = por %p407, %p408
      %p410 = scmp.ne.s32.totalorder %s398, %s399
      %p411 = scmp.eq.s32.totalorder %s91, 1
      %p412 = por %p410, %p411
      %p414 = scmp.ne.s32.totalorder %s399, %s413
      %p415 = scmp.eq.s32.totalorder %s91, 0
      %p416 = por %p414, %p415
      %s418 = sadd.s32 %s417, 1
      %p421 = scmp.eq.s32.totalorder %s85, 1
      %p422 = scmp.ne.s32.totalorder %s417, %s419
      %p423 = scmp.eq.s32.totalorder %s85, 0
      %p424 = por %p422, %p423
      %p425 = scmp.ne.s32.totalorder %s417, %s419
      %p426 = scmp.eq.s32.totalorder %s90, 1
      %p427 = por %p425, %p426
      %p428 = scmp.ne.s32.totalorder %s419, %s420
      %p429 = scmp.eq.s32.totalorder %s90, 0
      %p430 = por %p428, %p429
      %p431 = scmp.ne.s32.totalorder %s419, %s420
      %p432 = scmp.eq.s32.totalorder %s91, 1
      %p433 = por %p431, %p432
      %p435 = scmp.ne.s32.totalorder %s420, %s434
      %p436 = scmp.eq.s32.totalorder %s91, 0
      %p437 = por %p435, %p436
      %s439 = sadd.s32 %s438, 1
      %p442 = scmp.eq.s32.totalorder %s85, 1
      %p443 = scmp.ne.s32.totalorder %s438, %s440
      %p444 = scmp.eq.s32.totalorder %s85, 0
      %p445 = por %p443, %p444
      %p446 = scmp.ne.s32.totalorder %s438, %s440
      %p447 = scmp.eq.s32.totalorder %s90, 1
      %p448 = por %p446, %p447
      %p449 = scmp.ne.s32.totalorder %s440, %s441
      %p450 = scmp.eq.s32.totalorder %s90, 0
      %p451 = por %p449, %p450
      %p452 = scmp.ne.s32.totalorder %s440, %s441
      %p453 = scmp.eq.s32.totalorder %s91, 1
      %p454 = por %p452, %p453
      %p456 = scmp.ne.s32.totalorder %s441, %s455
      %p457 = scmp.eq.s32.totalorder %s91, 0
      %p458 = por %p456, %p457
      %s460 = sadd.s32 %s459, 1
      %p463 = scmp.eq.s32.totalorder %s85, 1
      %p464 = scmp.ne.s32.totalorder %s459, %s461
      %p465 = scmp.eq.s32.totalorder %s85, 0
      %p466 = por %p464, %p465
      %p467 = scmp.ne.s32.totalorder %s459, %s461
      %p468 = scmp.eq.s32.totalorder %s90, 1
      %p469 = por %p467, %p468
      %p470 = scmp.ne.s32.totalorder %s461, %s462
      %p471 = scmp.eq.s32.totalorder %s90, 0
      %p472 = por %p470, %p471
      %p473 = scmp.ne.s32.totalorder %s461, %s462
      %p474 = scmp.eq.s32.totalorder %s91, 1
      %p475 = por %p473, %p474
      %p477 = scmp.ne.s32.totalorder %s462, %s476
      %p478 = scmp.eq.s32.totalorder %s91, 0
      %p479 = por %p477, %p478
      %s481 = sadd.s32 %s480, 1
      %p484 = scmp.eq.s32.totalorder %s85, 1
      %p485 = scmp.ne.s32.totalorder %s480, %s482
      %p486 = scmp.eq.s32.totalorder %s85, 0
      %p487 = por %p485, %p486
      %p488 = scmp.ne.s32.totalorder %s480, %s482
      %p489 = scmp.eq.s32.totalorder %s90, 1
      %p490 = por %p488, %p489
      %p491 = scmp.ne.s32.totalorder %s482, %s483
      %p492 = scmp.eq.s32.totalorder %s90, 0
      %p493 = por %p491, %p492
      %p494 = scmp.ne.s32.totalorder %s482, %s483
      %p495 = scmp.eq.s32.totalorder %s91, 1
      %p496 = por %p494, %p495
      %p498 = scmp.ne.s32.totalorder %s483, %s497
      %p499 = scmp.eq.s32.totalorder %s91, 0
      %p500 = por %p498, %p499
      %s502 = sadd.s32 %s501, 1
      %p505 = scmp.eq.s32.totalorder %s85, 1
      %p506 = scmp.ne.s32.totalorder %s501, %s503
      %p507 = scmp.eq.s32.totalorder %s85, 0
      %p508 = por %p506, %p507
      %p509 = scmp.ne.s32.totalorder %s501, %s503
      %p510 = scmp.eq.s32.totalorder %s90, 1
      %p511 = por %p509, %p510
      %p512 = scmp.ne.s32.totalorder %s503, %s504
      %p513 = scmp.eq.s32.totalorder %s90, 0
      %p514 = por %p512, %p513
      %p515 = scmp.ne.s32.totalorder %s503, %s504
      %p516 = scmp.eq.s32.totalorder %s91, 1
      %p517 = por %p515, %p516
      %p519 = scmp.ne.s32.totalorder %s504, %s518
      %p520 = scmp.eq.s32.totalorder %s91, 0
      %p521 = por %p519, %p520
      %s523 = sadd.s32 %s522, 1
      %p526 = scmp.eq.s32.totalorder %s85, 1
      %p527 = scmp.ne.s32.totalorder %s522, %s524
      %p528 = scmp.eq.s32.totalorder %s85, 0
      %p529 = por %p527, %p528
      %p530 = scmp.ne.s32.totalorder %s522, %s524
      %p531 = scmp.eq.s32.totalorder %s90, 1
      %p532 = por %p530, %p531
      %p533 = scmp.ne.s32.totalorder %s524, %s525
      %p534 = scmp.eq.s32.totalorder %s90, 0
      %p535 = por %p533, %p534
      %p536 = scmp.ne.s32.totalorder %s524, %s525
      %p537 = scmp.eq.s32.totalorder %s91, 1
      %p538 = por %p536, %p537
      %p540 = scmp.ne.s32.totalorder %s525, %s539
      %p541 = scmp.eq.s32.totalorder %s91, 0
      %p542 = por %p540, %p541
      %s544 = sadd.s32 %s543, 1
      %p547 = scmp.eq.s32.totalorder %s85, 1
      %p548 = scmp.ne.s32.totalorder %s543, %s545
      %p549 = scmp.eq.s32.totalorder %s85, 0
      %p550 = por %p548, %p549
      %p551 = scmp.ne.s32.totalorder %s543, %s545
      %p552 = scmp.eq.s32.totalorder %s90, 1
      %p553 = por %p551, %p552
      %p554 = scmp.ne.s32.totalorder %s545, %s546
      %p555 = scmp.eq.s32.totalorder %s90, 0
      %p556 = por %p554, %p555
      %p557 = scmp.ne.s32.totalorder %s545, %s546
      %p558 = scmp.eq.s32.totalorder %s91, 1
      %p559 = por %p557, %p558
      %p561 = scmp.ne.s32.totalorder %s546, %s560
      %p562 = scmp.eq.s32.totalorder %s91, 0
      %p563 = por %p561, %p562
      %s565 = sadd.s32 %s564, 1
      %p568 = scmp.eq.s32.totalorder %s85, 1
      %p569 = scmp.ne.s32.totalorder %s564, %s566
      %p570 = scmp.eq.s32.totalorder %s85, 0
      %p571 = por %p569, %p570
      %p572 = scmp.ne.s32.totalorder %s564, %s566
      %p573 = scmp.eq.s32.totalorder %s90, 1
      %p574 = por %p572, %p573
      %p575 = scmp.ne.s32.totalorder %s566, %s567
      %p576 = scmp.eq.s32.totalorder %s90, 0
      %p577 = por %p575, %p576
      %p578 = scmp.ne.s32.totalorder %s566, %s567
      %p579 = scmp.eq.s32.totalorder %s91, 1
      %p580 = por %p578, %p579
      %p582 = scmp.ne.s32.totalorder %s567, %s581
      %p583 = scmp.eq.s32.totalorder %s91, 0
      %p584 = por %p582, %p583
      %s586 = sadd.s32 %s585, 1
      %p589 = scmp.eq.s32.totalorder %s85, 1
      %p590 = scmp.ne.s32.totalorder %s585, %s587
      %p591 = scmp.eq.s32.totalorder %s85, 0
      %p592 = por %p590, %p591
      %p593 = scmp.ne.s32.totalorder %s585, %s587
      %p594 = scmp.eq.s32.totalorder %s90, 1
      %p595 = por %p593, %p594
      %p596 = scmp.ne.s32.totalorder %s587, %s588
      %p597 = scmp.eq.s32.totalorder %s90, 0
      %p598 = por %p596, %p597
      %p599 = scmp.ne.s32.totalorder %s587, %s588
      %p600 = scmp.eq.s32.totalorder %s91, 1
      %p601 = por %p599, %p600
      %p603 = scmp.ne.s32.totalorder %s588, %s602
      %p604 = scmp.eq.s32.totalorder %s91, 0
      %p605 = por %p603, %p604
      %s607 = sadd.s32 %s606, 1
      %p610 = scmp.eq.s32.totalorder %s85, 1
      %p611 = scmp.ne.s32.totalorder %s606, %s608
      %p612 = scmp.eq.s32.totalorder %s85, 0
      %p613 = por %p611, %p612
      %p614 = scmp.ne.s32.totalorder %s606, %s608
      %p615 = scmp.eq.s32.totalorder %s90, 1
      %p616 = por %p614, %p615
      %p617 = scmp.ne.s32.totalorder %s608, %s609
      %p618 = scmp.eq.s32.totalorder %s90, 0
      %p619 = por %p617, %p618
      %p620 = scmp.ne.s32.totalorder %s608, %s609
      %p621 = scmp.eq.s32.totalorder %s91, 1
      %p622 = por %p620, %p621
      %p624 = scmp.ne.s32.totalorder %s609, %s623
      %p625 = scmp.eq.s32.totalorder %s91, 0
      %p626 = por %p624, %p625
      %s628 = sadd.s32 %s627, 1
      %p631 = scmp.eq.s32.totalorder %s85, 1
      %p632 = scmp.ne.s32.totalorder %s627, %s629
      %p633 = scmp.eq.s32.totalorder %s85, 0
      %p634 = por %p632, %p633
      %p635 = scmp.ne.s32.totalorder %s627, %s629
      %p636 = scmp.eq.s32.totalorder %s90, 1
      %p637 = por %p635, %p636
      %p638 = scmp.ne.s32.totalorder %s629, %s630
      %p639 = scmp.eq.s32.totalorder %s90, 0
      %p640 = por %p638, %p639
      %p641 = scmp.ne.s32.totalorder %s629, %s630
      %p642 = scmp.eq.s32.totalorder %s91, 1
      %p643 = por %p641, %p642
      %p645 = scmp.ne.s32.totalorder %s630, %s644
      %p646 = scmp.eq.s32.totalorder %s91, 0
      %p647 = por %p645, %p646
      %s649 = sadd.s32 %s648, 1
      %p652 = scmp.eq.s32.totalorder %s85, 1
      %p653 = scmp.ne.s32.totalorder %s648, %s650
      %p654 = scmp.eq.s32.totalorder %s85, 0
      %p655 = por %p653, %p654
      %p656 = scmp.ne.s32.totalorder %s648, %s650
      %p657 = scmp.eq.s32.totalorder %s90, 1
      %p658 = por %p656, %p657
      %p659 = scmp.ne.s32.totalorder %s650, %s651
      %p660 = scmp.eq.s32.totalorder %s90, 0
      %p661 = por %p659, %p660
      %p662 = scmp.ne.s32.totalorder %s650, %s651
      %p663 = scmp.eq.s32.totalorder %s91, 1
      %p664 = por %p662, %p663
      %p666 = scmp.ne.s32.totalorder %s651, %s665
      %p667 = scmp.eq.s32.totalorder %s91, 0
      %p668 = por %p666, %p667
      %s670 = sadd.s32 %s669, 1
      %p673 = scmp.eq.s32.totalorder %s85, 1
      %p674 = scmp.ne.s32.totalorder %s669, %s671
      %p675 = scmp.eq.s32.totalorder %s85, 0
      %p676 = por %p674, %p675
      %p677 = scmp.ne.s32.totalorder %s669, %s671
      %p678 = scmp.eq.s32.totalorder %s90, 1
      %p679 = por %p677, %p678
      %p680 = scmp.ne.s32.totalorder %s671, %s672
      %p681 = scmp.eq.s32.totalorder %s90, 0
      %p682 = por %p680, %p681
      %p683 = scmp.ne.s32.totalorder %s671, %s672
      %p684 = scmp.eq.s32.totalorder %s91, 1
      %p685 = por %p683, %p684
      %p687 = scmp.ne.s32.totalorder %s672, %s686
      %p688 = scmp.eq.s32.totalorder %s91, 0
      %p689 = por %p687, %p688
      %s691 = sadd.s32 %s690, 1
      %p694 = scmp.eq.s32.totalorder %s85, 1
      %p695 = scmp.ne.s32.totalorder %s690, %s692
      %p696 = scmp.eq.s32.totalorder %s85, 0
      %p697 = por %p695, %p696
      %p698 = scmp.ne.s32.totalorder %s690, %s692
      %p699 = scmp.eq.s32.totalorder %s90, 1
      %p700 = por %p698, %p699
      %p701 = scmp.ne.s32.totalorder %s692, %s693
      %p702 = scmp.eq.s32.totalorder %s90, 0
      %p703 = por %p701, %p702
      %p704 = scmp.ne.s32.totalorder %s692, %s693
      %p705 = scmp.eq.s32.totalorder %s91, 1
      %p706 = por %p704, %p705
      %p708 = scmp.ne.s32.totalorder %s693, %s707
      %p709 = scmp.eq.s32.totalorder %s91, 0
      %p710 = por %p708, %p709
      %s712 = sadd.s32 %s711, 1
      %p715 = scmp.eq.s32.totalorder %s85, 1
      %p716 = scmp.ne.s32.totalorder %s711, %s713
      %p717 = scmp.eq.s32.totalorder %s85, 0
      %p718 = por %p716, %p717
      %p719 = scmp.ne.s32.totalorder %s711, %s713
      %p720 = scmp.eq.s32.totalorder %s90, 1
      %p721 = por %p719, %p720
      %p722 = scmp.ne.s32.totalorder %s713, %s714
      %p723 = scmp.eq.s32.totalorder %s90, 0
      %p724 = por %p722, %p723
      %p725 = scmp.ne.s32.totalorder %s713, %s714
      %p726 = scmp.eq.s32.totalorder %s91, 1
      %p727 = por %p725, %p726
      %p729 = scmp.ne.s32.totalorder %s714, %s728
      %p730 = scmp.eq.s32.totalorder %s91, 0
      %p731 = por %p729, %p730
      %s733 = sadd.s32 %s732, 1
      %p736 = scmp.eq.s32.totalorder %s85, 1
      %p737 = scmp.ne.s32.totalorder %s732, %s734
      %p738 = scmp.eq.s32.totalorder %s85, 0
      %p739 = por %p737, %p738
      %p740 = scmp.ne.s32.totalorder %s732, %s734
      %p741 = scmp.eq.s32.totalorder %s90, 1
      %p742 = por %p740, %p741
      %p743 = scmp.ne.s32.totalorder %s734, %s735
      %p744 = scmp.eq.s32.totalorder %s90, 0
      %p745 = por %p743, %p744
      %p746 = scmp.ne.s32.totalorder %s734, %s735
      %p747 = scmp.eq.s32.totalorder %s91, 1
      %p748 = por %p746, %p747
      %p750 = scmp.ne.s32.totalorder %s735, %s749
      %p751 = scmp.eq.s32.totalorder %s91, 0
      %p752 = por %p750, %p751
      %s754 = sadd.s32 %s753, 1
      %p757 = scmp.eq.s32.totalorder %s85, 1
      %p758 = scmp.ne.s32.totalorder %s753, %s755
      %p759 = scmp.eq.s32.totalorder %s85, 0
      %p760 = por %p758, %p759
      %p761 = scmp.ne.s32.totalorder %s753, %s755
      %p762 = scmp.eq.s32.totalorder %s90, 1
      %p763 = por %p761, %p762
      %p764 = scmp.ne.s32.totalorder %s755, %s756
      %p765 = scmp.eq.s32.totalorder %s90, 0
      %p766 = por %p764, %p765
      %p767 = scmp.ne.s32.totalorder %s755, %s756
      %p768 = scmp.eq.s32.totalorder %s91, 1
      %p769 = por %p767, %p768
      %p771 = scmp.ne.s32.totalorder %s756, %s770
      %p772 = scmp.eq.s32.totalorder %s91, 0
      %p773 = por %p771, %p772
      %s775 = sadd.s32 %s774, 1
      %p778 = scmp.eq.s32.totalorder %s85, 1
      %p779 = scmp.ne.s32.totalorder %s774, %s776
      %p780 = scmp.eq.s32.totalorder %s85, 0
      %p781 = por %p779, %p780
      %p782 = scmp.ne.s32.totalorder %s774, %s776
      %p783 = scmp.eq.s32.totalorder %s90, 1
      %p784 = por %p782, %p783
      %p785 = scmp.ne.s32.totalorder %s776, %s777
      %p786 = scmp.eq.s32.totalorder %s90, 0
      %p787 = por %p785, %p786
      %p788 = scmp.ne.s32.totalorder %s776, %s777
      %p789 = scmp.eq.s32.totalorder %s91, 1
      %p790 = por %p788, %p789
      %p792 = scmp.ne.s32.totalorder %s777, %s791
      %p793 = scmp.eq.s32.totalorder %s91, 0
      %p794 = por %p792, %p793
      %s796 = sadd.s32 %s795, 1
      %p799 = scmp.eq.s32.totalorder %s85, 1
      %p800 = scmp.ne.s32.totalorder %s795, %s797
      %p801 = scmp.eq.s32.totalorder %s85, 0
      %p802 = por %p800, %p801
      %p803 = scmp.ne.s32.totalorder %s795, %s797
      %p804 = scmp.eq.s32.totalorder %s90, 1
      %p805 = por %p803, %p804
      %p806 = scmp.ne.s32.totalorder %s797, %s798
      %p807 = scmp.eq.s32.totalorder %s90, 0
      %p808 = por %p806, %p807
      %p809 = scmp.ne.s32.totalorder %s797, %s798
      %p810 = scmp.eq.s32.totalorder %s91, 1
      %p811 = por %p809, %p810
      %p813 = scmp.ne.s32.totalorder %s798, %s812
      %p814 = scmp.eq.s32.totalorder %s91, 0
      %p815 = por %p813, %p814
      %s817 = sadd.s32 %s816, 1
      %p820 = scmp.eq.s32.totalorder %s85, 1
      %p821 = scmp.ne.s32.totalorder %s816, %s818
      %p822 = scmp.eq.s32.totalorder %s85, 0
      %p823 = por %p821, %p822
      %p824 = scmp.ne.s32.totalorder %s816, %s818
      %p825 = scmp.eq.s32.totalorder %s90, 1
      %p826 = por %p824, %p825
      %p827 = scmp.ne.s32.totalorder %s818, %s819
      %p828 = scmp.eq.s32.totalorder %s90, 0
      %p829 = por %p827, %p828
      %p830 = scmp.ne.s32.totalorder %s818, %s819
      %p831 = scmp.eq.s32.totalorder %s91, 1
      %p832 = por %p830, %p831
      %p834 = scmp.ne.s32.totalorder %s819, %s833
      %p835 = scmp.eq.s32.totalorder %s91, 0
      %p836 = por %p834, %p835
      %s838 = sadd.s32 %s837, 1
      %p841 = scmp.eq.s32.totalorder %s85, 1
      %p842 = scmp.ne.s32.totalorder %s837, %s839
      %p843 = scmp.eq.s32.totalorder %s85, 0
      %p844 = por %p842, %p843
      %p845 = scmp.ne.s32.totalorder %s837, %s839
      %p846 = scmp.eq.s32.totalorder %s90, 1
      %p847 = por %p845, %p846
      %p848 = scmp.ne.s32.totalorder %s839, %s840
      %p849 = scmp.eq.s32.totalorder %s90, 0
      %p850 = por %p848, %p849
      %p851 = scmp.ne.s32.totalorder %s839, %s840
      %p852 = scmp.eq.s32.totalorder %s91, 1
      %p853 = por %p851, %p852
      %p855 = scmp.ne.s32.totalorder %s840, %s854
      %p856 = scmp.eq.s32.totalorder %s91, 0
      %p857 = por %p855, %p856
      %s858 = ssub.s32 %s85, %s92
      %p859 = scmp.eq.s32.totalorder %s858, 0
      %s861 = sadd.s32 %s860, 1
      %s862 = scalar_select %p859, %s860, %s861
      %p865 = pneg %p859
      %p866 = scmp.eq.s32.totalorder %s85, 1
      %p867 = por %p865, %p866
      %p868 = scmp.ne.s32.totalorder %s860, %s863
      %p869 = scmp.eq.s32.totalorder %s85, 0
      %p870 = por %p868, %p869
      %p871 = scmp.ne.s32.totalorder %s860, %s863
      %p872 = scmp.eq.s32.totalorder %s90, 1
      %p873 = por %p871, %p872
      %p874 = scmp.ne.s32.totalorder %s863, %s864
      %p875 = scmp.eq.s32.totalorder %s90, 0
      %p876 = por %p874, %p875
      %p877 = scmp.ne.s32.totalorder %s863, %s864
      %p878 = scmp.eq.s32.totalorder %s91, 1
      %p879 = por %p877, %p878
      %p881 = scmp.ne.s32.totalorder %s864, %s880
      %p882 = scmp.eq.s32.totalorder %s91, 0
      %p883 = por %p881, %p882
      %p884 = scmp.le.s32.totalorder 1, %s85
      %p885 = scmp.lt.s32.totalorder %s85, 3
      %p886 = pnand %p884, %p885
      %p887 = pneg %p886
      // Predicated region
      $region9: #{full_transformer_vector_decoder.1} parent=5 // pred_check
        _
      $region10: #{full_transformer_vector_decoder.1} parent=5 // pred_check_branch
        %889 = sbr.rel (%p886) target = $region12
      $region11: #{full_transformer_vector_decoder.1} parent=5 // pred_region
        %s890 = ssub.s32 %s85, 1
        // Predicated region
        $region13: #{full_transformer_vector_decoder.1} parent=11 // pred_check
          %p891 = pneg %p262
        $region14: #{full_transformer_vector_decoder.1} parent=11 // pred_check_branch
          %893 = sbr.rel (%p891) target = $region16
        $region15: #{full_transformer_vector_decoder.1} parent=11 // pred_region
          %s895 = ssub.s32 128, 128
          %896 = vsyncadd [#allocation5], %s895
          %s897 = sshll.u32 [#allocation4], 4
          %s898 = int_to_ptr.vmem [resolvable:$true] %s897
          %903 = dma.hbm_to_vmem [thread:$0]  %s13, 128, %s898, [#allocation5], 64, 64, 4
        $region16: #{full_transformer_vector_decoder.1} parent=11 // pred_fallthru
          _
        // Predicated region
        $region17: #{full_transformer_vector_decoder.1} parent=11 // pred_check
          %p904 = pneg %p283
        $region18: #{full_transformer_vector_decoder.1} parent=11 // pred_check_branch
          %906 = sbr.rel (%p904) target = $region20
        $region19: #{full_transformer_vector_decoder.1} parent=11 // pred_region
          %s908 = ssub.s32 256, 256
          %909 = vsyncadd [#allocation5], %s908
          %s910 = sshll.u32 [#allocation6], 4
          %s911 = int_to_ptr.vmem [resolvable:$true] %s910
          %916 = dma.hbm_to_vmem [thread:$0]  %s15, 256, %s911, [#allocation5], 64, 64, 4
        $region20: #{full_transformer_vector_decoder.1} parent=11 // pred_fallthru
          _
        // Predicated region
        $region21: #{full_transformer_vector_decoder.1} parent=11 // pred_check
          %p917 = pneg %p304
        $region22: #{full_transformer_vector_decoder.1} parent=11 // pred_check_branch
          %919 = sbr.rel (%p917) target = $region24
        $region23: #{full_transformer_vector_decoder.1} parent=11 // pred_region
          %s921 = ssub.s32 16, 16
          %922 = vsyncadd [#allocation8], %s921
          %s924 = sshll.u32 [#allocation7], 4
          %s925 = int_to_ptr.vmem [resolvable:$true] %s924
          %927 = dma.hbm_to_vmem [thread:$0]  %s17, 16, %s925, [#allocation8]
        $region24: #{full_transformer_vector_decoder.1} parent=11 // pred_fallthru
          _
        // Predicated region
        $region25: #{full_transformer_vector_decoder.1} parent=11 // pred_check
          %p928 = pneg %p325
        $region26: #{full_transformer_vector_decoder.1} parent=11 // pred_check_branch
          %930 = sbr.rel (%p928) target = $region28
        $region27: #{full_transformer_vector_decoder.1} parent=11 // pred_region
          %s932 = ssub.s32 32, 32
          %933 = vsyncadd [#allocation8], %s932
          %s934 = sshll.u32 [#allocation9], 4
          %s935 = int_to_ptr.vmem [resolvable:$true] %s934
          %940 = dma.hbm_to_vmem [thread:$0]  %s19, 32, %s935, [#allocation8], 16, 16, 1
        $region28: #{full_transformer_vector_decoder.1} parent=11 // pred_fallthru
          _
        // Predicated region
        $region29: #{full_transformer_vector_decoder.1} parent=11 // pred_check
          %p941 = pneg %p346
        $region30: #{full_transformer_vector_decoder.1} parent=11 // pred_check_branch
          %943 = sbr.rel (%p941) target = $region32
        $region31: #{full_transformer_vector_decoder.1} parent=11 // pred_region
          %s945 = ssub.s32 32, 32
          %946 = vsyncadd [#allocation11], %s945
          %s947 = sshll.u32 [#allocation10], 4
          %s948 = int_to_ptr.vmem [resolvable:$true] %s947
          %953 = dma.hbm_to_vmem [thread:$0]  %s21, 32, %s948, [#allocation11], 16, 16, 1
        $region32: #{full_transformer_vector_decoder.1} parent=11 // pred_fallthru
          _
        // Predicated region
        $region33: #{full_transformer_vector_decoder.1} parent=11 // pred_check
          %p954 = pneg %p367
        $region34: #{full_transformer_vector_decoder.1} parent=11 // pred_check_branch
          %956 = sbr.rel (%p954) target = $region36
        $region35: #{full_transformer_vector_decoder.1} parent=11 // pred_region
          _
        $region36: #{full_transformer_vector_decoder.1} parent=11 // pred_fallthru
          _
        // Predicated region
        $region37: #{full_transformer_vector_decoder.1} parent=11 // pred_check
          %p957 = pneg %p388
        $region38: #{full_transformer_vector_decoder.1} parent=11 // pred_check_branch
          %959 = sbr.rel (%p957) target = $region40
        $region39: #{full_transformer_vector_decoder.1} parent=11 // pred_region
          %s961 = ssub.s32 64, 64
          %962 = vsyncadd [#allocation11], %s961
          %s963 = sshll.u32 [#allocation12], 4
          %s964 = int_to_ptr.vmem [resolvable:$true] %s963
          %969 = dma.hbm_to_vmem [thread:$0]  %s25, 64, %s964, [#allocation11], 32, 32, 2
        $region40: #{full_transformer_vector_decoder.1} parent=11 // pred_fallthru
          _
        // Predicated region
        $region41: #{full_transformer_vector_decoder.1} parent=11 // pred_check
          %p970 = pneg %p409
        $region42: #{full_transformer_vector_decoder.1} parent=11 // pred_check_branch
          %972 = sbr.rel (%p970) target = $region44
        $region43: #{full_transformer_vector_decoder.1} parent=11 // pred_region
          %s974 = ssub.s32 32, 32
          %975 = vsyncadd [#allocation14], %s974
          %s976 = sshll.u32 [#allocation13], 4
          %s977 = int_to_ptr.vmem [resolvable:$true] %s976
          %982 = dma.hbm_to_vmem [thread:$0]  %s27, 32, %s977, [#allocation14], 16, 16, 1
        $region44: #{full_transformer_vector_decoder.1} parent=11 // pred_fallthru
          _
        // Predicated region
        $region45: #{full_transformer_vector_decoder.1} parent=11 // pred_check
          %p983 = pneg %p430
        $region46: #{full_transformer_vector_decoder.1} parent=11 // pred_check_branch
          %985 = sbr.rel (%p983) target = $region48
        $region47: #{full_transformer_vector_decoder.1} parent=11 // pred_region
          _
        $region48: #{full_transformer_vector_decoder.1} parent=11 // pred_fallthru
          _
        // Predicated region
        $region49: #{full_transformer_vector_decoder.1} parent=11 // pred_check
          %p986 = pneg %p451
        $region50: #{full_transformer_vector_decoder.1} parent=11 // pred_check_branch
          %988 = sbr.rel (%p986) target = $region52
        $region51: #{full_transformer_vector_decoder.1} parent=11 // pred_region
          _
        $region52: #{full_transformer_vector_decoder.1} parent=11 // pred_fallthru
          _
        // Predicated region
        $region53: #{full_transformer_vector_decoder.1} parent=11 // pred_check
          %p989 = pneg %p472
        $region54: #{full_transformer_vector_decoder.1} parent=11 // pred_check_branch
          %991 = sbr.rel (%p989) target = $region56
        $region55: #{full_transformer_vector_decoder.1} parent=11 // pred_region
          %s993 = ssub.s32 32, 32
          %994 = vsyncadd [#allocation14], %s993
          %s995 = sshll.u32 [#allocation15], 4
          %s996 = int_to_ptr.vmem [resolvable:$true] %s995
          %1001 = dma.hbm_to_vmem [thread:$0]  %s33, 32, %s996, [#allocation14], 16, 16, 1
        $region56: #{full_transformer_vector_decoder.1} parent=11 // pred_fallthru
          _
        // Predicated region
        $region57: #{full_transformer_vector_decoder.1} parent=11 // pred_check
          %p1002 = pneg %p493
        $region58: #{full_transformer_vector_decoder.1} parent=11 // pred_check_branch
          %1004 = sbr.rel (%p1002) target = $region60
        $region59: #{full_transformer_vector_decoder.1} parent=11 // pred_region
          %s1006 = ssub.s32 32, 32
          %1007 = vsyncadd [#allocation17], %s1006
          %s1008 = sshll.u32 [#allocation16], 4
          %s1009 = int_to_ptr.vmem [resolvable:$true] %s1008
          %1014 = dma.hbm_to_vmem [thread:$0]  %s35, 32, %s1009, [#allocation17], 16, 16, 1
        $region60: #{full_transformer_vector_decoder.1} parent=11 // pred_fallthru
          _
        // Predicated region
        $region61: #{full_transformer_vector_decoder.1} parent=11 // pred_check
          %p1015 = pneg %p514
        $region62: #{full_transformer_vector_decoder.1} parent=11 // pred_check_branch
          %1017 = sbr.rel (%p1015) target = $region64
        $region63: #{full_transformer_vector_decoder.1} parent=11 // pred_region
          %s1019 = ssub.s32 32, 32
          %1020 = vsyncadd [#allocation17], %s1019
          %s1021 = sshll.u32 [#allocation18], 4
          %s1022 = int_to_ptr.vmem [resolvable:$true] %s1021
          %1027 = dma.hbm_to_vmem [thread:$0]  %s37, 32, %s1022, [#allocation17], 16, 16, 1
        $region64: #{full_transformer_vector_decoder.1} parent=11 // pred_fallthru
          _
        // Predicated region
        $region65: #{full_transformer_vector_decoder.1} parent=11 // pred_check
          %p1028 = pneg %p535
        $region66: #{full_transformer_vector_decoder.1} parent=11 // pred_check_branch
          %1030 = sbr.rel (%p1028) target = $region68
        $region67: #{full_transformer_vector_decoder.1} parent=11 // pred_region
          _
        $region68: #{full_transformer_vector_decoder.1} parent=11 // pred_fallthru
          _
        // Predicated region
        $region69: #{full_transformer_vector_decoder.1} parent=11 // pred_check
          %p1031 = pneg %p556
        $region70: #{full_transformer_vector_decoder.1} parent=11 // pred_check_branch
          %1033 = sbr.rel (%p1031) target = $region72
        $region71: #{full_transformer_vector_decoder.1} parent=11 // pred_region
          _
        $region72: #{full_transformer_vector_decoder.1} parent=11 // pred_fallthru
          _
        // Predicated region
        $region73: #{full_transformer_vector_decoder.1} parent=11 // pred_check
          %p1034 = pneg %p577
        $region74: #{full_transformer_vector_decoder.1} parent=11 // pred_check_branch
          %1036 = sbr.rel (%p1034) target = $region76
        $region75: #{full_transformer_vector_decoder.1} parent=11 // pred_region
          _
        $region76: #{full_transformer_vector_decoder.1} parent=11 // pred_fallthru
          _
        // Predicated region
        $region77: #{full_transformer_vector_decoder.1} parent=11 // pred_check
          %p1037 = pneg %p598
        $region78: #{full_transformer_vector_decoder.1} parent=11 // pred_check_branch
          %1039 = sbr.rel (%p1037) target = $region80
        $region79: #{full_transformer_vector_decoder.1} parent=11 // pred_region
          _
        $region80: #{full_transformer_vector_decoder.1} parent=11 // pred_fallthru
          _
        // Predicated region
        $region81: #{full_transformer_vector_decoder.1} parent=11 // pred_check
          %p1040 = pneg %p619
        $region82: #{full_transformer_vector_decoder.1} parent=11 // pred_check_branch
          %1042 = sbr.rel (%p1040) target = $region84
        $region83: #{full_transformer_vector_decoder.1} parent=11 // pred_region
          _
        $region84: #{full_transformer_vector_decoder.1} parent=11 // pred_fallthru
          _
        // Predicated region
        $region85: #{full_transformer_vector_decoder.1} parent=11 // pred_check
          %p1043 = pneg %p640
        $region86: #{full_transformer_vector_decoder.1} parent=11 // pred_check_branch
          %1045 = sbr.rel (%p1043) target = $region88
        $region87: #{full_transformer_vector_decoder.1} parent=11 // pred_region
          _
        $region88: #{full_transformer_vector_decoder.1} parent=11 // pred_fallthru
          _
        // Predicated region
        $region89: #{full_transformer_vector_decoder.1} parent=11 // pred_check
          %p1046 = pneg %p661
        $region90: #{full_transformer_vector_decoder.1} parent=11 // pred_check_branch
          %1048 = sbr.rel (%p1046) target = $region92
        $region91: #{full_transformer_vector_decoder.1} parent=11 // pred_region
          _
        $region92: #{full_transformer_vector_decoder.1} parent=11 // pred_fallthru
          _
        // Predicated region
        $region93: #{full_transformer_vector_decoder.1} parent=11 // pred_check
          %p1049 = pneg %p682
        $region94: #{full_transformer_vector_decoder.1} parent=11 // pred_check_branch
          %1051 = sbr.rel (%p1049) target = $region96
        $region95: #{full_transformer_vector_decoder.1} parent=11 // pred_region
          _
        $region96: #{full_transformer_vector_decoder.1} parent=11 // pred_fallthru
          _
        // Predicated region
        $region97: #{full_transformer_vector_decoder.1} parent=11 // pred_check
          %p1052 = pneg %p703
        $region98: #{full_transformer_vector_decoder.1} parent=11 // pred_check_branch
          %1054 = sbr.rel (%p1052) target = $region100
        $region99: #{full_transformer_vector_decoder.1} parent=11 // pred_region
          _
        $region100: #{full_transformer_vector_decoder.1} parent=11 // pred_fallthru
          _
        // Predicated region
        $region101: #{full_transformer_vector_decoder.1} parent=11 // pred_check
          %p1055 = pneg %p724
        $region102: #{full_transformer_vector_decoder.1} parent=11 // pred_check_branch
          %1057 = sbr.rel (%p1055) target = $region104
        $region103: #{full_transformer_vector_decoder.1} parent=11 // pred_region
          _
        $region104: #{full_transformer_vector_decoder.1} parent=11 // pred_fallthru
          _
        // Predicated region
        $region105: #{full_transformer_vector_decoder.1} parent=11 // pred_check
          %p1058 = pneg %p745
        $region106: #{full_transformer_vector_decoder.1} parent=11 // pred_check_branch
          %1060 = sbr.rel (%p1058) target = $region108
        $region107: #{full_transformer_vector_decoder.1} parent=11 // pred_region
          _
        $region108: #{full_transformer_vector_decoder.1} parent=11 // pred_fallthru
          _
        // Predicated region
        $region109: #{full_transformer_vector_decoder.1} parent=11 // pred_check
          %p1061 = pneg %p766
        $region110: #{full_transformer_vector_decoder.1} parent=11 // pred_check_branch
          %1063 = sbr.rel (%p1061) target = $region112
        $region111: #{full_transformer_vector_decoder.1} parent=11 // pred_region
          _
        $region112: #{full_transformer_vector_decoder.1} parent=11 // pred_fallthru
          _
        // Predicated region
        $region113: #{full_transformer_vector_decoder.1} parent=11 // pred_check
          %p1064 = pneg %p787
        $region114: #{full_transformer_vector_decoder.1} parent=11 // pred_check_branch
          %1066 = sbr.rel (%p1064) target = $region116
        $region115: #{full_transformer_vector_decoder.1} parent=11 // pred_region
          _
        $region116: #{full_transformer_vector_decoder.1} parent=11 // pred_fallthru
          _
        // Predicated region
        $region117: #{full_transformer_vector_decoder.1} parent=11 // pred_check
          %p1067 = pneg %p808
        $region118: #{full_transformer_vector_decoder.1} parent=11 // pred_check_branch
          %1069 = sbr.rel (%p1067) target = $region120
        $region119: #{full_transformer_vector_decoder.1} parent=11 // pred_region
          _
        $region120: #{full_transformer_vector_decoder.1} parent=11 // pred_fallthru
          _
        // Predicated region
        $region121: #{full_transformer_vector_decoder.1} parent=11 // pred_check
          %p1070 = pneg %p829
        $region122: #{full_transformer_vector_decoder.1} parent=11 // pred_check_branch
          %1072 = sbr.rel (%p1070) target = $region124
        $region123: #{full_transformer_vector_decoder.1} parent=11 // pred_region
          _
        $region124: #{full_transformer_vector_decoder.1} parent=11 // pred_fallthru
          _
        // Predicated region
        $region125: #{full_transformer_vector_decoder.1} parent=11 // pred_check
          %p1073 = pneg %p850
        $region126: #{full_transformer_vector_decoder.1} parent=11 // pred_check_branch
          %1075 = sbr.rel (%p1073) target = $region128
        $region127: #{full_transformer_vector_decoder.1} parent=11 // pred_region
          _
        $region128: #{full_transformer_vector_decoder.1} parent=11 // pred_fallthru
          _
      $region12: #{full_transformer_vector_decoder.1} parent=5 // pred_fallthru
        _
      %p1076 = scmp.lt.s32.totalorder %s85, 2
      // Predicated region
      $region129: #{full_transformer_vector_decoder.1} parent=5 // pred_check
        %p1077 = pneg %p1076
      $region130: #{full_transformer_vector_decoder.1} parent=5 // pred_check_branch
        %1079 = sbr.rel (%p1077) target = $region132
      $region131: #{full_transformer_vector_decoder.1} parent=5 // pred_region
        // Predicated region
        $region133: #{full_transformer_vector_decoder.1} parent=131 // pred_check
          %p1080 = pneg %p105
        $region134: #{full_transformer_vector_decoder.1} parent=131 // pred_check_branch
          %1082 = sbr.rel (%p1080) target = $region136
        $region135: #{full_transformer_vector_decoder.1} parent=131 // pred_region
          %p1083 = scmp.lt.s32.totalorder %s85, 1
          %s1084 = scalar_select %p1083, %s85, 1
          %s1085 = smul.addr %s1084, 8
          %s1086 = scalar_lea.vmem %s1, %s1085
        $region136: #{full_transformer_vector_decoder.1} parent=131 // pred_fallthru
          _
        // Predicated region
        $region137: #{full_transformer_vector_decoder.1} parent=131 // pred_check
          %p1087 = pneg %p131
        $region138: #{full_transformer_vector_decoder.1} parent=131 // pred_check_branch
          %1089 = sbr.rel (%p1087) target = $region140
        $region139: #{full_transformer_vector_decoder.1} parent=131 // pred_region
          %p1090 = scmp.lt.s32.totalorder %s85, 1
          %s1091 = scalar_select %p1090, %s85, 1
          %s1092 = smul.addr %s1091, 8
          %s1093 = scalar_lea.vmem %s3, %s1092
        $region140: #{full_transformer_vector_decoder.1} parent=131 // pred_fallthru
          _
        // Predicated region
        $region141: #{full_transformer_vector_decoder.1} parent=131 // pred_check
          %p1094 = pneg %p157
        $region142: #{full_transformer_vector_decoder.1} parent=131 // pred_check_branch
          %1096 = sbr.rel (%p1094) target = $region144
        $region143: #{full_transformer_vector_decoder.1} parent=131 // pred_region
          %s1097 = sand.u32 %s147, 1
          %s1098 = scalar_lea.sflag [#allocation3], %s1097
          %s1099 = sand.u32 %s147, 1
          %s1100 = scalar_lea.vmem [#allocation2], %s1099
          %s1102 = ssub.s32 16, 16
          %1103 = vsyncadd %s1098, %s1102
          %s1104 = smul.addr %s85, 16
          %s1105 = scalar_lea.hbm %s5, %s1104
          %s1107 = sshll.u32 %s1100, 4
          %s1108 = int_to_ptr.vmem [resolvable:$true] %s1107
          %1110 = dma.hbm_to_vmem [thread:$0]  %s1105, 16, %s1108, %s1098
        $region144: #{full_transformer_vector_decoder.1} parent=131 // pred_fallthru
          _
        // Predicated region
        $region145: #{full_transformer_vector_decoder.1} parent=131 // pred_check
          %p1111 = pneg %p183
        $region146: #{full_transformer_vector_decoder.1} parent=131 // pred_check_branch
          %1113 = sbr.rel (%p1111) target = $region148
        $region147: #{full_transformer_vector_decoder.1} parent=131 // pred_region
          %p1114 = scmp.lt.s32.totalorder %s85, 1
          %s1115 = scalar_select %p1114, %s85, 1
          %s1116 = scalar_lea.vmem %s7, %s1115
        $region148: #{full_transformer_vector_decoder.1} parent=131 // pred_fallthru
          _
        // Predicated region
        $region149: #{full_transformer_vector_decoder.1} parent=131 // pred_check
          %p1117 = pneg %p209
        $region150: #{full_transformer_vector_decoder.1} parent=131 // pred_check_branch
          %1119 = sbr.rel (%p1117) target = $region152
        $region151: #{full_transformer_vector_decoder.1} parent=131 // pred_region
          %p1120 = scmp.lt.s32.totalorder %s85, 1
          %s1121 = scalar_select %p1120, %s85, 1
          %s1122 = smul.addr %s1121, 2
          %s1123 = scalar_lea.vmem %s9, %s1122
        $region152: #{full_transformer_vector_decoder.1} parent=131 // pred_fallthru
          _
        // Predicated region
        $region153: #{full_transformer_vector_decoder.1} parent=131 // pred_check
          %p1124 = pneg %p235
        $region154: #{full_transformer_vector_decoder.1} parent=131 // pred_check_branch
          %1126 = sbr.rel (%p1124) target = $region156
        $region155: #{full_transformer_vector_decoder.1} parent=131 // pred_region
          %p1127 = scmp.lt.s32.totalorder %s85, 1
          %s1128 = scalar_select %p1127, %s85, 1
          %s1129 = scalar_lea.vmem %s11, %s1128
        $region156: #{full_transformer_vector_decoder.1} parent=131 // pred_fallthru
          _
      $region132: #{full_transformer_vector_decoder.1} parent=5 // pred_fallthru
        _
      %p1130 = scmp.le.s32.totalorder 1, %s85
      %p1131 = scmp.lt.s32.totalorder %s85, 3
      %p1132 = pnand %p1130, %p1131
      %p1133 = pneg %p1132
      // Predicated region
      $region157: #{full_transformer_vector_decoder.1} parent=5 // pred_check
        _
      $region158: #{full_transformer_vector_decoder.1} parent=5 // pred_check_branch
        %1135 = sbr.rel (%p1132) target = $region160
      $region159: #{full_transformer_vector_decoder.1} parent=5 // pred_region
        %s1136 = ssub.s32 %s85, 1
        %s1137 = sand.u32 %s150, 1
        %s1138 = scalar_lea.sflag [#allocation3], %s1137
        %s1139 = sand.u32 %s150, 1
        %s1140 = scalar_lea.vmem [#allocation2], %s1139
        // Predicated region
        $region161: #{full_transformer_vector_decoder.1} parent=159 // pred_check
          %p1141 = pneg %p163
        $region162: #{full_transformer_vector_decoder.1} parent=159 // pred_check_branch
          %1143 = sbr.rel (%p1141) target = $region164
        $region163: #{full_transformer_vector_decoder.1} parent=159 // pred_region
          %1144 = dma.done %s1138, 16
        $region164: #{full_transformer_vector_decoder.1} parent=159 // pred_fallthru
          _
        // Predicated region
        $region165: #{full_transformer_vector_decoder.1} parent=159 // pred_check
          %p1145 = pneg %p262
        $region166: #{full_transformer_vector_decoder.1} parent=159 // pred_check_branch
          %1147 = sbr.rel (%p1145) target = $region168
        $region167: #{full_transformer_vector_decoder.1} parent=159 // pred_region
          %1148 = dma.done [#allocation5], 128
        $region168: #{full_transformer_vector_decoder.1} parent=159 // pred_fallthru
          _
        // Predicated region
        $region169: #{full_transformer_vector_decoder.1} parent=159 // pred_check
          %p1149 = pneg %p283
        $region170: #{full_transformer_vector_decoder.1} parent=159 // pred_check_branch
          %1151 = sbr.rel (%p1149) target = $region172
        $region171: #{full_transformer_vector_decoder.1} parent=159 // pred_region
          %1152 = dma.done [#allocation5], 256
        $region172: #{full_transformer_vector_decoder.1} parent=159 // pred_fallthru
          _
        // Predicated region
        $region173: #{full_transformer_vector_decoder.1} parent=159 // pred_check
          %p1153 = pneg %p304
        $region174: #{full_transformer_vector_decoder.1} parent=159 // pred_check_branch
          %1155 = sbr.rel (%p1153) target = $region176
        $region175: #{full_transformer_vector_decoder.1} parent=159 // pred_region
          %1156 = dma.done [#allocation8], 16
        $region176: #{full_transformer_vector_decoder.1} parent=159 // pred_fallthru
          _
        // Predicated region
        $region177: #{full_transformer_vector_decoder.1} parent=159 // pred_check
          %p1157 = pneg %p325
        $region178: #{full_transformer_vector_decoder.1} parent=159 // pred_check_branch
          %1159 = sbr.rel (%p1157) target = $region180
        $region179: #{full_transformer_vector_decoder.1} parent=159 // pred_region
          %1160 = dma.done [#allocation8], 32
        $region180: #{full_transformer_vector_decoder.1} parent=159 // pred_fallthru
          _
        // Predicated region
        $region181: #{full_transformer_vector_decoder.1} parent=159 // pred_check
          %p1161 = pneg %p346
        $region182: #{full_transformer_vector_decoder.1} parent=159 // pred_check_branch
          %1163 = sbr.rel (%p1161) target = $region184
        $region183: #{full_transformer_vector_decoder.1} parent=159 // pred_region
          %1164 = dma.done [#allocation11], 32
        $region184: #{full_transformer_vector_decoder.1} parent=159 // pred_fallthru
          _
        // Predicated region
        $region185: #{full_transformer_vector_decoder.1} parent=159 // pred_check
          %p1165 = pneg %p388
        $region186: #{full_transformer_vector_decoder.1} parent=159 // pred_check_branch
          %1167 = sbr.rel (%p1165) target = $region188
        $region187: #{full_transformer_vector_decoder.1} parent=159 // pred_region
          %1168 = dma.done [#allocation11], 64
        $region188: #{full_transformer_vector_decoder.1} parent=159 // pred_fallthru
          _
        // Predicated region
        $region189: #{full_transformer_vector_decoder.1} parent=159 // pred_check
          %p1169 = pneg %p409
        $region190: #{full_transformer_vector_decoder.1} parent=159 // pred_check_branch
          %1171 = sbr.rel (%p1169) target = $region192
        $region191: #{full_transformer_vector_decoder.1} parent=159 // pred_region
          %1172 = dma.done [#allocation14], 32
        $region192: #{full_transformer_vector_decoder.1} parent=159 // pred_fallthru
          _
        // Predicated region
        $region193: #{full_transformer_vector_decoder.1} parent=159 // pred_check
          %p1173 = pneg %p472
        $region194: #{full_transformer_vector_decoder.1} parent=159 // pred_check_branch
          %1175 = sbr.rel (%p1173) target = $region196
        $region195: #{full_transformer_vector_decoder.1} parent=159 // pred_region
          %1176 = dma.done [#allocation14], 32
        $region196: #{full_transformer_vector_decoder.1} parent=159 // pred_fallthru
          _
        // Predicated region
        $region197: #{full_transformer_vector_decoder.1} parent=159 // pred_check
          %p1177 = pneg %p493
        $region198: #{full_transformer_vector_decoder.1} parent=159 // pred_check_branch
          %1179 = sbr.rel (%p1177) target = $region200
        $region199: #{full_transformer_vector_decoder.1} parent=159 // pred_region
          %1180 = dma.done [#allocation17], 32
        $region200: #{full_transformer_vector_decoder.1} parent=159 // pred_fallthru
          _
        // Predicated region
        $region201: #{full_transformer_vector_decoder.1} parent=159 // pred_check
          %p1181 = pneg %p514
        $region202: #{full_transformer_vector_decoder.1} parent=159 // pred_check_branch
          %1183 = sbr.rel (%p1181) target = $region204
        $region203: #{full_transformer_vector_decoder.1} parent=159 // pred_region
          %1184 = dma.done [#allocation17], 32
        $region204: #{full_transformer_vector_decoder.1} parent=159 // pred_fallthru
          _
        %p1185 = scmp.lt.s32.totalorder %s90, 1
        %s1186 = scalar_select %p1185, %s90, 1
        %s1187 = smul.addr %s1186, 8
        %s1188 = scalar_lea.vmem %s1, %s1187
        %p1189 = pneg %p111
        %p1190 = pneg %p108
        %p1191 = scmp.lt.s32.totalorder %s90, 1
        %s1192 = scalar_select %p1191, %s90, 1
        %s1193 = smul.addr %s1192, 8
        %s1194 = scalar_lea.vmem %s3, %s1193
        %p1195 = pneg %p137
        %p1196 = pneg %p134
        %s1197 = sand.u32 %s150, 1
        %s1198 = scalar_lea.sflag [#allocation3], %s1197
        %s1199 = sand.u32 %s150, 1
        %s1200 = scalar_lea.vmem [#allocation2], %s1199
        %p1201 = pneg %p163
        %p1202 = pneg %p160
        %p1203 = scmp.lt.s32.totalorder %s90, 1
        %s1204 = scalar_select %p1203, %s90, 1
        %s1205 = scalar_lea.vmem %s7, %s1204
        %p1206 = pneg %p189
        %p1207 = pneg %p186
        %p1208 = scmp.lt.s32.totalorder %s90, 1
        %s1209 = scalar_select %p1208, %s90, 1
        %s1210 = smul.addr %s1209, 2
        %s1211 = scalar_lea.vmem %s9, %s1210
        %p1212 = pneg %p215
        %p1213 = pneg %p212
        %p1214 = scmp.lt.s32.totalorder %s90, 1
        %s1215 = scalar_select %p1214, %s90, 1
        %s1216 = scalar_lea.vmem %s11, %s1215
        %p1217 = pneg %p241
        %p1218 = pneg %p238
        %p1219 = pneg %p262
        %p1220 = pneg %p259
        %p1221 = pneg %p283
        %p1222 = pneg %p280
        %p1223 = pneg %p304
        %p1224 = pneg %p301
        %p1225 = pneg %p325
        %p1226 = pneg %p322
        %p1227 = pneg %p346
        %p1228 = pneg %p343
        %p1229 = pneg %p367
        %p1230 = pneg %p364
        %p1231 = pneg %p388
        %p1232 = pneg %p385
        %p1233 = pneg %p409
        %p1234 = pneg %p406
        %p1235 = pneg %p430
        %p1236 = pneg %p427
        %p1237 = pneg %p451
        %p1238 = pneg %p448
        %p1239 = pneg %p472
        %p1240 = pneg %p469
        %p1241 = pneg %p493
        %p1242 = pneg %p490
        %p1243 = pneg %p514
        %p1244 = pneg %p511
        %p1245 = pneg %p535
        %p1246 = pneg %p532
        %p1247 = pneg %p556
        %p1248 = pneg %p553
        %p1249 = pneg %p577
        %p1250 = pneg %p574
        %p1251 = pneg %p598
        %p1252 = pneg %p595
        %p1253 = pneg %p619
        %p1254 = pneg %p616
        %p1255 = pneg %p640
        %p1256 = pneg %p637
        %p1257 = pneg %p661
        %p1258 = pneg %p658
        %p1259 = pneg %p682
        %p1260 = pneg %p679
        %p1261 = pneg %p703
        %p1262 = pneg %p700
        %p1263 = pneg %p724
        %p1264 = pneg %p721
        %p1265 = pneg %p745
        %p1266 = pneg %p742
        %p1267 = pneg %p766
        %p1268 = pneg %p763
        %p1269 = pneg %p787
        %p1270 = pneg %p784
        %p1271 = pneg %p808
        %p1272 = pneg %p805
        %p1273 = pneg %p829
        %p1274 = pneg %p826
        %p1275 = pneg %p850
        %p1276 = pneg %p847
        %p1277 = pneg %p876
        %p1278 = pneg %p873
        %p1279 = scmp.lt.s32.totalorder %s90, 1
        %s1280 = scalar_select %p1279, %s90, 1
        %s1281 = smul.addr %s1280, 8
        %s1282 = scalar_lea.vmem %s71, %s1281
        %p1283 = scmp.lt.s32.totalorder %s90, 1
        %s1284 = scalar_select %p1283, %s90, 1
        %s1285 = smul.addr %s1284, 8
        %s1286 = scalar_lea.vmem %s1, %s1285
        %p1287 = scmp.lt.s32.totalorder %s90, 1
        %s1288 = scalar_select %p1287, %s90, 1
        %s1289 = smul.addr %s1288, 8
        %s1290 = scalar_lea.vmem %s3, %s1289
        %p1291 = scmp.lt.s32.totalorder %s90, 1
        %s1292 = scalar_select %p1291, %s90, 1
        %s1293 = scalar_lea.vmem %s7, %s1292
        %p1294 = scmp.lt.s32.totalorder %s90, 1
        %s1295 = scalar_select %p1294, %s90, 1
        %s1296 = smul.addr %s1295, 2
        %s1297 = scalar_lea.vmem %s9, %s1296
        %p1298 = scmp.lt.s32.totalorder %s90, 1
        %s1299 = scalar_select %p1298, %s90, 1
        %s1300 = scalar_lea.vmem %s11, %s1299
        %p1301 = scmp.lt.s32.totalorder %s90, 1
        %s1302 = scalar_select %p1301, %s90, 1
        %s1303 = smul.addr %s1302, 8
        %s1304 = scalar_lea.vmem %s71, %s1303
        %v1306 = vld [vmem:[%s1140] sm:$0x1]
        %v1307 = vld [vmem:[#allocation4] sm:$0xf]
        %v1308 = vld [vmem:[#allocation4 + $0x4] sm:$0x1]
        %v1309 = vpack.c.bf16 %v1306, %v1306
        %v1310 = vld [vmem:[%s1293] sm:$0x1]
        %v1313 = vunpack.c.l.b16 %v1307
        %v1314 = vunpack.c.l.b16 %v1308
        %v1315 = vpack.c.b16 %v1314, %v1313
        %vm1316 = vcmask 80896
        %v1318 = vsel %vm1316, %v1309, 0
        %vm1320 = vcmask 1044480
        %v1322 = vsel %vm1320, %v1315, 0
        %1324 = vmatprep.subr.bf16.mxu0 0
        %1325 = vmatpush1.bf16.msra.mxu0 %v1322
        %1326 = vmatprep.subr.bf16.mxu0 0
        %1327 = vmatpush1.bf16.msra.mxu0 0
        %1328 = vmatprep.subr.bf16.mxu0 0
        %1329 = vmatpush1.bf16.msra.mxu0 0
        %1330 = vmatprep.subr.bf16.mxu0 0
        %1331 = vmatpush1.bf16.msra.mxu0 0
        %1332 = vmatprep.subr.bf16.mxu0 0
        %1333 = vmatpush1.bf16.msra.mxu0 0
        %1334 = vmatprep.subr.bf16.mxu0 0
        %1335 = vmatpush1.bf16.msra.mxu0 0
        %1336 = vmatprep.subr.bf16.mxu0 0
        %1337 = vmatpush1.bf16.msra.mxu0 0
        %1338 = vmatprep.subr.bf16.mxu0 0
        %1339 = vmatpush1.bf16.msra.mxu0 0
        %1340 = vmatprep.subr.bf16.mxu0 0
        %1341 = vmatpush1.bf16.msra.mxu0 0
        %1342 = vmatprep.subr.bf16.mxu0 0
        %1343 = vmatpush1.bf16.msra.mxu0 0
        %1344 = vmatprep.subr.bf16.mxu0 0
        %1345 = vmatpush1.bf16.msra.mxu0 0
        %1346 = vmatprep.subr.bf16.mxu0 0
        %1347 = vmatpush1.bf16.msra.mxu0 0
        %1348 = vmatprep.subr.bf16.mxu0 0
        %1349 = vmatpush1.bf16.msra.mxu0 0
        %1350 = vmatprep.subr.bf16.mxu0 0
        %1351 = vmatpush1.bf16.msra.mxu0 0
        %1352 = vmatprep.subr.bf16.mxu0 0
        %1353 = vmatpush1.bf16.msra.mxu0 0
        %1354 = vmatprep.subr.bf16.mxu0 0
        %1355 = vmatpush1.bf16.msra.mxu0 0
        %1356 = vmatprep.mubr.bf16.mxu0 0
        %1357 = vmatmul.mubr.bf16.gmra.mrb[0].mxu0 %v1318
        %v1358 = vpop.f32.mrb[0].mxu0
        %v1359 = vadd.f32 %v1310, %v1358
        %v1360 = vpop.f32.mrb[0].mxu0
        %v1361 = vpop.f32.mrb[0].mxu0
        %v1362 = vpop.f32.mrb[0].mxu0
        %1363 = vdwg.mxu0
        %v1364 = vmul.f32 %v1359, 0.1
        %v1365 = vmax.f32 %v1359, %v1364
        %v1366 = vld [vmem:[#allocation6] sm:$0xf]
        %v1367 = vld [vmem:[#allocation6 + $0x4] sm:$0xf]
        %v1368 = vld [vmem:[#allocation6 + $0x8] sm:$0xf]
        %v1369 = vld [vmem:[#allocation6 + $0xc] sm:$0xf]
        %v1370 = vpack.c.bf16 %v1365, %v1365
        %v1371 = vld [vmem:[#allocation7] sm:$0x1]
        %v1376 = vunpack.c.l.b16 %v1366
        %v1377 = vunpack.c.l.b16 %v1367
        %v1378 = vunpack.c.l.b16 %v1368
        %v1379 = vunpack.c.l.b16 %v1369
        %v1380 = vpack.c.b16 %v1377, %v1376
        %v1381 = vpack.c.b16 %v1379, %v1378
        %vm1384 = vcmask 261120
        %v1386 = vsel %vm1384, %v1370, 0
        %1388 = vmatprep.subr.bf16.mxu0 0
        %1389 = vmatpush1.bf16.msra.mxu0 %v1380
        %1390 = vmatprep.subr.bf16.mxu0 0
        %1391 = vmatpush1.bf16.msra.mxu0 %v1381
        %1392 = vmatprep.subr.bf16.mxu0 0
        %1393 = vmatpush1.bf16.msra.mxu0 0
        %1394 = vmatprep.subr.bf16.mxu0 0
        %1395 = vmatpush1.bf16.msra.mxu0 0
        %1396 = vmatprep.subr.bf16.mxu0 0
        %1397 = vmatpush1.bf16.msra.mxu0 0
        %1398 = vmatprep.subr.bf16.mxu0 0
        %1399 = vmatpush1.bf16.msra.mxu0 0
        %1400 = vmatprep.subr.bf16.mxu0 0
        %1401 = vmatpush1.bf16.msra.mxu0 0
        %1402 = vmatprep.subr.bf16.mxu0 0
        %1403 = vmatpush1.bf16.msra.mxu0 0
        %1404 = vmatprep.subr.bf16.mxu0 0
        %1405 = vmatpush1.bf16.msra.mxu0 0
        %1406 = vmatprep.subr.bf16.mxu0 0
        %1407 = vmatpush1.bf16.msra.mxu0 0
        %1408 = vmatprep.subr.bf16.mxu0 0
        %1409 = vmatpush1.bf16.msra.mxu0 0
        %1410 = vmatprep.subr.bf16.mxu0 0
        %1411 = vmatpush1.bf16.msra.mxu0 0
        %1412 = vmatprep.subr.bf16.mxu0 0
        %1413 = vmatpush1.bf16.msra.mxu0 0
        %1414 = vmatprep.subr.bf16.mxu0 0
        %1415 = vmatpush1.bf16.msra.mxu0 0
        %1416 = vmatprep.subr.bf16.mxu0 0
        %1417 = vmatpush1.bf16.msra.mxu0 0
        %1418 = vmatprep.subr.bf16.mxu0 0
        %1419 = vmatpush1.bf16.msra.mxu0 0
        %1420 = vmatprep.mubr.bf16.mxu0 0
        %1421 = vmatmul.mubr.bf16.gmra.mrb[0].mxu0 %v1386
        %v1422 = vpop.f32.mrb[0].mxu0
        %v1423 = vadd.f32 %v1371, %v1422
        %v1424 = vpop.f32.mrb[0].mxu0
        %v1425 = vpop.f32.mrb[0].mxu0
        %v1426 = vpop.f32.mrb[0].mxu0
        %1427 = vdwg.mxu0
        %v1428 = vld [vmem:[%s1290] sm:$0xff]
        %v1429 = vld [vmem:[%s1286] sm:$0xff]
        %1431 = vset.pattern.permute.xlu0 0
        %1432 = vperm.xlu0 %1431, %v1428
        %v1433 = vpop.permute.xlu0 %1432
        %v1435 = vmul.f32 %v1429, %v1433
        %v1436 = vld [vmem:[%s1297] sm:$0x3]
        %v1437 = vld [vmem:[#allocation9] sm:$0x1]
        %v1438 = vld [vmem:[#allocation10] sm:$0x1]
        %vm1439 = vcmask 523264
        %v1440 = vsel %vm1439, %v1435, 0.0
        %1441 = vadd.xlane.f32.xlu0 %v1440
        %v1442 = vpop.xlane.xlu0 %1441
        %v1443 = vrcp.pop 64.0
        %v1444 = vmul.f32 %v1442, %v1443
        %v1445 = vsub.f32 %v1435, %v1444
        %v1446 = vmul.f32 %v1445, %v1445
        %v1447 = vsel %vm1439, %v1446, 0.0
        %1448 = vadd.xlane.f32.xlu0 %v1447
        %v1449 = vpop.xlane.xlu0 %1448
        %v1450 = vmul.f32 %v1449, %v1443
        %v1451 = vadd.f32 %v1450, 1e-05
        %v1452 = vrsqrt.pop %v1451
        %v1453 = vmul.f32 %v1445, %v1452
        %v1455 = vlaneseq
        %v1456 = vshrl.u32 %v1455, 7
        %v1457 = vsub.s32 0, %v1456
        %v1458 = vrot.slane %v1437, %v1457
        %v1460 = vmul.f32 %v1453, %v1458
        %v1462 = vlaneseq
        %v1463 = vshrl.u32 %v1462, 7
        %v1464 = vsub.s32 0, %v1463
        %v1465 = vrot.slane %v1438, %v1464
        %v1467 = vadd.f32 %v1460, %v1465
        %v1468 = vld [vmem:[%s23] sm:$0xff]
        %v1469 = vld [vmem:[%s23 + $0x8] sm:$0xff]
        %v1470 = vld [vmem:[%s23 + $0x10] sm:$0xff]
        %v1471 = vld [vmem:[%s23 + $0x18] sm:$0xff]
        %v1472 = vld [vmem:[%s23 + $0x20] sm:$0xff]
        %v1473 = vld [vmem:[%s23 + $0x28] sm:$0xff]
        %v1474 = vld [vmem:[%s23 + $0x30] sm:$0xff]
        %v1475 = vld [vmem:[%s23 + $0x38] sm:$0xff]
        %v1476 = vpack.c.bf16 %v1467, %v1467
        %v1477 = vld [vmem:[#allocation12] sm:$0x3]
        %v1479 = vlaneseq
        %v1480 = vshrl.u32 %v1479, 7
        %v1481 = vsub.s32 0, %v1480
        %v1482 = vrot.slane %v1477, %v1481
        %v1483 = vlaneseq
        %v1484 = vshrl.u32 %v1483, 7
        %v1485 = vsub.s32 1, %v1484
        %v1486 = vrot.slane %v1477, %v1485
        %v1497 = vunpack.c.l.b16 %v1468
        %v1498 = vunpack.c.h.b16 %v1468
        %v1499 = vunpack.c.l.b16 %v1469
        %v1500 = vunpack.c.h.b16 %v1469
        %v1501 = vunpack.c.l.b16 %v1470
        %v1502 = vunpack.c.h.b16 %v1470
        %v1503 = vunpack.c.l.b16 %v1471
        %v1504 = vunpack.c.h.b16 %v1471
        %v1505 = vunpack.c.l.b16 %v1472
        %v1506 = vunpack.c.h.b16 %v1472
        %v1507 = vunpack.c.l.b16 %v1473
        %v1508 = vunpack.c.h.b16 %v1473
        %v1509 = vunpack.c.l.b16 %v1474
        %v1510 = vunpack.c.h.b16 %v1474
        %v1511 = vunpack.c.l.b16 %v1475
        %v1512 = vunpack.c.h.b16 %v1475
        %v1513 = vpack.c.b16 %v1499, %v1497
        %v1514 = vpack.c.b16 %v1500, %v1498
        %v1515 = vpack.c.b16 %v1503, %v1501
        %v1516 = vpack.c.b16 %v1504, %v1502
        %v1517 = vpack.c.b16 %v1507, %v1505
        %v1518 = vpack.c.b16 %v1508, %v1506
        %v1519 = vpack.c.b16 %v1511, %v1509
        %v1520 = vpack.c.b16 %v1512, %v1510
        %v1530 = vsel %vm1439, %v1476, 0
        %1532 = vmatprep.subr.bf16.mxu0 %v1514
        %1533 = vmatpush1.bf16.msra.mxu0 %v1513
        %1534 = vmatprep.subr.bf16.mxu0 %v1516
        %1535 = vmatpush1.bf16.msra.mxu0 %v1515
        %1536 = vmatprep.subr.bf16.mxu0 %v1518
        %1537 = vmatpush1.bf16.msra.mxu0 %v1517
        %1538 = vmatprep.subr.bf16.mxu0 %v1520
        %1539 = vmatpush1.bf16.msra.mxu0 %v1519
        %1540 = vmatprep.subr.bf16.mxu0 0
        %1541 = vmatpush1.bf16.msra.mxu0 0
        %1542 = vmatprep.subr.bf16.mxu0 0
        %1543 = vmatpush1.bf16.msra.mxu0 0
        %1544 = vmatprep.subr.bf16.mxu0 0
        %1545 = vmatpush1.bf16.msra.mxu0 0
        %1546 = vmatprep.subr.bf16.mxu0 0
        %1547 = vmatpush1.bf16.msra.mxu0 0
        %1548 = vmatprep.subr.bf16.mxu0 0
        %1549 = vmatpush1.bf16.msra.mxu0 0
        %1550 = vmatprep.subr.bf16.mxu0 0
        %1551 = vmatpush1.bf16.msra.mxu0 0
        %1552 = vmatprep.subr.bf16.mxu0 0
        %1553 = vmatpush1.bf16.msra.mxu0 0
        %1554 = vmatprep.subr.bf16.mxu0 0
        %1555 = vmatpush1.bf16.msra.mxu0 0
        %1556 = vmatprep.subr.bf16.mxu0 0
        %1557 = vmatpush1.bf16.msra.mxu0 0
        %1558 = vmatprep.subr.bf16.mxu0 0
        %1559 = vmatpush1.bf16.msra.mxu0 0
        %1560 = vmatprep.subr.bf16.mxu0 0
        %1561 = vmatpush1.bf16.msra.mxu0 0
        %1562 = vmatprep.subr.bf16.mxu0 0
        %1563 = vmatpush1.bf16.msra.mxu0 0
        %1564 = vmatprep.mubr.bf16.mxu0 0
        %1565 = vmatmul.mubr.bf16.gmra.mrb[0].mxu0 %v1530
        %v1566 = vpop.f32.mrb[0].mxu0
        %v1567 = vadd.f32 %v1482, %v1566
        %v1568 = vpop.f32.mrb[0].mxu0
        %v1569 = vadd.f32 %v1486, %v1568
        %v1570 = vpop.f32.mrb[0].mxu0
        %v1571 = vpop.f32.mrb[0].mxu0
        %1572 = vdwg.mxu0
        %v1573 = vmul.f32 %v1567, 0.25
        %v1574 = vpack.c.bf16 %v1573, %v1573
        %v1575 = vpack.c.bf16 %v1567, %v1567
        %1577 = vrot.lane.b32.xlu0 %v1575, 64
        %v1578 = vpop.permute.xlu0 %1577
        %vm1579 = vcmask 130048
        %v1581 = vsel %vm1579, %v1574, 0
        %v1584 = vsel %vm1579, %v1578, 0
        %1586 = vmatprep.subr.bf16.mxu0 0
        %1587 = vmatpush1.bf16.xpose.msra.mxu0 %v1584
        %1588 = vmatprep.subr.bf16.mxu0 0
        %1589 = vmatpush1.bf16.xpose.msra.mxu0 0
        %1590 = vmatprep.subr.bf16.mxu0 0
        %1591 = vmatpush1.bf16.xpose.msra.mxu0 0
        %1592 = vmatprep.subr.bf16.mxu0 0
        %1593 = vmatpush1.bf16.xpose.msra.mxu0 0
        %1594 = vmatprep.subr.bf16.mxu0 0
        %1595 = vmatpush1.bf16.xpose.msra.mxu0 0
        %1596 = vmatprep.subr.bf16.mxu0 0
        %1597 = vmatpush1.bf16.xpose.msra.mxu0 0
        %1598 = vmatprep.subr.bf16.mxu0 0
        %1599 = vmatpush1.bf16.xpose.msra.mxu0 0
        %1600 = vmatprep.subr.bf16.mxu0 0
        %1601 = vmatpush1.bf16.xpose.msra.mxu0 0
        %1602 = vmatprep.subr.bf16.mxu0 0
        %1603 = vmatpush1.bf16.xpose.msra.mxu0 0
        %1604 = vmatprep.subr.bf16.mxu0 0
        %1605 = vmatpush1.bf16.xpose.msra.mxu0 0
        %1606 = vmatprep.subr.bf16.mxu0 0
        %1607 = vmatpush1.bf16.xpose.msra.mxu0 0
        %1608 = vmatprep.subr.bf16.mxu0 0
        %1609 = vmatpush1.bf16.xpose.msra.mxu0 0
        %1610 = vmatprep.subr.bf16.mxu0 0
        %1611 = vmatpush1.bf16.xpose.msra.mxu0 0
        %1612 = vmatprep.subr.bf16.mxu0 0
        %1613 = vmatpush1.bf16.xpose.msra.mxu0 0
        %1614 = vmatprep.subr.bf16.mxu0 0
        %1615 = vmatpush1.bf16.xpose.msra.mxu0 0
        %1616 = vmatprep.subr.bf16.mxu0 0
        %1617 = vmatpush1.bf16.xpose.msra.mxu0 0
        %1618 = vmatprep.mubr.bf16.mxu0 0
        %1619 = vmatmul.mubr.bf16.gmra.mrb[0].mxu0 %v1581
        %v1620 = vpop.f32.mrb[0].mxu0
        %v1621 = vadd.f32 0.0, %v1620
        %v1622 = vpop.f32.mrb[0].mxu0
        %v1623 = vpop.f32.mrb[0].mxu0
        %v1624 = vpop.f32.mrb[0].mxu0
        %1625 = vdwg.mxu0
        %vm1626 = vcmask 64512
        %v1627 = vsel %vm1626, %v1621, -inf
        %1628 = vmax.xlane.f32.xlu0 %v1627
        %v1629 = vpop.xlane.xlu0 %1628
        %v1630 = vsub.f32 %v1621, %v1629
        %v1631 = vmul.f32 %v1630, 1.442695
        %v1632 = vpow.pop %v1631
        %v1633 = vsel %vm1626, %v1632, 0.0
        %1634 = vadd.xlane.f32.xlu0 %v1633
        %v1635 = vpop.xlane.xlu0 %1634
        %v1636 = vrcp.pop %v1635
        %v1637 = vmul.f32 %v1632, %v1636
        %v1638 = vpack.c.bf16 %v1637, %v1637
        %v1639 = vpack.c.bf16 %v1569, %v1569
        %v1641 = vsel %vm1626, %v1638, 0
        %vm1643 = vcmask 1043456
        %v1645 = vsel %vm1643, %v1639, 0
        %1647 = vmatprep.subr.bf16.mxu0 0
        %1648 = vmatpush1.bf16.msra.mxu0 %v1645
        %1649 = vmatprep.subr.bf16.mxu0 0
        %1650 = vmatpush1.bf16.msra.mxu0 0
        %1651 = vmatprep.subr.bf16.mxu0 0
        %1652 = vmatpush1.bf16.msra.mxu0 0
        %1653 = vmatprep.subr.bf16.mxu0 0
        %1654 = vmatpush1.bf16.msra.mxu0 0
        %1655 = vmatprep.subr.bf16.mxu0 0
        %1656 = vmatpush1.bf16.msra.mxu0 0
        %1657 = vmatprep.subr.bf16.mxu0 0
        %1658 = vmatpush1.bf16.msra.mxu0 0
        %1659 = vmatprep.subr.bf16.mxu0 0
        %1660 = vmatpush1.bf16.msra.mxu0 0
        %1661 = vmatprep.subr.bf16.mxu0 0
        %1662 = vmatpush1.bf16.msra.mxu0 0
        %1663 = vmatprep.subr.bf16.mxu0 0
        %1664 = vmatpush1.bf16.msra.mxu0 0
        %1665 = vmatprep.subr.bf16.mxu0 0
        %1666 = vmatpush1.bf16.msra.mxu0 0
        %1667 = vmatprep.subr.bf16.mxu0 0
        %1668 = vmatpush1.bf16.msra.mxu0 0
        %1669 = vmatprep.subr.bf16.mxu0 0
        %1670 = vmatpush1.bf16.msra.mxu0 0
        %1671 = vmatprep.subr.bf16.mxu0 0
        %1672 = vmatpush1.bf16.msra.mxu0 0
        %1673 = vmatprep.subr.bf16.mxu0 0
        %1674 = vmatpush1.bf16.msra.mxu0 0
        %1675 = vmatprep.subr.bf16.mxu0 0
        %1676 = vmatpush1.bf16.msra.mxu0 0
        %1677 = vmatprep.subr.bf16.mxu0 0
        %1678 = vmatpush1.bf16.msra.mxu0 0
        %1679 = vmatprep.mubr.bf16.mxu0 0
        %1680 = vmatmul.mubr.bf16.gmra.mrb[0].mxu0 %v1641
        %v1681 = vpop.f32.mrb[0].mxu0
        %v1682 = vadd.f32 0.0, %v1681
        %v1683 = vpop.f32.mrb[0].mxu0
        %v1684 = vpop.f32.mrb[0].mxu0
        %v1685 = vpop.f32.mrb[0].mxu0
        %1686 = vdwg.mxu0
        %1688 = vrot.lane.b32.xlu0 %v1574, 112
        %v1689 = vpop.permute.xlu0 %1688
        %1690 = vrot.lane.b32.xlu0 %v1575, 48
        %v1691 = vpop.permute.xlu0 %1690
        %v1693 = vsel %vm1579, %v1689, 0
        %v1696 = vsel %vm1579, %v1691, 0
        %1698 = vmatprep.subr.bf16.mxu0 0
        %1699 = vmatpush1.bf16.xpose.msra.mxu0 %v1696
        %1700 = vmatprep.subr.bf16.mxu0 0
        %1701 = vmatpush1.bf16.xpose.msra.mxu0 0
        %1702 = vmatprep.subr.bf16.mxu0 0
        %1703 = vmatpush1.bf16.xpose.msra.mxu0 0
        %1704 = vmatprep.subr.bf16.mxu0 0
        %1705 = vmatpush1.bf16.xpose.msra.mxu0 0
        %1706 = vmatprep.subr.bf16.mxu0 0
        %1707 = vmatpush1.bf16.xpose.msra.mxu0 0
        %1708 = vmatprep.subr.bf16.mxu0 0
        %1709 = vmatpush1.bf16.xpose.msra.mxu0 0
        %1710 = vmatprep.subr.bf16.mxu0 0
        %1711 = vmatpush1.bf16.xpose.msra.mxu0 0
        %1712 = vmatprep.subr.bf16.mxu0 0
        %1713 = vmatpush1.bf16.xpose.msra.mxu0 0
        %1714 = vmatprep.subr.bf16.mxu0 0
        %1715 = vmatpush1.bf16.xpose.msra.mxu0 0
        %1716 = vmatprep.subr.bf16.mxu0 0
        %1717 = vmatpush1.bf16.xpose.msra.mxu0 0
        %1718 = vmatprep.subr.bf16.mxu0 0
        %1719 = vmatpush1.bf16.xpose.msra.mxu0 0
        %1720 = vmatprep.subr.bf16.mxu0 0
        %1721 = vmatpush1.bf16.xpose.msra.mxu0 0
        %1722 = vmatprep.subr.bf16.mxu0 0
        %1723 = vmatpush1.bf16.xpose.msra.mxu0 0
        %1724 = vmatprep.subr.bf16.mxu0 0
        %1725 = vmatpush1.bf16.xpose.msra.mxu0 0
        %1726 = vmatprep.subr.bf16.mxu0 0
        %1727 = vmatpush1.bf16.xpose.msra.mxu0 0
        %1728 = vmatprep.subr.bf16.mxu0 0
        %1729 = vmatpush1.bf16.xpose.msra.mxu0 0
        %1730 = vmatprep.mubr.bf16.mxu0 0
        %1731 = vmatmul.mubr.bf16.gmra.mrb[0].mxu0 %v1693
        %v1732 = vpop.f32.mrb[0].mxu0
        %v1733 = vadd.f32 0.0, %v1732
        %v1734 = vpop.f32.mrb[0].mxu0
        %v1735 = vpop.f32.mrb[0].mxu0
        %v1736 = vpop.f32.mrb[0].mxu0
        %1737 = vdwg.mxu0
        %v1738 = vsel %vm1626, %v1733, -inf
        %1739 = vmax.xlane.f32.xlu0 %v1738
        %v1740 = vpop.xlane.xlu0 %1739
        %v1741 = vsub.f32 %v1733, %v1740
        %v1742 = vmul.f32 %v1741, 1.442695
        %v1743 = vpow.pop %v1742
        %v1744 = vsel %vm1626, %v1743, 0.0
        %1745 = vadd.xlane.f32.xlu0 %v1744
        %v1746 = vpop.xlane.xlu0 %1745
        %v1747 = vrcp.pop %v1746
        %v1748 = vmul.f32 %v1743, %v1747
        %v1749 = vpack.c.bf16 %v1748, %v1748
        %1751 = vrot.lane.b32.xlu0 %v1639, 112
        %v1752 = vpop.permute.xlu0 %1751
        %v1754 = vsel %vm1626, %v1749, 0
        %v1757 = vsel %vm1643, %v1752, 0
        %1759 = vmatprep.subr.bf16.mxu0 0
        %1760 = vmatpush1.bf16.msra.mxu0 %v1757
        %1761 = vmatprep.subr.bf16.mxu0 0
        %1762 = vmatpush1.bf16.msra.mxu0 0
        %1763 = vmatprep.subr.bf16.mxu0 0
        %1764 = vmatpush1.bf16.msra.mxu0 0
        %1765 = vmatprep.subr.bf16.mxu0 0
        %1766 = vmatpush1.bf16.msra.mxu0 0
        %1767 = vmatprep.subr.bf16.mxu0 0
        %1768 = vmatpush1.bf16.msra.mxu0 0
        %1769 = vmatprep.subr.bf16.mxu0 0
        %1770 = vmatpush1.bf16.msra.mxu0 0
        %1771 = vmatprep.subr.bf16.mxu0 0
        %1772 = vmatpush1.bf16.msra.mxu0 0
        %1773 = vmatprep.subr.bf16.mxu0 0
        %1774 = vmatpush1.bf16.msra.mxu0 0
        %1775 = vmatprep.subr.bf16.mxu0 0
        %1776 = vmatpush1.bf16.msra.mxu0 0
        %1777 = vmatprep.subr.bf16.mxu0 0
        %1778 = vmatpush1.bf16.msra.mxu0 0
        %1779 = vmatprep.subr.bf16.mxu0 0
        %1780 = vmatpush1.bf16.msra.mxu0 0
        %1781 = vmatprep.subr.bf16.mxu0 0
        %1782 = vmatpush1.bf16.msra.mxu0 0
        %1783 = vmatprep.subr.bf16.mxu0 0
        %1784 = vmatpush1.bf16.msra.mxu0 0
        %1785 = vmatprep.subr.bf16.mxu0 0
        %1786 = vmatpush1.bf16.msra.mxu0 0
        %1787 = vmatprep.subr.bf16.mxu0 0
        %1788 = vmatpush1.bf16.msra.mxu0 0
        %1789 = vmatprep.subr.bf16.mxu0 0
        %1790 = vmatpush1.bf16.msra.mxu0 0
        %1791 = vmatprep.mubr.bf16.mxu0 0
        %1792 = vmatmul.mubr.bf16.gmra.mrb[0].mxu0 %v1754
        %v1793 = vpop.f32.mrb[0].mxu0
        %v1794 = vadd.f32 0.0, %v1793
        %v1795 = vpop.f32.mrb[0].mxu0
        %v1796 = vpop.f32.mrb[0].mxu0
        %v1797 = vpop.f32.mrb[0].mxu0
        %1798 = vdwg.mxu0
        %1799 = vrot.lane.b32.xlu0 %v1574, 96
        %v1800 = vpop.permute.xlu0 %1799
        %1801 = vrot.lane.b32.xlu0 %v1575, 32
        %v1802 = vpop.permute.xlu0 %1801
        %v1804 = vsel %vm1579, %v1800, 0
        %v1807 = vsel %vm1579, %v1802, 0
        %1809 = vmatprep.subr.bf16.mxu0 0
        %1810 = vmatpush1.bf16.xpose.msra.mxu0 %v1807
        %1811 = vmatprep.subr.bf16.mxu0 0
        %1812 = vmatpush1.bf16.xpose.msra.mxu0 0
        %1813 = vmatprep.subr.bf16.mxu0 0
        %1814 = vmatpush1.bf16.xpose.msra.mxu0 0
        %1815 = vmatprep.subr.bf16.mxu0 0
        %1816 = vmatpush1.bf16.xpose.msra.mxu0 0
        %1817 = vmatprep.subr.bf16.mxu0 0
        %1818 = vmatpush1.bf16.xpose.msra.mxu0 0
        %1819 = vmatprep.subr.bf16.mxu0 0
        %1820 = vmatpush1.bf16.xpose.msra.mxu0 0
        %1821 = vmatprep.subr.bf16.mxu0 0
        %1822 = vmatpush1.bf16.xpose.msra.mxu0 0
        %1823 = vmatprep.subr.bf16.mxu0 0
        %1824 = vmatpush1.bf16.xpose.msra.mxu0 0
        %1825 = vmatprep.subr.bf16.mxu0 0
        %1826 = vmatpush1.bf16.xpose.msra.mxu0 0
        %1827 = vmatprep.subr.bf16.mxu0 0
        %1828 = vmatpush1.bf16.xpose.msra.mxu0 0
        %1829 = vmatprep.subr.bf16.mxu0 0
        %1830 = vmatpush1.bf16.xpose.msra.mxu0 0
        %1831 = vmatprep.subr.bf16.mxu0 0
        %1832 = vmatpush1.bf16.xpose.msra.mxu0 0
        %1833 = vmatprep.subr.bf16.mxu0 0
        %1834 = vmatpush1.bf16.xpose.msra.mxu0 0
        %1835 = vmatprep.subr.bf16.mxu0 0
        %1836 = vmatpush1.bf16.xpose.msra.mxu0 0
        %1837 = vmatprep.subr.bf16.mxu0 0
        %1838 = vmatpush1.bf16.xpose.msra.mxu0 0
        %1839 = vmatprep.subr.bf16.mxu0 0
        %1840 = vmatpush1.bf16.xpose.msra.mxu0 0
        %1841 = vmatprep.mubr.bf16.mxu0 0
        %1842 = vmatmul.mubr.bf16.gmra.mrb[0].mxu0 %v1804
        %v1843 = vpop.f32.mrb[0].mxu0
        %v1844 = vadd.f32 0.0, %v1843
        %v1845 = vpop.f32.mrb[0].mxu0
        %v1846 = vpop.f32.mrb[0].mxu0
        %v1847 = vpop.f32.mrb[0].mxu0
        %1848 = vdwg.mxu0
        %v1849 = vsel %vm1626, %v1844, -inf
        %1850 = vmax.xlane.f32.xlu0 %v1849
        %v1851 = vpop.xlane.xlu0 %1850
        %v1852 = vsub.f32 %v1844, %v1851
        %v1853 = vmul.f32 %v1852, 1.442695
        %v1854 = vpow.pop %v1853
        %v1855 = vsel %vm1626, %v1854, 0.0
        %1856 = vadd.xlane.f32.xlu0 %v1855
        %v1857 = vpop.xlane.xlu0 %1856
        %v1858 = vrcp.pop %v1857
        %v1859 = vmul.f32 %v1854, %v1858
        %v1860 = vpack.c.bf16 %v1859, %v1859
        %1861 = vrot.lane.b32.xlu0 %v1639, 96
        %v1862 = vpop.permute.xlu0 %1861
        %v1864 = vsel %vm1626, %v1860, 0
        %v1867 = vsel %vm1643, %v1862, 0
        %1869 = vmatprep.subr.bf16.mxu0 0
        %1870 = vmatpush1.bf16.msra.mxu0 %v1867
        %1871 = vmatprep.subr.bf16.mxu0 0
        %1872 = vmatpush1.bf16.msra.mxu0 0
        %1873 = vmatprep.subr.bf16.mxu0 0
        %1874 = vmatpush1.bf16.msra.mxu0 0
        %1875 = vmatprep.subr.bf16.mxu0 0
        %1876 = vmatpush1.bf16.msra.mxu0 0
        %1877 = vmatprep.subr.bf16.mxu0 0
        %1878 = vmatpush1.bf16.msra.mxu0 0
        %1879 = vmatprep.subr.bf16.mxu0 0
        %1880 = vmatpush1.bf16.msra.mxu0 0
        %1881 = vmatprep.subr.bf16.mxu0 0
        %1882 = vmatpush1.bf16.msra.mxu0 0
        %1883 = vmatprep.subr.bf16.mxu0 0
        %1884 = vmatpush1.bf16.msra.mxu0 0
        %1885 = vmatprep.subr.bf16.mxu0 0
        %1886 = vmatpush1.bf16.msra.mxu0 0
        %1887 = vmatprep.subr.bf16.mxu0 0
        %1888 = vmatpush1.bf16.msra.mxu0 0
        %1889 = vmatprep.subr.bf16.mxu0 0
        %1890 = vmatpush1.bf16.msra.mxu0 0
        %1891 = vmatprep.subr.bf16.mxu0 0
        %1892 = vmatpush1.bf16.msra.mxu0 0
        %1893 = vmatprep.subr.bf16.mxu0 0
        %1894 = vmatpush1.bf16.msra.mxu0 0
        %1895 = vmatprep.subr.bf16.mxu0 0
        %1896 = vmatpush1.bf16.msra.mxu0 0
        %1897 = vmatprep.subr.bf16.mxu0 0
        %1898 = vmatpush1.bf16.msra.mxu0 0
        %1899 = vmatprep.subr.bf16.mxu0 0
        %1900 = vmatpush1.bf16.msra.mxu0 0
        %1901 = vmatprep.mubr.bf16.mxu0 0
        %1902 = vmatmul.mubr.bf16.gmra.mrb[0].mxu0 %v1864
        %v1903 = vpop.f32.mrb[0].mxu0
        %v1904 = vadd.f32 0.0, %v1903
        %v1905 = vpop.f32.mrb[0].mxu0
        %v1906 = vpop.f32.mrb[0].mxu0
        %v1907 = vpop.f32.mrb[0].mxu0
        %1908 = vdwg.mxu0
        %1909 = vrot.lane.b32.xlu0 %v1574, 80
        %v1910 = vpop.permute.xlu0 %1909
        %1911 = vrot.lane.b32.xlu0 %v1575, 16
        %v1912 = vpop.permute.xlu0 %1911
        %v1914 = vsel %vm1579, %v1910, 0
        %v1917 = vsel %vm1579, %v1912, 0
        %1919 = vmatprep.subr.bf16.mxu0 0
        %1920 = vmatpush1.bf16.xpose.msra.mxu0 %v1917
        %1921 = vmatprep.subr.bf16.mxu0 0
        %1922 = vmatpush1.bf16.xpose.msra.mxu0 0
        %1923 = vmatprep.subr.bf16.mxu0 0
        %1924 = vmatpush1.bf16.xpose.msra.mxu0 0
        %1925 = vmatprep.subr.bf16.mxu0 0
        %1926 = vmatpush1.bf16.xpose.msra.mxu0 0
        %1927 = vmatprep.subr.bf16.mxu0 0
        %1928 = vmatpush1.bf16.xpose.msra.mxu0 0
        %1929 = vmatprep.subr.bf16.mxu0 0
        %1930 = vmatpush1.bf16.xpose.msra.mxu0 0
        %1931 = vmatprep.subr.bf16.mxu0 0
        %1932 = vmatpush1.bf16.xpose.msra.mxu0 0
        %1933 = vmatprep.subr.bf16.mxu0 0
        %1934 = vmatpush1.bf16.xpose.msra.mxu0 0
        %1935 = vmatprep.subr.bf16.mxu0 0
        %1936 = vmatpush1.bf16.xpose.msra.mxu0 0
        %1937 = vmatprep.subr.bf16.mxu0 0
        %1938 = vmatpush1.bf16.xpose.msra.mxu0 0
        %1939 = vmatprep.subr.bf16.mxu0 0
        %1940 = vmatpush1.bf16.xpose.msra.mxu0 0
        %1941 = vmatprep.subr.bf16.mxu0 0
        %1942 = vmatpush1.bf16.xpose.msra.mxu0 0
        %1943 = vmatprep.subr.bf16.mxu0 0
        %1944 = vmatpush1.bf16.xpose.msra.mxu0 0
        %1945 = vmatprep.subr.bf16.mxu0 0
        %1946 = vmatpush1.bf16.xpose.msra.mxu0 0
        %1947 = vmatprep.subr.bf16.mxu0 0
        %1948 = vmatpush1.bf16.xpose.msra.mxu0 0
        %1949 = vmatprep.subr.bf16.mxu0 0
        %1950 = vmatpush1.bf16.xpose.msra.mxu0 0
        %1951 = vmatprep.mubr.bf16.mxu0 0
        %1952 = vmatmul.mubr.bf16.gmra.mrb[0].mxu0 %v1914
        %v1953 = vpop.f32.mrb[0].mxu0
        %v1954 = vadd.f32 0.0, %v1953
        %v1955 = vpop.f32.mrb[0].mxu0
        %v1956 = vpop.f32.mrb[0].mxu0
        %v1957 = vpop.f32.mrb[0].mxu0
        %1958 = vdwg.mxu0
        %v1959 = vsel %vm1626, %v1954, -inf
        %1960 = vmax.xlane.f32.xlu0 %v1959
        %v1961 = vpop.xlane.xlu0 %1960
        %v1962 = vsub.f32 %v1954, %v1961
        %v1963 = vmul.f32 %v1962, 1.442695
        %v1964 = vpow.pop %v1963
        %v1965 = vsel %vm1626, %v1964, 0.0
        %1966 = vadd.xlane.f32.xlu0 %v1965
        %v1967 = vpop.xlane.xlu0 %1966
        %v1968 = vrcp.pop %v1967
        %v1969 = vmul.f32 %v1964, %v1968
        %v1970 = vpack.c.bf16 %v1969, %v1969
        %1971 = vrot.lane.b32.xlu0 %v1639, 80
        %v1972 = vpop.permute.xlu0 %1971
        %v1974 = vsel %vm1626, %v1970, 0
        %v1977 = vsel %vm1643, %v1972, 0
        %1979 = vmatprep.subr.bf16.mxu0 0
        %1980 = vmatpush1.bf16.msra.mxu0 %v1977
        %1981 = vmatprep.subr.bf16.mxu0 0
        %1982 = vmatpush1.bf16.msra.mxu0 0
        %1983 = vmatprep.subr.bf16.mxu0 0
        %1984 = vmatpush1.bf16.msra.mxu0 0
        %1985 = vmatprep.subr.bf16.mxu0 0
        %1986 = vmatpush1.bf16.msra.mxu0 0
        %1987 = vmatprep.subr.bf16.mxu0 0
        %1988 = vmatpush1.bf16.msra.mxu0 0
        %1989 = vmatprep.subr.bf16.mxu0 0
        %1990 = vmatpush1.bf16.msra.mxu0 0
        %1991 = vmatprep.subr.bf16.mxu0 0
        %1992 = vmatpush1.bf16.msra.mxu0 0
        %1993 = vmatprep.subr.bf16.mxu0 0
        %1994 = vmatpush1.bf16.msra.mxu0 0
        %1995 = vmatprep.subr.bf16.mxu0 0
        %1996 = vmatpush1.bf16.msra.mxu0 0
        %1997 = vmatprep.subr.bf16.mxu0 0
        %1998 = vmatpush1.bf16.msra.mxu0 0
        %1999 = vmatprep.subr.bf16.mxu0 0
        %2000 = vmatpush1.bf16.msra.mxu0 0
        %2001 = vmatprep.subr.bf16.mxu0 0
        %2002 = vmatpush1.bf16.msra.mxu0 0
        %2003 = vmatprep.subr.bf16.mxu0 0
        %2004 = vmatpush1.bf16.msra.mxu0 0
        %2005 = vmatprep.subr.bf16.mxu0 0
        %2006 = vmatpush1.bf16.msra.mxu0 0
        %2007 = vmatprep.subr.bf16.mxu0 0
        %2008 = vmatpush1.bf16.msra.mxu0 0
        %2009 = vmatprep.subr.bf16.mxu0 0
        %2010 = vmatpush1.bf16.msra.mxu0 0
        %2011 = vmatprep.mubr.bf16.mxu0 0
        %2012 = vmatmul.mubr.bf16.gmra.mrb[0].mxu0 %v1974
        %v2013 = vpop.f32.mrb[0].mxu0
        %v2014 = vadd.f32 0.0, %v2013
        %v2015 = vpop.f32.mrb[0].mxu0
        %v2016 = vpop.f32.mrb[0].mxu0
        %v2017 = vpop.f32.mrb[0].mxu0
        %2018 = vdwg.mxu0
        %2020 = vrot.lane.b32.xlu0 %v1794, 16
        %v2021 = vpop.permute.xlu0 %2020
        %2024 = vrot.lane.b32.xlu0 %v1904, 32
        %v2025 = vpop.permute.xlu0 %2024
        %2028 = vrot.lane.b32.xlu0 %v2014, 48
        %v2029 = vpop.permute.xlu0 %2028
        %v2031 = vsel %vm1579, %v1682, %v2021
        %v2032 = vsel %vm1384, %v2031, %v2025
        %vm2033 = vcmask 392192
        %v2034 = vsel %vm2033, %v2032, %v2029
        %v2035 = vld [vmem:[#allocation13] sm:$0x1]
        %v2036 = vld [vmem:[%s29] sm:$0x1]
        %v2037 = vsel %vm1439, %v2034, 0.0
        %2038 = vadd.xlane.f32.xlu0 %v2037
        %v2039 = vpop.xlane.xlu0 %2038
        %v2040 = vmul.f32 %v2039, %v1443
        %v2041 = vsub.f32 %v2034, %v2040
        %v2042 = vmul.f32 %v2041, %v2041
        %v2043 = vsel %vm1439, %v2042, 0.0
        %2044 = vadd.xlane.f32.xlu0 %v2043
        %v2045 = vpop.xlane.xlu0 %2044
        %v2046 = vmul.f32 %v2045, %v1443
        %v2047 = vadd.f32 %v2046, 1e-05
        %v2048 = vrsqrt.pop %v2047
        %v2049 = vmul.f32 %v2041, %v2048
        %v2051 = vlaneseq
        %v2052 = vshrl.u32 %v2051, 7
        %v2053 = vsub.s32 0, %v2052
        %v2054 = vrot.slane %v2035, %v2053
        %v2056 = vmul.f32 %v2049, %v2054
        %v2058 = vlaneseq
        %v2059 = vshrl.u32 %v2058, 7
        %v2060 = vsub.s32 0, %v2059
        %v2061 = vrot.slane %v2036, %v2060
        %v2063 = vadd.f32 %v2056, %v2061
        %v2064 = vld [vmem:[%s31] sm:$0xf]
        %v2065 = vld [vmem:[%s31 + $0x4] sm:$0xf]
        %v2066 = vld [vmem:[%s31 + $0x8] sm:$0xf]
        %v2067 = vld [vmem:[%s31 + $0xc] sm:$0xf]
        %v2068 = vld [vmem:[%s31 + $0x10] sm:$0xf]
        %v2069 = vld [vmem:[%s31 + $0x14] sm:$0xf]
        %v2070 = vld [vmem:[%s31 + $0x18] sm:$0xf]
        %v2071 = vld [vmem:[%s31 + $0x1c] sm:$0xf]
        %v2072 = vpack.c.bf16 %v2063, %v2063
        %v2081 = vunpack.c.l.b16 %v2064
        %v2082 = vunpack.c.l.b16 %v2065
        %v2083 = vunpack.c.l.b16 %v2066
        %v2084 = vunpack.c.l.b16 %v2067
        %v2085 = vunpack.c.l.b16 %v2068
        %v2086 = vunpack.c.l.b16 %v2069
        %v2087 = vunpack.c.l.b16 %v2070
        %v2088 = vunpack.c.l.b16 %v2071
        %v2089 = vpack.c.b16 %v2082, %v2081
        %v2090 = vpack.c.b16 %v2084, %v2083
        %v2091 = vpack.c.b16 %v2086, %v2085
        %v2092 = vpack.c.b16 %v2088, %v2087
        %v2098 = vsel %vm1439, %v2072, 0
        %2100 = vmatprep.subr.bf16.mxu0 0
        %2101 = vmatpush1.bf16.msra.mxu0 %v2089
        %2102 = vmatprep.subr.bf16.mxu0 0
        %2103 = vmatpush1.bf16.msra.mxu0 %v2090
        %2104 = vmatprep.subr.bf16.mxu0 0
        %2105 = vmatpush1.bf16.msra.mxu0 %v2091
        %2106 = vmatprep.subr.bf16.mxu0 0
        %2107 = vmatpush1.bf16.msra.mxu0 %v2092
        %2108 = vmatprep.subr.bf16.mxu0 0
        %2109 = vmatpush1.bf16.msra.mxu0 0
        %2110 = vmatprep.subr.bf16.mxu0 0
        %2111 = vmatpush1.bf16.msra.mxu0 0
        %2112 = vmatprep.subr.bf16.mxu0 0
        %2113 = vmatpush1.bf16.msra.mxu0 0
        %2114 = vmatprep.subr.bf16.mxu0 0
        %2115 = vmatpush1.bf16.msra.mxu0 0
        %2116 = vmatprep.subr.bf16.mxu0 0
        %2117 = vmatpush1.bf16.msra.mxu0 0
        %2118 = vmatprep.subr.bf16.mxu0 0
        %2119 = vmatpush1.bf16.msra.mxu0 0
        %2120 = vmatprep.subr.bf16.mxu0 0
        %2121 = vmatpush1.bf16.msra.mxu0 0
        %2122 = vmatprep.subr.bf16.mxu0 0
        %2123 = vmatpush1.bf16.msra.mxu0 0
        %2124 = vmatprep.subr.bf16.mxu0 0
        %2125 = vmatpush1.bf16.msra.mxu0 0
        %2126 = vmatprep.subr.bf16.mxu0 0
        %2127 = vmatpush1.bf16.msra.mxu0 0
        %2128 = vmatprep.subr.bf16.mxu0 0
        %2129 = vmatpush1.bf16.msra.mxu0 0
        %2130 = vmatprep.subr.bf16.mxu0 0
        %2131 = vmatpush1.bf16.msra.mxu0 0
        %2132 = vmatprep.mubr.bf16.mxu0 0
        %2133 = vmatmul.mubr.bf16.gmra.mrb[0].mxu0 %v2098
        %v2134 = vpop.f32.mrb[0].mxu0
        %v2135 = vadd.f32 0.0, %v2134
        %v2136 = vpop.f32.mrb[0].mxu0
        %v2137 = vpop.f32.mrb[0].mxu0
        %v2138 = vpop.f32.mrb[0].mxu0
        %2139 = vdwg.mxu0
        %v2140 = vadd.f32 %v1435, %v2135
        %v2141 = vld [vmem:[#allocation15] sm:$0x1]
        %v2143 = vlaneseq
        %v2144 = vshrl.u32 %v2143, 7
        %v2145 = vsub.s32 0, %v2144
        %v2146 = vrot.slane %v2141, %v2145
        %v2148 = vadd.f32 %v2140, %v2146
        %v2149 = vld [vmem:[#allocation16] sm:$0x1]
        %v2150 = vld [vmem:[#allocation18] sm:$0x1]
        %vm2151 = vcmask 516096
        %v2152 = vsel %vm2151, %v1423, 0.0
        %2153 = vadd.xlane.f32.xlu0 %v2152
        %v2154 = vpop.xlane.xlu0 %2153
        %v2155 = vmul.f32 %v2154, %v1443
        %v2156 = vsub.f32 %v1423, %v2155
        %v2157 = vmul.f32 %v2156, %v2156
        %v2158 = vsel %vm2151, %v2157, 0.0
        %2159 = vadd.xlane.f32.xlu0 %v2158
        %v2160 = vpop.xlane.xlu0 %2159
        %v2161 = vmul.f32 %v2160, %v1443
        %v2162 = vadd.f32 %v2161, 1e-05
        %v2163 = vrsqrt.pop %v2162
        %v2164 = vmul.f32 %v2156, %v2163
        %v2165 = vmul.f32 %v2164, %v2149
        %v2166 = vadd.f32 %v2165, %v2150
        %v2167 = vld [vmem:[%s39] sm:$0xf]
        %v2168 = vld [vmem:[%s39 + $0x4] sm:$0xf]
        %v2169 = vld [vmem:[%s39 + $0x8] sm:$0xf]
        %v2170 = vld [vmem:[%s39 + $0xc] sm:$0xf]
        %v2171 = vld [vmem:[%s39 + $0x10] sm:$0xf]
        %v2172 = vld [vmem:[%s39 + $0x14] sm:$0xf]
        %v2173 = vld [vmem:[%s39 + $0x18] sm:$0xf]
        %v2174 = vld [vmem:[%s39 + $0x1c] sm:$0xf]
        %v2175 = vpack.c.bf16 %v2166, %v2166
        %v2176 = vld [vmem:[%s41] sm:$0x1]
        %v2185 = vunpack.c.l.b16 %v2167
        %v2186 = vunpack.c.l.b16 %v2168
        %v2187 = vunpack.c.l.b16 %v2169
        %v2188 = vunpack.c.l.b16 %v2170
        %v2189 = vunpack.c.l.b16 %v2171
        %v2190 = vunpack.c.l.b16 %v2172
        %v2191 = vunpack.c.l.b16 %v2173
        %v2192 = vunpack.c.l.b16 %v2174
        %v2193 = vpack.c.b16 %v2186, %v2185
        %v2194 = vpack.c.b16 %v2188, %v2187
        %v2195 = vpack.c.b16 %v2190, %v2189
        %v2196 = vpack.c.b16 %v2192, %v2191
        %v2202 = vsel %vm1439, %v2175, 0
        %2204 = vmatprep.subr.bf16.mxu0 0
        %2205 = vmatpush1.bf16.msra.mxu0 %v2193
        %2206 = vmatprep.subr.bf16.mxu0 0
        %2207 = vmatpush1.bf16.msra.mxu0 %v2194
        %2208 = vmatprep.subr.bf16.mxu0 0
        %2209 = vmatpush1.bf16.msra.mxu0 %v2195
        %2210 = vmatprep.subr.bf16.mxu0 0
        %2211 = vmatpush1.bf16.msra.mxu0 %v2196
        %2212 = vmatprep.subr.bf16.mxu0 0
        %2213 = vmatpush1.bf16.msra.mxu0 0
        %2214 = vmatprep.subr.bf16.mxu0 0
        %2215 = vmatpush1.bf16.msra.mxu0 0
        %2216 = vmatprep.subr.bf16.mxu0 0
        %2217 = vmatpush1.bf16.msra.mxu0 0
        %2218 = vmatprep.subr.bf16.mxu0 0
        %2219 = vmatpush1.bf16.msra.mxu0 0
        %2220 = vmatprep.subr.bf16.mxu0 0
        %2221 = vmatpush1.bf16.msra.mxu0 0
        %2222 = vmatprep.subr.bf16.mxu0 0
        %2223 = vmatpush1.bf16.msra.mxu0 0
        %2224 = vmatprep.subr.bf16.mxu0 0
        %2225 = vmatpush1.bf16.msra.mxu0 0
        %2226 = vmatprep.subr.bf16.mxu0 0
        %2227 = vmatpush1.bf16.msra.mxu0 0
        %2228 = vmatprep.subr.bf16.mxu0 0
        %2229 = vmatpush1.bf16.msra.mxu0 0
        %2230 = vmatprep.subr.bf16.mxu0 0
        %2231 = vmatpush1.bf16.msra.mxu0 0
        %2232 = vmatprep.subr.bf16.mxu0 0
        %2233 = vmatpush1.bf16.msra.mxu0 0
        %2234 = vmatprep.subr.bf16.mxu0 0
        %2235 = vmatpush1.bf16.msra.mxu0 0
        %2236 = vmatprep.mubr.bf16.mxu0 0
        %2237 = vmatmul.mubr.bf16.gmra.mrb[0].mxu0 %v2202
        %v2238 = vpop.f32.mrb[0].mxu0
        %v2239 = vadd.f32 %v2176, %v2238
        %v2240 = vpop.f32.mrb[0].mxu0
        %v2241 = vpop.f32.mrb[0].mxu0
        %v2242 = vpop.f32.mrb[0].mxu0
        %2243 = vdwg.mxu0
        %v2244 = vld [vmem:[%s43] sm:$0x1]
        %v2245 = vld [vmem:[%s45] sm:$0x1]
        %v2246 = vsel %vm2151, %v2239, 0.0
        %2247 = vadd.xlane.f32.xlu0 %v2246
        %v2248 = vpop.xlane.xlu0 %2247
        %v2249 = vmul.f32 %v2248, %v1443
        %v2250 = vsub.f32 %v2239, %v2249
        %v2251 = vmul.f32 %v2250, %v2250
        %v2252 = vsel %vm2151, %v2251, 0.0
        %2253 = vadd.xlane.f32.xlu0 %v2252
        %v2254 = vpop.xlane.xlu0 %2253
        %v2255 = vmul.f32 %v2254, %v1443
        %v2256 = vadd.f32 %v2255, 1e-05
        %v2257 = vrsqrt.pop %v2256
        %v2258 = vmul.f32 %v2250, %v2257
        %v2259 = vmul.f32 %v2258, %v2244
        %v2260 = vadd.f32 %v2259, %v2245
        %v2261 = vld [vmem:[%s47] sm:$0xf]
        %v2262 = vld [vmem:[%s47 + $0x4] sm:$0xf]
        %v2263 = vld [vmem:[%s47 + $0x8] sm:$0xf]
        %v2264 = vld [vmem:[%s47 + $0xc] sm:$0xf]
        %v2265 = vld [vmem:[%s47 + $0x10] sm:$0xf]
        %v2266 = vld [vmem:[%s47 + $0x14] sm:$0xf]
        %v2267 = vld [vmem:[%s47 + $0x18] sm:$0xf]
        %v2268 = vld [vmem:[%s47 + $0x1c] sm:$0xf]
        %v2269 = vpack.c.bf16 %v2260, %v2260
        %v2270 = vld [vmem:[%s49] sm:$0x1]
        %v2279 = vunpack.c.l.b16 %v2261
        %v2280 = vunpack.c.l.b16 %v2262
        %v2281 = vunpack.c.l.b16 %v2263
        %v2282 = vunpack.c.l.b16 %v2264
        %v2283 = vunpack.c.l.b16 %v2265
        %v2284 = vunpack.c.l.b16 %v2266
        %v2285 = vunpack.c.l.b16 %v2267
        %v2286 = vunpack.c.l.b16 %v2268
        %v2287 = vpack.c.b16 %v2280, %v2279
        %v2288 = vpack.c.b16 %v2282, %v2281
        %v2289 = vpack.c.b16 %v2284, %v2283
        %v2290 = vpack.c.b16 %v2286, %v2285
        %v2296 = vsel %vm1439, %v2269, 0
        %2298 = vmatprep.subr.bf16.mxu0 0
        %2299 = vmatpush1.bf16.msra.mxu0 %v2287
        %2300 = vmatprep.subr.bf16.mxu0 0
        %2301 = vmatpush1.bf16.msra.mxu0 %v2288
        %2302 = vmatprep.subr.bf16.mxu0 0
        %2303 = vmatpush1.bf16.msra.mxu0 %v2289
        %2304 = vmatprep.subr.bf16.mxu0 0
        %2305 = vmatpush1.bf16.msra.mxu0 %v2290
        %2306 = vmatprep.subr.bf16.mxu0 0
        %2307 = vmatpush1.bf16.msra.mxu0 0
        %2308 = vmatprep.subr.bf16.mxu0 0
        %2309 = vmatpush1.bf16.msra.mxu0 0
        %2310 = vmatprep.subr.bf16.mxu0 0
        %2311 = vmatpush1.bf16.msra.mxu0 0
        %2312 = vmatprep.subr.bf16.mxu0 0
        %2313 = vmatpush1.bf16.msra.mxu0 0
        %2314 = vmatprep.subr.bf16.mxu0 0
        %2315 = vmatpush1.bf16.msra.mxu0 0
        %2316 = vmatprep.subr.bf16.mxu0 0
        %2317 = vmatpush1.bf16.msra.mxu0 0
        %2318 = vmatprep.subr.bf16.mxu0 0
        %2319 = vmatpush1.bf16.msra.mxu0 0
        %2320 = vmatprep.subr.bf16.mxu0 0
        %2321 = vmatpush1.bf16.msra.mxu0 0
        %2322 = vmatprep.subr.bf16.mxu0 0
        %2323 = vmatpush1.bf16.msra.mxu0 0
        %2324 = vmatprep.subr.bf16.mxu0 0
        %2325 = vmatpush1.bf16.msra.mxu0 0
        %2326 = vmatprep.subr.bf16.mxu0 0
        %2327 = vmatpush1.bf16.msra.mxu0 0
        %2328 = vmatprep.subr.bf16.mxu0 0
        %2329 = vmatpush1.bf16.msra.mxu0 0
        %2330 = vmatprep.mubr.bf16.mxu0 0
        %2331 = vmatmul.mubr.bf16.gmra.mrb[0].mxu0 %v2296
        %v2332 = vpop.f32.mrb[0].mxu0
        %v2333 = vadd.f32 %v2270, %v2332
        %v2334 = vpop.f32.mrb[0].mxu0
        %v2335 = vpop.f32.mrb[0].mxu0
        %v2336 = vpop.f32.mrb[0].mxu0
        %2337 = vdwg.mxu0
        %v2338 = vlaneseq
        %v2339 = vshrl.u32 %v2338, 7
        %v2340 = vsub.s32 0, %v2339
        %v2341 = vrot.slane %v2333, %v2340
        %v2342 = vadd.f32 %v2148, %v2341
        %v2343 = vld [vmem:[%s51] sm:$0x1]
        %v2344 = vld [vmem:[%s53] sm:$0x1]
        %v2345 = vsel %vm1439, %v2342, 0.0
        %2346 = vadd.xlane.f32.xlu0 %v2345
        %v2347 = vpop.xlane.xlu0 %2346
        %v2348 = vmul.f32 %v2347, %v1443
        %v2349 = vsub.f32 %v2342, %v2348
        %v2350 = vmul.f32 %v2349, %v2349
        %v2351 = vsel %vm1439, %v2350, 0.0
        %2352 = vadd.xlane.f32.xlu0 %v2351
        %v2353 = vpop.xlane.xlu0 %2352
        %v2354 = vmul.f32 %v2353, %v1443
        %v2355 = vadd.f32 %v2354, 1e-05
        %v2356 = vrsqrt.pop %v2355
        %v2357 = vmul.f32 %v2349, %v2356
        %v2359 = vlaneseq
        %v2360 = vshrl.u32 %v2359, 7
        %v2361 = vsub.s32 0, %v2360
        %v2362 = vrot.slane %v2343, %v2361
        %v2364 = vmul.f32 %v2357, %v2362
        %v2366 = vlaneseq
        %v2367 = vshrl.u32 %v2366, 7
        %v2368 = vsub.s32 0, %v2367
        %v2369 = vrot.slane %v2344, %v2368
        %v2371 = vadd.f32 %v2364, %v2369
        %v2372 = vld [vmem:[%s55] sm:$0xf]
        %v2373 = vld [vmem:[%s55 + $0x4] sm:$0xf]
        %v2374 = vld [vmem:[%s55 + $0x8] sm:$0xf]
        %v2375 = vld [vmem:[%s55 + $0xc] sm:$0xf]
        %v2376 = vld [vmem:[%s55 + $0x10] sm:$0xf]
        %v2377 = vld [vmem:[%s55 + $0x14] sm:$0xf]
        %v2378 = vld [vmem:[%s55 + $0x18] sm:$0xf]
        %v2379 = vld [vmem:[%s55 + $0x1c] sm:$0xf]
        %v2380 = vpack.c.bf16 %v2371, %v2371
        %v2381 = vlaneseq
        %v2382 = vshrl.u32 %v2381, 7
        %v2383 = vsub.s32 0, %v2382
        %v2384 = vrot.slane %v1436, %v2383
        %v2393 = vunpack.c.l.b16 %v2372
        %v2394 = vunpack.c.l.b16 %v2373
        %v2395 = vunpack.c.l.b16 %v2374
        %v2396 = vunpack.c.l.b16 %v2375
        %v2397 = vunpack.c.l.b16 %v2376
        %v2398 = vunpack.c.l.b16 %v2377
        %v2399 = vunpack.c.l.b16 %v2378
        %v2400 = vunpack.c.l.b16 %v2379
        %v2401 = vpack.c.b16 %v2394, %v2393
        %v2402 = vpack.c.b16 %v2396, %v2395
        %v2403 = vpack.c.b16 %v2398, %v2397
        %v2404 = vpack.c.b16 %v2400, %v2399
        %v2410 = vsel %vm1439, %v2380, 0
        %2412 = vmatprep.subr.bf16.mxu0 0
        %2413 = vmatpush1.bf16.msra.mxu0 %v2401
        %2414 = vmatprep.subr.bf16.mxu0 0
        %2415 = vmatpush1.bf16.msra.mxu0 %v2402
        %2416 = vmatprep.subr.bf16.mxu0 0
        %2417 = vmatpush1.bf16.msra.mxu0 %v2403
        %2418 = vmatprep.subr.bf16.mxu0 0
        %2419 = vmatpush1.bf16.msra.mxu0 %v2404
        %2420 = vmatprep.subr.bf16.mxu0 0
        %2421 = vmatpush1.bf16.msra.mxu0 0
        %2422 = vmatprep.subr.bf16.mxu0 0
        %2423 = vmatpush1.bf16.msra.mxu0 0
        %2424 = vmatprep.subr.bf16.mxu0 0
        %2425 = vmatpush1.bf16.msra.mxu0 0
        %2426 = vmatprep.subr.bf16.mxu0 0
        %2427 = vmatpush1.bf16.msra.mxu0 0
        %2428 = vmatprep.subr.bf16.mxu0 0
        %2429 = vmatpush1.bf16.msra.mxu0 0
        %2430 = vmatprep.subr.bf16.mxu0 0
        %2431 = vmatpush1.bf16.msra.mxu0 0
        %2432 = vmatprep.subr.bf16.mxu0 0
        %2433 = vmatpush1.bf16.msra.mxu0 0
        %2434 = vmatprep.subr.bf16.mxu0 0
        %2435 = vmatpush1.bf16.msra.mxu0 0
        %2436 = vmatprep.subr.bf16.mxu0 0
        %2437 = vmatpush1.bf16.msra.mxu0 0
        %2438 = vmatprep.subr.bf16.mxu0 0
        %2439 = vmatpush1.bf16.msra.mxu0 0
        %2440 = vmatprep.subr.bf16.mxu0 0
        %2441 = vmatpush1.bf16.msra.mxu0 0
        %2442 = vmatprep.subr.bf16.mxu0 0
        %2443 = vmatpush1.bf16.msra.mxu0 0
        %2444 = vmatprep.mubr.bf16.mxu0 0
        %2445 = vmatmul.mubr.bf16.gmra.mrb[0].mxu0 %v2410
        %v2446 = vpop.f32.mrb[0].mxu0
        %v2447 = vadd.f32 %v2384, %v2446
        %v2448 = vpop.f32.mrb[0].mxu0
        %v2449 = vpop.f32.mrb[0].mxu0
        %v2450 = vpop.f32.mrb[0].mxu0
        %2451 = vdwg.mxu0
        %v2452 = vmul.f32 %v2447, 0.1
        %v2453 = vmax.f32 %v2447, %v2452
        %v2454 = vld [vmem:[%s57] sm:$0xf]
        %v2455 = vld [vmem:[%s57 + $0x4] sm:$0xf]
        %v2456 = vld [vmem:[%s57 + $0x8] sm:$0xf]
        %v2457 = vld [vmem:[%s57 + $0xc] sm:$0xf]
        %v2458 = vpack.c.bf16 %v2453, %v2453
        %v2463 = vunpack.c.l.b16 %v2454
        %v2464 = vunpack.c.l.b16 %v2455
        %v2465 = vunpack.c.l.b16 %v2456
        %v2466 = vunpack.c.l.b16 %v2457
        %v2467 = vpack.c.b16 %v2464, %v2463
        %v2468 = vpack.c.b16 %v2466, %v2465
        %v2472 = vsel %vm1384, %v2458, 0
        %2474 = vmatprep.subr.bf16.mxu0 0
        %2475 = vmatpush1.bf16.msra.mxu0 %v2467
        %2476 = vmatprep.subr.bf16.mxu0 0
        %2477 = vmatpush1.bf16.msra.mxu0 %v2468
        %2478 = vmatprep.subr.bf16.mxu0 0
        %2479 = vmatpush1.bf16.msra.mxu0 0
        %2480 = vmatprep.subr.bf16.mxu0 0
        %2481 = vmatpush1.bf16.msra.mxu0 0
        %2482 = vmatprep.subr.bf16.mxu0 0
        %2483 = vmatpush1.bf16.msra.mxu0 0
        %2484 = vmatprep.subr.bf16.mxu0 0
        %2485 = vmatpush1.bf16.msra.mxu0 0
        %2486 = vmatprep.subr.bf16.mxu0 0
        %2487 = vmatpush1.bf16.msra.mxu0 0
        %2488 = vmatprep.subr.bf16.mxu0 0
        %2489 = vmatpush1.bf16.msra.mxu0 0
        %2490 = vmatprep.subr.bf16.mxu0 0
        %2491 = vmatpush1.bf16.msra.mxu0 0
        %2492 = vmatprep.subr.bf16.mxu0 0
        %2493 = vmatpush1.bf16.msra.mxu0 0
        %2494 = vmatprep.subr.bf16.mxu0 0
        %2495 = vmatpush1.bf16.msra.mxu0 0
        %2496 = vmatprep.subr.bf16.mxu0 0
        %2497 = vmatpush1.bf16.msra.mxu0 0
        %2498 = vmatprep.subr.bf16.mxu0 0
        %2499 = vmatpush1.bf16.msra.mxu0 0
        %2500 = vmatprep.subr.bf16.mxu0 0
        %2501 = vmatpush1.bf16.msra.mxu0 0
        %2502 = vmatprep.subr.bf16.mxu0 0
        %2503 = vmatpush1.bf16.msra.mxu0 0
        %2504 = vmatprep.subr.bf16.mxu0 0
        %2505 = vmatpush1.bf16.msra.mxu0 0
        %2506 = vmatprep.mubr.bf16.mxu0 0
        %2507 = vmatmul.mubr.bf16.gmra.mrb[0].mxu0 %v2472
        %v2508 = vpop.f32.mrb[0].mxu0
        %v2509 = vadd.f32 0.0, %v2508
        %v2510 = vpop.f32.mrb[0].mxu0
        %v2511 = vpop.f32.mrb[0].mxu0
        %v2512 = vpop.f32.mrb[0].mxu0
        %2513 = vdwg.mxu0
        %v2514 = vadd.f32 %v2342, %v2509
        %v2515 = vld [vmem:[%s59] sm:$0x1]
        %v2517 = vlaneseq
        %v2518 = vshrl.u32 %v2517, 7
        %v2519 = vsub.s32 0, %v2518
        %v2520 = vrot.slane %v2515, %v2519
        %v2522 = vadd.f32 %v2514, %v2520
        %s2523 = scalar_lea.vmem [#allocation9], 1
        %v2524 = vld [vmem:[%s2523] sm:$0x1]
        %s2525 = scalar_lea.vmem [#allocation10], 1
        %v2526 = vld [vmem:[%s2525] sm:$0x1]
        %v2527 = vsel %vm1439, %v2522, 0.0
        %2528 = vadd.xlane.f32.xlu0 %v2527
        %v2529 = vpop.xlane.xlu0 %2528
        %v2530 = vmul.f32 %v2529, %v1443
        %v2531 = vsub.f32 %v2522, %v2530
        %v2532 = vmul.f32 %v2531, %v2531
        %v2533 = vsel %vm1439, %v2532, 0.0
        %2534 = vadd.xlane.f32.xlu0 %v2533
        %v2535 = vpop.xlane.xlu0 %2534
        %v2536 = vmul.f32 %v2535, %v1443
        %v2537 = vadd.f32 %v2536, 1e-05
        %v2538 = vrsqrt.pop %v2537
        %v2539 = vmul.f32 %v2531, %v2538
        %v2541 = vlaneseq
        %v2542 = vshrl.u32 %v2541, 7
        %v2543 = vsub.s32 0, %v2542
        %v2544 = vrot.slane %v2524, %v2543
        %v2546 = vmul.f32 %v2539, %v2544
        %v2548 = vlaneseq
        %v2549 = vshrl.u32 %v2548, 7
        %v2550 = vsub.s32 0, %v2549
        %v2551 = vrot.slane %v2526, %v2550
        %v2553 = vadd.f32 %v2546, %v2551
        %s2554 = scalar_lea.vmem %s23, 64
        %v2555 = vld [vmem:[%s2554] sm:$0xff]
        %v2556 = vld [vmem:[%s2554 + $0x8] sm:$0xff]
        %v2557 = vld [vmem:[%s2554 + $0x10] sm:$0xff]
        %v2558 = vld [vmem:[%s2554 + $0x18] sm:$0xff]
        %v2559 = vld [vmem:[%s2554 + $0x20] sm:$0xff]
        %v2560 = vld [vmem:[%s2554 + $0x28] sm:$0xff]
        %v2561 = vld [vmem:[%s2554 + $0x30] sm:$0xff]
        %v2562 = vld [vmem:[%s2554 + $0x38] sm:$0xff]
        %v2563 = vpack.c.bf16 %v2553, %v2553
        %s2564 = scalar_lea.vmem [#allocation12], 2
        %v2565 = vld [vmem:[%s2564] sm:$0x3]
        %v2567 = vlaneseq
        %v2568 = vshrl.u32 %v2567, 7
        %v2569 = vsub.s32 0, %v2568
        %v2570 = vrot.slane %v2565, %v2569
        %v2571 = vlaneseq
        %v2572 = vshrl.u32 %v2571, 7
        %v2573 = vsub.s32 1, %v2572
        %v2574 = vrot.slane %v2565, %v2573
        %v2585 = vunpack.c.l.b16 %v2555
        %v2586 = vunpack.c.h.b16 %v2555
        %v2587 = vunpack.c.l.b16 %v2556
        %v2588 = vunpack.c.h.b16 %v2556
        %v2589 = vunpack.c.l.b16 %v2557
        %v2590 = vunpack.c.h.b16 %v2557
        %v2591 = vunpack.c.l.b16 %v2558
        %v2592 = vunpack.c.h.b16 %v2558
        %v2593 = vunpack.c.l.b16 %v2559
        %v2594 = vunpack.c.h.b16 %v2559
        %v2595 = vunpack.c.l.b16 %v2560
        %v2596 = vunpack.c.h.b16 %v2560
        %v2597 = vunpack.c.l.b16 %v2561
        %v2598 = vunpack.c.h.b16 %v2561
        %v2599 = vunpack.c.l.b16 %v2562
        %v2600 = vunpack.c.h.b16 %v2562
        %v2601 = vpack.c.b16 %v2587, %v2585
        %v2602 = vpack.c.b16 %v2588, %v2586
        %v2603 = vpack.c.b16 %v2591, %v2589
        %v2604 = vpack.c.b16 %v2592, %v2590
        %v2605 = vpack.c.b16 %v2595, %v2593
        %v2606 = vpack.c.b16 %v2596, %v2594
        %v2607 = vpack.c.b16 %v2599, %v2597
        %v2608 = vpack.c.b16 %v2600, %v2598
        %v2618 = vsel %vm1439, %v2563, 0
        %2620 = vmatprep.subr.bf16.mxu0 %v2602
        %2621 = vmatpush1.bf16.msra.mxu0 %v2601
        %2622 = vmatprep.subr.bf16.mxu0 %v2604
        %2623 = vmatpush1.bf16.msra.mxu0 %v2603
        %2624 = vmatprep.subr.bf16.mxu0 %v2606
        %2625 = vmatpush1.bf16.msra.mxu0 %v2605
        %2626 = vmatprep.subr.bf16.mxu0 %v2608
        %2627 = vmatpush1.bf16.msra.mxu0 %v2607
        %2628 = vmatprep.subr.bf16.mxu0 0
        %2629 = vmatpush1.bf16.msra.mxu0 0
        %2630 = vmatprep.subr.bf16.mxu0 0
        %2631 = vmatpush1.bf16.msra.mxu0 0
        %2632 = vmatprep.subr.bf16.mxu0 0
        %2633 = vmatpush1.bf16.msra.mxu0 0
        %2634 = vmatprep.subr.bf16.mxu0 0
        %2635 = vmatpush1.bf16.msra.mxu0 0
        %2636 = vmatprep.subr.bf16.mxu0 0
        %2637 = vmatpush1.bf16.msra.mxu0 0
        %2638 = vmatprep.subr.bf16.mxu0 0
        %2639 = vmatpush1.bf16.msra.mxu0 0
        %2640 = vmatprep.subr.bf16.mxu0 0
        %2641 = vmatpush1.bf16.msra.mxu0 0
        %2642 = vmatprep.subr.bf16.mxu0 0
        %2643 = vmatpush1.bf16.msra.mxu0 0
        %2644 = vmatprep.subr.bf16.mxu0 0
        %2645 = vmatpush1.bf16.msra.mxu0 0
        %2646 = vmatprep.subr.bf16.mxu0 0
        %2647 = vmatpush1.bf16.msra.mxu0 0
        %2648 = vmatprep.subr.bf16.mxu0 0
        %2649 = vmatpush1.bf16.msra.mxu0 0
        %2650 = vmatprep.subr.bf16.mxu0 0
        %2651 = vmatpush1.bf16.msra.mxu0 0
        %2652 = vmatprep.mubr.bf16.mxu0 0
        %2653 = vmatmul.mubr.bf16.gmra.mrb[0].mxu0 %v2618
        %v2654 = vpop.f32.mrb[0].mxu0
        %v2655 = vadd.f32 %v2570, %v2654
        %v2656 = vpop.f32.mrb[0].mxu0
        %v2657 = vadd.f32 %v2574, %v2656
        %v2658 = vpop.f32.mrb[0].mxu0
        %v2659 = vpop.f32.mrb[0].mxu0
        %2660 = vdwg.mxu0
        %v2661 = vmul.f32 %v2655, 0.25
        %v2662 = vpack.c.bf16 %v2661, %v2661
        %v2663 = vpack.c.bf16 %v2655, %v2655
        %2665 = vrot.lane.b32.xlu0 %v2663, 64
        %v2666 = vpop.permute.xlu0 %2665
        %v2668 = vsel %vm1579, %v2662, 0
        %v2671 = vsel %vm1579, %v2666, 0
        %2673 = vmatprep.subr.bf16.mxu0 0
        %2674 = vmatpush1.bf16.xpose.msra.mxu0 %v2671
        %2675 = vmatprep.subr.bf16.mxu0 0
        %2676 = vmatpush1.bf16.xpose.msra.mxu0 0
        %2677 = vmatprep.subr.bf16.mxu0 0
        %2678 = vmatpush1.bf16.xpose.msra.mxu0 0
        %2679 = vmatprep.subr.bf16.mxu0 0
        %2680 = vmatpush1.bf16.xpose.msra.mxu0 0
        %2681 = vmatprep.subr.bf16.mxu0 0
        %2682 = vmatpush1.bf16.xpose.msra.mxu0 0
        %2683 = vmatprep.subr.bf16.mxu0 0
        %2684 = vmatpush1.bf16.xpose.msra.mxu0 0
        %2685 = vmatprep.subr.bf16.mxu0 0
        %2686 = vmatpush1.bf16.xpose.msra.mxu0 0
        %2687 = vmatprep.subr.bf16.mxu0 0
        %2688 = vmatpush1.bf16.xpose.msra.mxu0 0
        %2689 = vmatprep.subr.bf16.mxu0 0
        %2690 = vmatpush1.bf16.xpose.msra.mxu0 0
        %2691 = vmatprep.subr.bf16.mxu0 0
        %2692 = vmatpush1.bf16.xpose.msra.mxu0 0
        %2693 = vmatprep.subr.bf16.mxu0 0
        %2694 = vmatpush1.bf16.xpose.msra.mxu0 0
        %2695 = vmatprep.subr.bf16.mxu0 0
        %2696 = vmatpush1.bf16.xpose.msra.mxu0 0
        %2697 = vmatprep.subr.bf16.mxu0 0
        %2698 = vmatpush1.bf16.xpose.msra.mxu0 0
        %2699 = vmatprep.subr.bf16.mxu0 0
        %2700 = vmatpush1.bf16.xpose.msra.mxu0 0
        %2701 = vmatprep.subr.bf16.mxu0 0
        %2702 = vmatpush1.bf16.xpose.msra.mxu0 0
        %2703 = vmatprep.subr.bf16.mxu0 0
        %2704 = vmatpush1.bf16.xpose.msra.mxu0 0
        %2705 = vmatprep.mubr.bf16.mxu0 0
        %2706 = vmatmul.mubr.bf16.gmra.mrb[0].mxu0 %v2668
        %v2707 = vpop.f32.mrb[0].mxu0
        %v2708 = vadd.f32 0.0, %v2707
        %v2709 = vpop.f32.mrb[0].mxu0
        %v2710 = vpop.f32.mrb[0].mxu0
        %v2711 = vpop.f32.mrb[0].mxu0
        %2712 = vdwg.mxu0
        %v2713 = vsel %vm1626, %v2708, -inf
        %2714 = vmax.xlane.f32.xlu0 %v2713
        %v2715 = vpop.xlane.xlu0 %2714
        %v2716 = vsub.f32 %v2708, %v2715
        %v2717 = vmul.f32 %v2716, 1.442695
        %v2718 = vpow.pop %v2717
        %v2719 = vsel %vm1626, %v2718, 0.0
        %2720 = vadd.xlane.f32.xlu0 %v2719
        %v2721 = vpop.xlane.xlu0 %2720
        %v2722 = vrcp.pop %v2721
        %v2723 = vmul.f32 %v2718, %v2722
        %v2724 = vpack.c.bf16 %v2723, %v2723
        %v2725 = vpack.c.bf16 %v2657, %v2657
        %v2727 = vsel %vm1626, %v2724, 0
        %v2730 = vsel %vm1643, %v2725, 0
        %2732 = vmatprep.subr.bf16.mxu0 0
        %2733 = vmatpush1.bf16.msra.mxu0 %v2730
        %2734 = vmatprep.subr.bf16.mxu0 0
        %2735 = vmatpush1.bf16.msra.mxu0 0
        %2736 = vmatprep.subr.bf16.mxu0 0
        %2737 = vmatpush1.bf16.msra.mxu0 0
        %2738 = vmatprep.subr.bf16.mxu0 0
        %2739 = vmatpush1.bf16.msra.mxu0 0
        %2740 = vmatprep.subr.bf16.mxu0 0
        %2741 = vmatpush1.bf16.msra.mxu0 0
        %2742 = vmatprep.subr.bf16.mxu0 0
        %2743 = vmatpush1.bf16.msra.mxu0 0
        %2744 = vmatprep.subr.bf16.mxu0 0
        %2745 = vmatpush1.bf16.msra.mxu0 0
        %2746 = vmatprep.subr.bf16.mxu0 0
        %2747 = vmatpush1.bf16.msra.mxu0 0
        %2748 = vmatprep.subr.bf16.mxu0 0
        %2749 = vmatpush1.bf16.msra.mxu0 0
        %2750 = vmatprep.subr.bf16.mxu0 0
        %2751 = vmatpush1.bf16.msra.mxu0 0
        %2752 = vmatprep.subr.bf16.mxu0 0
        %2753 = vmatpush1.bf16.msra.mxu0 0
        %2754 = vmatprep.subr.bf16.mxu0 0
        %2755 = vmatpush1.bf16.msra.mxu0 0
        %2756 = vmatprep.subr.bf16.mxu0 0
        %2757 = vmatpush1.bf16.msra.mxu0 0
        %2758 = vmatprep.subr.bf16.mxu0 0
        %2759 = vmatpush1.bf16.msra.mxu0 0
        %2760 = vmatprep.subr.bf16.mxu0 0
        %2761 = vmatpush1.bf16.msra.mxu0 0
        %2762 = vmatprep.subr.bf16.mxu0 0
        %2763 = vmatpush1.bf16.msra.mxu0 0
        %2764 = vmatprep.mubr.bf16.mxu0 0
        %2765 = vmatmul.mubr.bf16.gmra.mrb[0].mxu0 %v2727
        %v2766 = vpop.f32.mrb[0].mxu0
        %v2767 = vadd.f32 0.0, %v2766
        %v2768 = vpop.f32.mrb[0].mxu0
        %v2769 = vpop.f32.mrb[0].mxu0
        %v2770 = vpop.f32.mrb[0].mxu0
        %2771 = vdwg.mxu0
        %2773 = vrot.lane.b32.xlu0 %v2662, 112
        %v2774 = vpop.permute.xlu0 %2773
        %2775 = vrot.lane.b32.xlu0 %v2663, 48
        %v2776 = vpop.permute.xlu0 %2775
        %v2778 = vsel %vm1579, %v2774, 0
        %v2781 = vsel %vm1579, %v2776, 0
        %2783 = vmatprep.subr.bf16.mxu0 0
        %2784 = vmatpush1.bf16.xpose.msra.mxu0 %v2781
        %2785 = vmatprep.subr.bf16.mxu0 0
        %2786 = vmatpush1.bf16.xpose.msra.mxu0 0
        %2787 = vmatprep.subr.bf16.mxu0 0
        %2788 = vmatpush1.bf16.xpose.msra.mxu0 0
        %2789 = vmatprep.subr.bf16.mxu0 0
        %2790 = vmatpush1.bf16.xpose.msra.mxu0 0
        %2791 = vmatprep.subr.bf16.mxu0 0
        %2792 = vmatpush1.bf16.xpose.msra.mxu0 0
        %2793 = vmatprep.subr.bf16.mxu0 0
        %2794 = vmatpush1.bf16.xpose.msra.mxu0 0
        %2795 = vmatprep.subr.bf16.mxu0 0
        %2796 = vmatpush1.bf16.xpose.msra.mxu0 0
        %2797 = vmatprep.subr.bf16.mxu0 0
        %2798 = vmatpush1.bf16.xpose.msra.mxu0 0
        %2799 = vmatprep.subr.bf16.mxu0 0
        %2800 = vmatpush1.bf16.xpose.msra.mxu0 0
        %2801 = vmatprep.subr.bf16.mxu0 0
        %2802 = vmatpush1.bf16.xpose.msra.mxu0 0
        %2803 = vmatprep.subr.bf16.mxu0 0
        %2804 = vmatpush1.bf16.xpose.msra.mxu0 0
        %2805 = vmatprep.subr.bf16.mxu0 0
        %2806 = vmatpush1.bf16.xpose.msra.mxu0 0
        %2807 = vmatprep.subr.bf16.mxu0 0
        %2808 = vmatpush1.bf16.xpose.msra.mxu0 0
        %2809 = vmatprep.subr.bf16.mxu0 0
        %2810 = vmatpush1.bf16.xpose.msra.mxu0 0
        %2811 = vmatprep.subr.bf16.mxu0 0
        %2812 = vmatpush1.bf16.xpose.msra.mxu0 0
        %2813 = vmatprep.subr.bf16.mxu0 0
        %2814 = vmatpush1.bf16.xpose.msra.mxu0 0
        %2815 = vmatprep.mubr.bf16.mxu0 0
        %2816 = vmatmul.mubr.bf16.gmra.mrb[0].mxu0 %v2778
        %v2817 = vpop.f32.mrb[0].mxu0
        %v2818 = vadd.f32 0.0, %v2817
        %v2819 = vpop.f32.mrb[0].mxu0
        %v2820 = vpop.f32.mrb[0].mxu0
        %v2821 = vpop.f32.mrb[0].mxu0
        %2822 = vdwg.mxu0
        %v2823 = vsel %vm1626, %v2818, -inf
        %2824 = vmax.xlane.f32.xlu0 %v2823
        %v2825 = vpop.xlane.xlu0 %2824
        %v2826 = vsub.f32 %v2818, %v2825
        %v2827 = vmul.f32 %v2826, 1.442695
        %v2828 = vpow.pop %v2827
        %v2829 = vsel %vm1626, %v2828, 0.0
        %2830 = vadd.xlane.f32.xlu0 %v2829
        %v2831 = vpop.xlane.xlu0 %2830
        %v2832 = vrcp.pop %v2831
        %v2833 = vmul.f32 %v2828, %v2832
        %v2834 = vpack.c.bf16 %v2833, %v2833
        %2836 = vrot.lane.b32.xlu0 %v2725, 112
        %v2837 = vpop.permute.xlu0 %2836
        %v2839 = vsel %vm1626, %v2834, 0
        %v2842 = vsel %vm1643, %v2837, 0
        %2844 = vmatprep.subr.bf16.mxu0 0
        %2845 = vmatpush1.bf16.msra.mxu0 %v2842
        %2846 = vmatprep.subr.bf16.mxu0 0
        %2847 = vmatpush1.bf16.msra.mxu0 0
        %2848 = vmatprep.subr.bf16.mxu0 0
        %2849 = vmatpush1.bf16.msra.mxu0 0
        %2850 = vmatprep.subr.bf16.mxu0 0
        %2851 = vmatpush1.bf16.msra.mxu0 0
        %2852 = vmatprep.subr.bf16.mxu0 0
        %2853 = vmatpush1.bf16.msra.mxu0 0
        %2854 = vmatprep.subr.bf16.mxu0 0
        %2855 = vmatpush1.bf16.msra.mxu0 0
        %2856 = vmatprep.subr.bf16.mxu0 0
        %2857 = vmatpush1.bf16.msra.mxu0 0
        %2858 = vmatprep.subr.bf16.mxu0 0
        %2859 = vmatpush1.bf16.msra.mxu0 0
        %2860 = vmatprep.subr.bf16.mxu0 0
        %2861 = vmatpush1.bf16.msra.mxu0 0
        %2862 = vmatprep.subr.bf16.mxu0 0
        %2863 = vmatpush1.bf16.msra.mxu0 0
        %2864 = vmatprep.subr.bf16.mxu0 0
        %2865 = vmatpush1.bf16.msra.mxu0 0
        %2866 = vmatprep.subr.bf16.mxu0 0
        %2867 = vmatpush1.bf16.msra.mxu0 0
        %2868 = vmatprep.subr.bf16.mxu0 0
        %2869 = vmatpush1.bf16.msra.mxu0 0
        %2870 = vmatprep.subr.bf16.mxu0 0
        %2871 = vmatpush1.bf16.msra.mxu0 0
        %2872 = vmatprep.subr.bf16.mxu0 0
        %2873 = vmatpush1.bf16.msra.mxu0 0
        %2874 = vmatprep.subr.bf16.mxu0 0
        %2875 = vmatpush1.bf16.msra.mxu0 0
        %2876 = vmatprep.mubr.bf16.mxu0 0
        %2877 = vmatmul.mubr.bf16.gmra.mrb[0].mxu0 %v2839
        %v2878 = vpop.f32.mrb[0].mxu0
        %v2879 = vadd.f32 0.0, %v2878
        %v2880 = vpop.f32.mrb[0].mxu0
        %v2881 = vpop.f32.mrb[0].mxu0
        %v2882 = vpop.f32.mrb[0].mxu0
        %2883 = vdwg.mxu0
        %2884 = vrot.lane.b32.xlu0 %v2662, 96
        %v2885 = vpop.permute.xlu0 %2884
        %2886 = vrot.lane.b32.xlu0 %v2663, 32
        %v2887 = vpop.permute.xlu0 %2886
        %v2889 = vsel %vm1579, %v2885, 0
        %v2892 = vsel %vm1579, %v2887, 0
        %2894 = vmatprep.subr.bf16.mxu0 0
        %2895 = vmatpush1.bf16.xpose.msra.mxu0 %v2892
        %2896 = vmatprep.subr.bf16.mxu0 0
        %2897 = vmatpush1.bf16.xpose.msra.mxu0 0
        %2898 = vmatprep.subr.bf16.mxu0 0
        %2899 = vmatpush1.bf16.xpose.msra.mxu0 0
        %2900 = vmatprep.subr.bf16.mxu0 0
        %2901 = vmatpush1.bf16.xpose.msra.mxu0 0
        %2902 = vmatprep.subr.bf16.mxu0 0
        %2903 = vmatpush1.bf16.xpose.msra.mxu0 0
        %2904 = vmatprep.subr.bf16.mxu0 0
        %2905 = vmatpush1.bf16.xpose.msra.mxu0 0
        %2906 = vmatprep.subr.bf16.mxu0 0
        %2907 = vmatpush1.bf16.xpose.msra.mxu0 0
        %2908 = vmatprep.subr.bf16.mxu0 0
        %2909 = vmatpush1.bf16.xpose.msra.mxu0 0
        %2910 = vmatprep.subr.bf16.mxu0 0
        %2911 = vmatpush1.bf16.xpose.msra.mxu0 0
        %2912 = vmatprep.subr.bf16.mxu0 0
        %2913 = vmatpush1.bf16.xpose.msra.mxu0 0
        %2914 = vmatprep.subr.bf16.mxu0 0
        %2915 = vmatpush1.bf16.xpose.msra.mxu0 0
        %2916 = vmatprep.subr.bf16.mxu0 0
        %2917 = vmatpush1.bf16.xpose.msra.mxu0 0
        %2918 = vmatprep.subr.bf16.mxu0 0
        %2919 = vmatpush1.bf16.xpose.msra.mxu0 0
        %2920 = vmatprep.subr.bf16.mxu0 0
        %2921 = vmatpush1.bf16.xpose.msra.mxu0 0
        %2922 = vmatprep.subr.bf16.mxu0 0
        %2923 = vmatpush1.bf16.xpose.msra.mxu0 0
        %2924 = vmatprep.subr.bf16.mxu0 0
        %2925 = vmatpush1.bf16.xpose.msra.mxu0 0
        %2926 = vmatprep.mubr.bf16.mxu0 0
        %2927 = vmatmul.mubr.bf16.gmra.mrb[0].mxu0 %v2889
        %v2928 = vpop.f32.mrb[0].mxu0
        %v2929 = vadd.f32 0.0, %v2928
        %v2930 = vpop.f32.mrb[0].mxu0
        %v2931 = vpop.f32.mrb[0].mxu0
        %v2932 = vpop.f32.mrb[0].mxu0
        %2933 = vdwg.mxu0
        %v2934 = vsel %vm1626, %v2929, -inf
        %2935 = vmax.xlane.f32.xlu0 %v2934
        %v2936 = vpop.xlane.xlu0 %2935
        %v2937 = vsub.f32 %v2929, %v2936
        %v2938 = vmul.f32 %v2937, 1.442695
        %v2939 = vpow.pop %v2938
        %v2940 = vsel %vm1626, %v2939, 0.0
        %2941 = vadd.xlane.f32.xlu0 %v2940
        %v2942 = vpop.xlane.xlu0 %2941
        %v2943 = vrcp.pop %v2942
        %v2944 = vmul.f32 %v2939, %v2943
        %v2945 = vpack.c.bf16 %v2944, %v2944
        %2946 = vrot.lane.b32.xlu0 %v2725, 96
        %v2947 = vpop.permute.xlu0 %2946
        %v2949 = vsel %vm1626, %v2945, 0
        %v2952 = vsel %vm1643, %v2947, 0
        %2954 = vmatprep.subr.bf16.mxu0 0
        %2955 = vmatpush1.bf16.msra.mxu0 %v2952
        %2956 = vmatprep.subr.bf16.mxu0 0
        %2957 = vmatpush1.bf16.msra.mxu0 0
        %2958 = vmatprep.subr.bf16.mxu0 0
        %2959 = vmatpush1.bf16.msra.mxu0 0
        %2960 = vmatprep.subr.bf16.mxu0 0
        %2961 = vmatpush1.bf16.msra.mxu0 0
        %2962 = vmatprep.subr.bf16.mxu0 0
        %2963 = vmatpush1.bf16.msra.mxu0 0
        %2964 = vmatprep.subr.bf16.mxu0 0
        %2965 = vmatpush1.bf16.msra.mxu0 0
        %2966 = vmatprep.subr.bf16.mxu0 0
        %2967 = vmatpush1.bf16.msra.mxu0 0
        %2968 = vmatprep.subr.bf16.mxu0 0
        %2969 = vmatpush1.bf16.msra.mxu0 0
        %2970 = vmatprep.subr.bf16.mxu0 0
        %2971 = vmatpush1.bf16.msra.mxu0 0
        %2972 = vmatprep.subr.bf16.mxu0 0
        %2973 = vmatpush1.bf16.msra.mxu0 0
        %2974 = vmatprep.subr.bf16.mxu0 0
        %2975 = vmatpush1.bf16.msra.mxu0 0
        %2976 = vmatprep.subr.bf16.mxu0 0
        %2977 = vmatpush1.bf16.msra.mxu0 0
        %2978 = vmatprep.subr.bf16.mxu0 0
        %2979 = vmatpush1.bf16.msra.mxu0 0
        %2980 = vmatprep.subr.bf16.mxu0 0
        %2981 = vmatpush1.bf16.msra.mxu0 0
        %2982 = vmatprep.subr.bf16.mxu0 0
        %2983 = vmatpush1.bf16.msra.mxu0 0
        %2984 = vmatprep.subr.bf16.mxu0 0
        %2985 = vmatpush1.bf16.msra.mxu0 0
        %2986 = vmatprep.mubr.bf16.mxu0 0
        %2987 = vmatmul.mubr.bf16.gmra.mrb[0].mxu0 %v2949
        %v2988 = vpop.f32.mrb[0].mxu0
        %v2989 = vadd.f32 0.0, %v2988
        %v2990 = vpop.f32.mrb[0].mxu0
        %v2991 = vpop.f32.mrb[0].mxu0
        %v2992 = vpop.f32.mrb[0].mxu0
        %2993 = vdwg.mxu0
        %2994 = vrot.lane.b32.xlu0 %v2662, 80
        %v2995 = vpop.permute.xlu0 %2994
        %2996 = vrot.lane.b32.xlu0 %v2663, 16
        %v2997 = vpop.permute.xlu0 %2996
        %v2999 = vsel %vm1579, %v2995, 0
        %v3002 = vsel %vm1579, %v2997, 0
        %3004 = vmatprep.subr.bf16.mxu0 0
        %3005 = vmatpush1.bf16.xpose.msra.mxu0 %v3002
        %3006 = vmatprep.subr.bf16.mxu0 0
        %3007 = vmatpush1.bf16.xpose.msra.mxu0 0
        %3008 = vmatprep.subr.bf16.mxu0 0
        %3009 = vmatpush1.bf16.xpose.msra.mxu0 0
        %3010 = vmatprep.subr.bf16.mxu0 0
        %3011 = vmatpush1.bf16.xpose.msra.mxu0 0
        %3012 = vmatprep.subr.bf16.mxu0 0
        %3013 = vmatpush1.bf16.xpose.msra.mxu0 0
        %3014 = vmatprep.subr.bf16.mxu0 0
        %3015 = vmatpush1.bf16.xpose.msra.mxu0 0
        %3016 = vmatprep.subr.bf16.mxu0 0
        %3017 = vmatpush1.bf16.xpose.msra.mxu0 0
        %3018 = vmatprep.subr.bf16.mxu0 0
        %3019 = vmatpush1.bf16.xpose.msra.mxu0 0
        %3020 = vmatprep.subr.bf16.mxu0 0
        %3021 = vmatpush1.bf16.xpose.msra.mxu0 0
        %3022 = vmatprep.subr.bf16.mxu0 0
        %3023 = vmatpush1.bf16.xpose.msra.mxu0 0
        %3024 = vmatprep.subr.bf16.mxu0 0
        %3025 = vmatpush1.bf16.xpose.msra.mxu0 0
        %3026 = vmatprep.subr.bf16.mxu0 0
        %3027 = vmatpush1.bf16.xpose.msra.mxu0 0
        %3028 = vmatprep.subr.bf16.mxu0 0
        %3029 = vmatpush1.bf16.xpose.msra.mxu0 0
        %3030 = vmatprep.subr.bf16.mxu0 0
        %3031 = vmatpush1.bf16.xpose.msra.mxu0 0
        %3032 = vmatprep.subr.bf16.mxu0 0
        %3033 = vmatpush1.bf16.xpose.msra.mxu0 0
        %3034 = vmatprep.subr.bf16.mxu0 0
        %3035 = vmatpush1.bf16.xpose.msra.mxu0 0
        %3036 = vmatprep.mubr.bf16.mxu0 0
        %3037 = vmatmul.mubr.bf16.gmra.mrb[0].mxu0 %v2999
        %v3038 = vpop.f32.mrb[0].mxu0
        %v3039 = vadd.f32 0.0, %v3038
        %v3040 = vpop.f32.mrb[0].mxu0
        %v3041 = vpop.f32.mrb[0].mxu0
        %v3042 = vpop.f32.mrb[0].mxu0
        %3043 = vdwg.mxu0
        %v3044 = vsel %vm1626, %v3039, -inf
        %3045 = vmax.xlane.f32.xlu0 %v3044
        %v3046 = vpop.xlane.xlu0 %3045
        %v3047 = vsub.f32 %v3039, %v3046
        %v3048 = vmul.f32 %v3047, 1.442695
        %v3049 = vpow.pop %v3048
        %v3050 = vsel %vm1626, %v3049, 0.0
        %3051 = vadd.xlane.f32.xlu0 %v3050
        %v3052 = vpop.xlane.xlu0 %3051
        %v3053 = vrcp.pop %v3052
        %v3054 = vmul.f32 %v3049, %v3053
        %v3055 = vpack.c.bf16 %v3054, %v3054
        %3056 = vrot.lane.b32.xlu0 %v2725, 80
        %v3057 = vpop.permute.xlu0 %3056
        %v3059 = vsel %vm1626, %v3055, 0
        %v3062 = vsel %vm1643, %v3057, 0
        %3064 = vmatprep.subr.bf16.mxu0 0
        %3065 = vmatpush1.bf16.msra.mxu0 %v3062
        %3066 = vmatprep.subr.bf16.mxu0 0
        %3067 = vmatpush1.bf16.msra.mxu0 0
        %3068 = vmatprep.subr.bf16.mxu0 0
        %3069 = vmatpush1.bf16.msra.mxu0 0
        %3070 = vmatprep.subr.bf16.mxu0 0
        %3071 = vmatpush1.bf16.msra.mxu0 0
        %3072 = vmatprep.subr.bf16.mxu0 0
        %3073 = vmatpush1.bf16.msra.mxu0 0
        %3074 = vmatprep.subr.bf16.mxu0 0
        %3075 = vmatpush1.bf16.msra.mxu0 0
        %3076 = vmatprep.subr.bf16.mxu0 0
        %3077 = vmatpush1.bf16.msra.mxu0 0
        %3078 = vmatprep.subr.bf16.mxu0 0
        %3079 = vmatpush1.bf16.msra.mxu0 0
        %3080 = vmatprep.subr.bf16.mxu0 0
        %3081 = vmatpush1.bf16.msra.mxu0 0
        %3082 = vmatprep.subr.bf16.mxu0 0
        %3083 = vmatpush1.bf16.msra.mxu0 0
        %3084 = vmatprep.subr.bf16.mxu0 0
        %3085 = vmatpush1.bf16.msra.mxu0 0
        %3086 = vmatprep.subr.bf16.mxu0 0
        %3087 = vmatpush1.bf16.msra.mxu0 0
        %3088 = vmatprep.subr.bf16.mxu0 0
        %3089 = vmatpush1.bf16.msra.mxu0 0
        %3090 = vmatprep.subr.bf16.mxu0 0
        %3091 = vmatpush1.bf16.msra.mxu0 0
        %3092 = vmatprep.subr.bf16.mxu0 0
        %3093 = vmatpush1.bf16.msra.mxu0 0
        %3094 = vmatprep.subr.bf16.mxu0 0
        %3095 = vmatpush1.bf16.msra.mxu0 0
        %3096 = vmatprep.mubr.bf16.mxu0 0
        %3097 = vmatmul.mubr.bf16.gmra.mrb[0].mxu0 %v3059
        %v3098 = vpop.f32.mrb[0].mxu0
        %v3099 = vadd.f32 0.0, %v3098
        %v3100 = vpop.f32.mrb[0].mxu0
        %v3101 = vpop.f32.mrb[0].mxu0
        %v3102 = vpop.f32.mrb[0].mxu0
        %3103 = vdwg.mxu0
        %3105 = vrot.lane.b32.xlu0 %v2879, 16
        %v3106 = vpop.permute.xlu0 %3105
        %3109 = vrot.lane.b32.xlu0 %v2989, 32
        %v3110 = vpop.permute.xlu0 %3109
        %3113 = vrot.lane.b32.xlu0 %v3099, 48
        %v3114 = vpop.permute.xlu0 %3113
        %v3116 = vsel %vm1579, %v2767, %v3106
        %v3117 = vsel %vm1384, %v3116, %v3110
        %v3118 = vsel %vm2033, %v3117, %v3114
        %s3119 = scalar_lea.vmem [#allocation13], 1
        %v3120 = vld [vmem:[%s3119] sm:$0x1]
        %s3121 = scalar_lea.vmem %s29, 1
        %v3122 = vld [vmem:[%s3121] sm:$0x1]
        %v3123 = vsel %vm1439, %v3118, 0.0
        %3124 = vadd.xlane.f32.xlu0 %v3123
        %v3125 = vpop.xlane.xlu0 %3124
        %v3126 = vmul.f32 %v3125, %v1443
        %v3127 = vsub.f32 %v3118, %v3126
        %v3128 = vmul.f32 %v3127, %v3127
        %v3129 = vsel %vm1439, %v3128, 0.0
        %3130 = vadd.xlane.f32.xlu0 %v3129
        %v3131 = vpop.xlane.xlu0 %3130
        %v3132 = vmul.f32 %v3131, %v1443
        %v3133 = vadd.f32 %v3132, 1e-05
        %v3134 = vrsqrt.pop %v3133
        %v3135 = vmul.f32 %v3127, %v3134
        %v3137 = vlaneseq
        %v3138 = vshrl.u32 %v3137, 7
        %v3139 = vsub.s32 0, %v3138
        %v3140 = vrot.slane %v3120, %v3139
        %v3142 = vmul.f32 %v3135, %v3140
        %v3144 = vlaneseq
        %v3145 = vshrl.u32 %v3144, 7
        %v3146 = vsub.s32 0, %v3145
        %v3147 = vrot.slane %v3122, %v3146
        %v3149 = vadd.f32 %v3142, %v3147
        %s3150 = scalar_lea.vmem %s31, 32
        %v3151 = vld [vmem:[%s3150] sm:$0xf]
        %v3152 = vld [vmem:[%s3150 + $0x4] sm:$0xf]
        %v3153 = vld [vmem:[%s3150 + $0x8] sm:$0xf]
        %v3154 = vld [vmem:[%s3150 + $0xc] sm:$0xf]
        %v3155 = vld [vmem:[%s3150 + $0x10] sm:$0xf]
        %v3156 = vld [vmem:[%s3150 + $0x14] sm:$0xf]
        %v3157 = vld [vmem:[%s3150 + $0x18] sm:$0xf]
        %v3158 = vld [vmem:[%s3150 + $0x1c] sm:$0xf]
        %v3159 = vpack.c.bf16 %v3149, %v3149
        %v3168 = vunpack.c.l.b16 %v3151
        %v3169 = vunpack.c.l.b16 %v3152
        %v3170 = vunpack.c.l.b16 %v3153
        %v3171 = vunpack.c.l.b16 %v3154
        %v3172 = vunpack.c.l.b16 %v3155
        %v3173 = vunpack.c.l.b16 %v3156
        %v3174 = vunpack.c.l.b16 %v3157
        %v3175 = vunpack.c.l.b16 %v3158
        %v3176 = vpack.c.b16 %v3169, %v3168
        %v3177 = vpack.c.b16 %v3171, %v3170
        %v3178 = vpack.c.b16 %v3173, %v3172
        %v3179 = vpack.c.b16 %v3175, %v3174
        %v3185 = vsel %vm1439, %v3159, 0
        %3187 = vmatprep.subr.bf16.mxu0 0
        %3188 = vmatpush1.bf16.msra.mxu0 %v3176
        %3189 = vmatprep.subr.bf16.mxu0 0
        %3190 = vmatpush1.bf16.msra.mxu0 %v3177
        %3191 = vmatprep.subr.bf16.mxu0 0
        %3192 = vmatpush1.bf16.msra.mxu0 %v3178
        %3193 = vmatprep.subr.bf16.mxu0 0
        %3194 = vmatpush1.bf16.msra.mxu0 %v3179
        %3195 = vmatprep.subr.bf16.mxu0 0
        %3196 = vmatpush1.bf16.msra.mxu0 0
        %3197 = vmatprep.subr.bf16.mxu0 0
        %3198 = vmatpush1.bf16.msra.mxu0 0
        %3199 = vmatprep.subr.bf16.mxu0 0
        %3200 = vmatpush1.bf16.msra.mxu0 0
        %3201 = vmatprep.subr.bf16.mxu0 0
        %3202 = vmatpush1.bf16.msra.mxu0 0
        %3203 = vmatprep.subr.bf16.mxu0 0
        %3204 = vmatpush1.bf16.msra.mxu0 0
        %3205 = vmatprep.subr.bf16.mxu0 0
        %3206 = vmatpush1.bf16.msra.mxu0 0
        %3207 = vmatprep.subr.bf16.mxu0 0
        %3208 = vmatpush1.bf16.msra.mxu0 0
        %3209 = vmatprep.subr.bf16.mxu0 0
        %3210 = vmatpush1.bf16.msra.mxu0 0
        %3211 = vmatprep.subr.bf16.mxu0 0
        %3212 = vmatpush1.bf16.msra.mxu0 0
        %3213 = vmatprep.subr.bf16.mxu0 0
        %3214 = vmatpush1.bf16.msra.mxu0 0
        %3215 = vmatprep.subr.bf16.mxu0 0
        %3216 = vmatpush1.bf16.msra.mxu0 0
        %3217 = vmatprep.subr.bf16.mxu0 0
        %3218 = vmatpush1.bf16.msra.mxu0 0
        %3219 = vmatprep.mubr.bf16.mxu0 0
        %3220 = vmatmul.mubr.bf16.gmra.mrb[0].mxu0 %v3185
        %v3221 = vpop.f32.mrb[0].mxu0
        %v3222 = vadd.f32 0.0, %v3221
        %v3223 = vpop.f32.mrb[0].mxu0
        %v3224 = vpop.f32.mrb[0].mxu0
        %v3225 = vpop.f32.mrb[0].mxu0
        %3226 = vdwg.mxu0
        %v3227 = vadd.f32 %v2522, %v3222
        %s3228 = scalar_lea.vmem [#allocation15], 1
        %v3229 = vld [vmem:[%s3228] sm:$0x1]
        %v3231 = vlaneseq
        %v3232 = vshrl.u32 %v3231, 7
        %v3233 = vsub.s32 0, %v3232
        %v3234 = vrot.slane %v3229, %v3233
        %v3236 = vadd.f32 %v3227, %v3234
        %s3237 = scalar_lea.vmem [#allocation16], 1
        %v3238 = vld [vmem:[%s3237] sm:$0x1]
        %s3239 = scalar_lea.vmem [#allocation18], 1
        %v3240 = vld [vmem:[%s3239] sm:$0x1]
        %v3241 = vmul.f32 %v2164, %v3238
        %v3242 = vadd.f32 %v3241, %v3240
        %s3243 = scalar_lea.vmem %s39, 32
        %v3244 = vld [vmem:[%s3243] sm:$0xf]
        %v3245 = vld [vmem:[%s3243 + $0x4] sm:$0xf]
        %v3246 = vld [vmem:[%s3243 + $0x8] sm:$0xf]
        %v3247 = vld [vmem:[%s3243 + $0xc] sm:$0xf]
        %v3248 = vld [vmem:[%s3243 + $0x10] sm:$0xf]
        %v3249 = vld [vmem:[%s3243 + $0x14] sm:$0xf]
        %v3250 = vld [vmem:[%s3243 + $0x18] sm:$0xf]
        %v3251 = vld [vmem:[%s3243 + $0x1c] sm:$0xf]
        %v3252 = vpack.c.bf16 %v3242, %v3242
        %s3253 = scalar_lea.vmem %s41, 1
        %v3254 = vld [vmem:[%s3253] sm:$0x1]
        %v3263 = vunpack.c.l.b16 %v3244
        %v3264 = vunpack.c.l.b16 %v3245
        %v3265 = vunpack.c.l.b16 %v3246
        %v3266 = vunpack.c.l.b16 %v3247
        %v3267 = vunpack.c.l.b16 %v3248
        %v3268 = vunpack.c.l.b16 %v3249
        %v3269 = vunpack.c.l.b16 %v3250
        %v3270 = vunpack.c.l.b16 %v3251
        %v3271 = vpack.c.b16 %v3264, %v3263
        %v3272 = vpack.c.b16 %v3266, %v3265
        %v3273 = vpack.c.b16 %v3268, %v3267
        %v3274 = vpack.c.b16 %v3270, %v3269
        %v3280 = vsel %vm1439, %v3252, 0
        %3282 = vmatprep.subr.bf16.mxu0 0
        %3283 = vmatpush1.bf16.msra.mxu0 %v3271
        %3284 = vmatprep.subr.bf16.mxu0 0
        %3285 = vmatpush1.bf16.msra.mxu0 %v3272
        %3286 = vmatprep.subr.bf16.mxu0 0
        %3287 = vmatpush1.bf16.msra.mxu0 %v3273
        %3288 = vmatprep.subr.bf16.mxu0 0
        %3289 = vmatpush1.bf16.msra.mxu0 %v3274
        %3290 = vmatprep.subr.bf16.mxu0 0
        %3291 = vmatpush1.bf16.msra.mxu0 0
        %3292 = vmatprep.subr.bf16.mxu0 0
        %3293 = vmatpush1.bf16.msra.mxu0 0
        %3294 = vmatprep.subr.bf16.mxu0 0
        %3295 = vmatpush1.bf16.msra.mxu0 0
        %3296 = vmatprep.subr.bf16.mxu0 0
        %3297 = vmatpush1.bf16.msra.mxu0 0
        %3298 = vmatprep.subr.bf16.mxu0 0
        %3299 = vmatpush1.bf16.msra.mxu0 0
        %3300 = vmatprep.subr.bf16.mxu0 0
        %3301 = vmatpush1.bf16.msra.mxu0 0
        %3302 = vmatprep.subr.bf16.mxu0 0
        %3303 = vmatpush1.bf16.msra.mxu0 0
        %3304 = vmatprep.subr.bf16.mxu0 0
        %3305 = vmatpush1.bf16.msra.mxu0 0
        %3306 = vmatprep.subr.bf16.mxu0 0
        %3307 = vmatpush1.bf16.msra.mxu0 0
        %3308 = vmatprep.subr.bf16.mxu0 0
        %3309 = vmatpush1.bf16.msra.mxu0 0
        %3310 = vmatprep.subr.bf16.mxu0 0
        %3311 = vmatpush1.bf16.msra.mxu0 0
        %3312 = vmatprep.subr.bf16.mxu0 0
        %3313 = vmatpush1.bf16.msra.mxu0 0
        %3314 = vmatprep.mubr.bf16.mxu0 0
        %3315 = vmatmul.mubr.bf16.gmra.mrb[0].mxu0 %v3280
        %v3316 = vpop.f32.mrb[0].mxu0
        %v3317 = vadd.f32 %v3254, %v3316
        %v3318 = vpop.f32.mrb[0].mxu0
        %v3319 = vpop.f32.mrb[0].mxu0
        %v3320 = vpop.f32.mrb[0].mxu0
        %3321 = vdwg.mxu0
        %s3322 = scalar_lea.vmem %s43, 1
        %v3323 = vld [vmem:[%s3322] sm:$0x1]
        %s3324 = scalar_lea.vmem %s45, 1
        %v3325 = vld [vmem:[%s3324] sm:$0x1]
        %v3326 = vsel %vm2151, %v3317, 0.0
        %3327 = vadd.xlane.f32.xlu0 %v3326
        %v3328 = vpop.xlane.xlu0 %3327
        %v3329 = vmul.f32 %v3328, %v1443
        %v3330 = vsub.f32 %v3317, %v3329
        %v3331 = vmul.f32 %v3330, %v3330
        %v3332 = vsel %vm2151, %v3331, 0.0
        %3333 = vadd.xlane.f32.xlu0 %v3332
        %v3334 = vpop.xlane.xlu0 %3333
        %v3335 = vmul.f32 %v3334, %v1443
        %v3336 = vadd.f32 %v3335, 1e-05
        %v3337 = vrsqrt.pop %v3336
        %v3338 = vmul.f32 %v3330, %v3337
        %v3339 = vmul.f32 %v3338, %v3323
        %v3340 = vadd.f32 %v3339, %v3325
        %s3341 = scalar_lea.vmem %s47, 32
        %v3342 = vld [vmem:[%s3341] sm:$0xf]
        %v3343 = vld [vmem:[%s3341 + $0x4] sm:$0xf]
        %v3344 = vld [vmem:[%s3341 + $0x8] sm:$0xf]
        %v3345 = vld [vmem:[%s3341 + $0xc] sm:$0xf]
        %v3346 = vld [vmem:[%s3341 + $0x10] sm:$0xf]
        %v3347 = vld [vmem:[%s3341 + $0x14] sm:$0xf]
        %v3348 = vld [vmem:[%s3341 + $0x18] sm:$0xf]
        %v3349 = vld [vmem:[%s3341 + $0x1c] sm:$0xf]
        %v3350 = vpack.c.bf16 %v3340, %v3340
        %s3351 = scalar_lea.vmem %s49, 1
        %v3352 = vld [vmem:[%s3351] sm:$0x1]
        %v3361 = vunpack.c.l.b16 %v3342
        %v3362 = vunpack.c.l.b16 %v3343
        %v3363 = vunpack.c.l.b16 %v3344
        %v3364 = vunpack.c.l.b16 %v3345
        %v3365 = vunpack.c.l.b16 %v3346
        %v3366 = vunpack.c.l.b16 %v3347
        %v3367 = vunpack.c.l.b16 %v3348
        %v3368 = vunpack.c.l.b16 %v3349
        %v3369 = vpack.c.b16 %v3362, %v3361
        %v3370 = vpack.c.b16 %v3364, %v3363
        %v3371 = vpack.c.b16 %v3366, %v3365
        %v3372 = vpack.c.b16 %v3368, %v3367
        %v3378 = vsel %vm1439, %v3350, 0
        %3380 = vmatprep.subr.bf16.mxu0 0
        %3381 = vmatpush1.bf16.msra.mxu0 %v3369
        %3382 = vmatprep.subr.bf16.mxu0 0
        %3383 = vmatpush1.bf16.msra.mxu0 %v3370
        %3384 = vmatprep.subr.bf16.mxu0 0
        %3385 = vmatpush1.bf16.msra.mxu0 %v3371
        %3386 = vmatprep.subr.bf16.mxu0 0
        %3387 = vmatpush1.bf16.msra.mxu0 %v3372
        %3388 = vmatprep.subr.bf16.mxu0 0
        %3389 = vmatpush1.bf16.msra.mxu0 0
        %3390 = vmatprep.subr.bf16.mxu0 0
        %3391 = vmatpush1.bf16.msra.mxu0 0
        %3392 = vmatprep.subr.bf16.mxu0 0
        %3393 = vmatpush1.bf16.msra.mxu0 0
        %3394 = vmatprep.subr.bf16.mxu0 0
        %3395 = vmatpush1.bf16.msra.mxu0 0
        %3396 = vmatprep.subr.bf16.mxu0 0
        %3397 = vmatpush1.bf16.msra.mxu0 0
        %3398 = vmatprep.subr.bf16.mxu0 0
        %3399 = vmatpush1.bf16.msra.mxu0 0
        %3400 = vmatprep.subr.bf16.mxu0 0
        %3401 = vmatpush1.bf16.msra.mxu0 0
        %3402 = vmatprep.subr.bf16.mxu0 0
        %3403 = vmatpush1.bf16.msra.mxu0 0
        %3404 = vmatprep.subr.bf16.mxu0 0
        %3405 = vmatpush1.bf16.msra.mxu0 0
        %3406 = vmatprep.subr.bf16.mxu0 0
        %3407 = vmatpush1.bf16.msra.mxu0 0
        %3408 = vmatprep.subr.bf16.mxu0 0
        %3409 = vmatpush1.bf16.msra.mxu0 0
        %3410 = vmatprep.subr.bf16.mxu0 0
        %3411 = vmatpush1.bf16.msra.mxu0 0
        %3412 = vmatprep.mubr.bf16.mxu0 0
        %3413 = vmatmul.mubr.bf16.gmra.mrb[0].mxu0 %v3378
        %v3414 = vpop.f32.mrb[0].mxu0
        %v3415 = vadd.f32 %v3352, %v3414
        %v3416 = vpop.f32.mrb[0].mxu0
        %v3417 = vpop.f32.mrb[0].mxu0
        %v3418 = vpop.f32.mrb[0].mxu0
        %3419 = vdwg.mxu0
        %v3420 = vlaneseq
        %v3421 = vshrl.u32 %v3420, 7
        %v3422 = vsub.s32 0, %v3421
        %v3423 = vrot.slane %v3415, %v3422
        %v3424 = vadd.f32 %v3236, %v3423
        %s3425 = scalar_lea.vmem %s51, 1
        %v3426 = vld [vmem:[%s3425] sm:$0x1]
        %s3427 = scalar_lea.vmem %s53, 1
        %v3428 = vld [vmem:[%s3427] sm:$0x1]
        %v3429 = vsel %vm1439, %v3424, 0.0
        %3430 = vadd.xlane.f32.xlu0 %v3429
        %v3431 = vpop.xlane.xlu0 %3430
        %v3432 = vmul.f32 %v3431, %v1443
        %v3433 = vsub.f32 %v3424, %v3432
        %v3434 = vmul.f32 %v3433, %v3433
        %v3435 = vsel %vm1439, %v3434, 0.0
        %3436 = vadd.xlane.f32.xlu0 %v3435
        %v3437 = vpop.xlane.xlu0 %3436
        %v3438 = vmul.f32 %v3437, %v1443
        %v3439 = vadd.f32 %v3438, 1e-05
        %v3440 = vrsqrt.pop %v3439
        %v3441 = vmul.f32 %v3433, %v3440
        %v3443 = vlaneseq
        %v3444 = vshrl.u32 %v3443, 7
        %v3445 = vsub.s32 0, %v3444
        %v3446 = vrot.slane %v3426, %v3445
        %v3448 = vmul.f32 %v3441, %v3446
        %v3450 = vlaneseq
        %v3451 = vshrl.u32 %v3450, 7
        %v3452 = vsub.s32 0, %v3451
        %v3453 = vrot.slane %v3428, %v3452
        %v3455 = vadd.f32 %v3448, %v3453
        %s3456 = scalar_lea.vmem %s55, 32
        %v3457 = vld [vmem:[%s3456] sm:$0xf]
        %v3458 = vld [vmem:[%s3456 + $0x4] sm:$0xf]
        %v3459 = vld [vmem:[%s3456 + $0x8] sm:$0xf]
        %v3460 = vld [vmem:[%s3456 + $0xc] sm:$0xf]
        %v3461 = vld [vmem:[%s3456 + $0x10] sm:$0xf]
        %v3462 = vld [vmem:[%s3456 + $0x14] sm:$0xf]
        %v3463 = vld [vmem:[%s3456 + $0x18] sm:$0xf]
        %v3464 = vld [vmem:[%s3456 + $0x1c] sm:$0xf]
        %v3465 = vpack.c.bf16 %v3455, %v3455
        %v3466 = vlaneseq
        %v3467 = vshrl.u32 %v3466, 7
        %v3468 = vsub.s32 1, %v3467
        %v3469 = vrot.slane %v1436, %v3468
        %v3478 = vunpack.c.l.b16 %v3457
        %v3479 = vunpack.c.l.b16 %v3458
        %v3480 = vunpack.c.l.b16 %v3459
        %v3481 = vunpack.c.l.b16 %v3460
        %v3482 = vunpack.c.l.b16 %v3461
        %v3483 = vunpack.c.l.b16 %v3462
        %v3484 = vunpack.c.l.b16 %v3463
        %v3485 = vunpack.c.l.b16 %v3464
        %v3486 = vpack.c.b16 %v3479, %v3478
        %v3487 = vpack.c.b16 %v3481, %v3480
        %v3488 = vpack.c.b16 %v3483, %v3482
        %v3489 = vpack.c.b16 %v3485, %v3484
        %v3495 = vsel %vm1439, %v3465, 0
        %3497 = vmatprep.subr.bf16.mxu0 0
        %3498 = vmatpush1.bf16.msra.mxu0 %v3486
        %3499 = vmatprep.subr.bf16.mxu0 0
        %3500 = vmatpush1.bf16.msra.mxu0 %v3487
        %3501 = vmatprep.subr.bf16.mxu0 0
        %3502 = vmatpush1.bf16.msra.mxu0 %v3488
        %3503 = vmatprep.subr.bf16.mxu0 0
        %3504 = vmatpush1.bf16.msra.mxu0 %v3489
        %3505 = vmatprep.subr.bf16.mxu0 0
        %3506 = vmatpush1.bf16.msra.mxu0 0
        %3507 = vmatprep.subr.bf16.mxu0 0
        %3508 = vmatpush1.bf16.msra.mxu0 0
        %3509 = vmatprep.subr.bf16.mxu0 0
        %3510 = vmatpush1.bf16.msra.mxu0 0
        %3511 = vmatprep.subr.bf16.mxu0 0
        %3512 = vmatpush1.bf16.msra.mxu0 0
        %3513 = vmatprep.subr.bf16.mxu0 0
        %3514 = vmatpush1.bf16.msra.mxu0 0
        %3515 = vmatprep.subr.bf16.mxu0 0
        %3516 = vmatpush1.bf16.msra.mxu0 0
        %3517 = vmatprep.subr.bf16.mxu0 0
        %3518 = vmatpush1.bf16.msra.mxu0 0
        %3519 = vmatprep.subr.bf16.mxu0 0
        %3520 = vmatpush1.bf16.msra.mxu0 0
        %3521 = vmatprep.subr.bf16.mxu0 0
        %3522 = vmatpush1.bf16.msra.mxu0 0
        %3523 = vmatprep.subr.bf16.mxu0 0
        %3524 = vmatpush1.bf16.msra.mxu0 0
        %3525 = vmatprep.subr.bf16.mxu0 0
        %3526 = vmatpush1.bf16.msra.mxu0 0
        %3527 = vmatprep.subr.bf16.mxu0 0
        %3528 = vmatpush1.bf16.msra.mxu0 0
        %3529 = vmatprep.mubr.bf16.mxu0 0
        %3530 = vmatmul.mubr.bf16.gmra.mrb[0].mxu0 %v3495
        %v3531 = vpop.f32.mrb[0].mxu0
        %v3532 = vadd.f32 %v3469, %v3531
        %v3533 = vpop.f32.mrb[0].mxu0
        %v3534 = vpop.f32.mrb[0].mxu0
        %v3535 = vpop.f32.mrb[0].mxu0
        %3536 = vdwg.mxu0
        %v3537 = vmul.f32 %v3532, 0.1
        %v3538 = vmax.f32 %v3532, %v3537
        %s3539 = scalar_lea.vmem %s57, 16
        %v3540 = vld [vmem:[%s3539] sm:$0xf]
        %v3541 = vld [vmem:[%s3539 + $0x4] sm:$0xf]
        %v3542 = vld [vmem:[%s3539 + $0x8] sm:$0xf]
        %v3543 = vld [vmem:[%s3539 + $0xc] sm:$0xf]
        %v3544 = vpack.c.bf16 %v3538, %v3538
        %v3549 = vunpack.c.l.b16 %v3540
        %v3550 = vunpack.c.l.b16 %v3541
        %v3551 = vunpack.c.l.b16 %v3542
        %v3552 = vunpack.c.l.b16 %v3543
        %v3553 = vpack.c.b16 %v3550, %v3549
        %v3554 = vpack.c.b16 %v3552, %v3551
        %v3558 = vsel %vm1384, %v3544, 0
        %3560 = vmatprep.subr.bf16.mxu0 0
        %3561 = vmatpush1.bf16.msra.mxu0 %v3553
        %3562 = vmatprep.subr.bf16.mxu0 0
        %3563 = vmatpush1.bf16.msra.mxu0 %v3554
        %3564 = vmatprep.subr.bf16.mxu0 0
        %3565 = vmatpush1.bf16.msra.mxu0 0
        %3566 = vmatprep.subr.bf16.mxu0 0
        %3567 = vmatpush1.bf16.msra.mxu0 0
        %3568 = vmatprep.subr.bf16.mxu0 0
        %3569 = vmatpush1.bf16.msra.mxu0 0
        %3570 = vmatprep.subr.bf16.mxu0 0
        %3571 = vmatpush1.bf16.msra.mxu0 0
        %3572 = vmatprep.subr.bf16.mxu0 0
        %3573 = vmatpush1.bf16.msra.mxu0 0
        %3574 = vmatprep.subr.bf16.mxu0 0
        %3575 = vmatpush1.bf16.msra.mxu0 0
        %3576 = vmatprep.subr.bf16.mxu0 0
        %3577 = vmatpush1.bf16.msra.mxu0 0
        %3578 = vmatprep.subr.bf16.mxu0 0
        %3579 = vmatpush1.bf16.msra.mxu0 0
        %3580 = vmatprep.subr.bf16.mxu0 0
        %3581 = vmatpush1.bf16.msra.mxu0 0
        %3582 = vmatprep.subr.bf16.mxu0 0
        %3583 = vmatpush1.bf16.msra.mxu0 0
        %3584 = vmatprep.subr.bf16.mxu0 0
        %3585 = vmatpush1.bf16.msra.mxu0 0
        %3586 = vmatprep.subr.bf16.mxu0 0
        %3587 = vmatpush1.bf16.msra.mxu0 0
        %3588 = vmatprep.subr.bf16.mxu0 0
        %3589 = vmatpush1.bf16.msra.mxu0 0
        %3590 = vmatprep.subr.bf16.mxu0 0
        %3591 = vmatpush1.bf16.msra.mxu0 0
        %3592 = vmatprep.mubr.bf16.mxu0 0
        %3593 = vmatmul.mubr.bf16.gmra.mrb[0].mxu0 %v3558
        %v3594 = vpop.f32.mrb[0].mxu0
        %v3595 = vadd.f32 0.0, %v3594
        %v3596 = vpop.f32.mrb[0].mxu0
        %v3597 = vpop.f32.mrb[0].mxu0
        %v3598 = vpop.f32.mrb[0].mxu0
        %3599 = vdwg.mxu0
        %v3600 = vadd.f32 %v3424, %v3595
        %s3601 = scalar_lea.vmem %s59, 1
        %v3602 = vld [vmem:[%s3601] sm:$0x1]
        %v3604 = vlaneseq
        %v3605 = vshrl.u32 %v3604, 7
        %v3606 = vsub.s32 0, %v3605
        %v3607 = vrot.slane %v3602, %v3606
        %v3609 = vadd.f32 %v3600, %v3607
        %v3610 = vld [vmem:[%s61] sm:$0x1]
        %v3611 = vld [vmem:[%s63] sm:$0x1]
        %v3612 = vsel %vm1439, %v3609, 0.0
        %3613 = vadd.xlane.f32.xlu0 %v3612
        %v3614 = vpop.xlane.xlu0 %3613
        %v3615 = vmul.f32 %v3614, %v1443
        %v3616 = vsub.f32 %v3609, %v3615
        %v3617 = vmul.f32 %v3616, %v3616
        %v3618 = vsel %vm1439, %v3617, 0.0
        %3619 = vadd.xlane.f32.xlu0 %v3618
        %v3620 = vpop.xlane.xlu0 %3619
        %v3621 = vmul.f32 %v3620, %v1443
        %v3622 = vadd.f32 %v3621, 1e-05
        %v3623 = vrsqrt.pop %v3622
        %v3624 = vmul.f32 %v3616, %v3623
        %v3626 = vlaneseq
        %v3627 = vshrl.u32 %v3626, 7
        %v3628 = vsub.s32 0, %v3627
        %v3629 = vrot.slane %v3610, %v3628
        %v3631 = vmul.f32 %v3624, %v3629
        %v3633 = vlaneseq
        %v3634 = vshrl.u32 %v3633, 7
        %v3635 = vsub.s32 0, %v3634
        %v3636 = vrot.slane %v3611, %v3635
        %v3638 = vadd.f32 %v3631, %v3636
        %v3639 = vld [vmem:[%s65] sm:$0xf]
        %v3640 = vld [vmem:[%s65 + $0x4] sm:$0xf]
        %v3641 = vld [vmem:[%s65 + $0x8] sm:$0xf]
        %v3642 = vld [vmem:[%s65 + $0xc] sm:$0xf]
        %v3643 = vld [vmem:[%s65 + $0x10] sm:$0xf]
        %v3644 = vld [vmem:[%s65 + $0x14] sm:$0xf]
        %v3645 = vld [vmem:[%s65 + $0x18] sm:$0xf]
        %v3646 = vld [vmem:[%s65 + $0x1c] sm:$0xf]
        %v3647 = vpack.c.bf16 %v3638, %v3638
        %v3648 = vld [vmem:[%s1300] sm:$0x1]
        %v3650 = vlaneseq
        %v3651 = vshrl.u32 %v3650, 7
        %v3652 = vsub.s32 0, %v3651
        %v3653 = vrot.slane %v3648, %v3652
        %v3663 = vunpack.c.l.b16 %v3639
        %v3664 = vunpack.c.l.b16 %v3640
        %v3665 = vunpack.c.l.b16 %v3641
        %v3666 = vunpack.c.l.b16 %v3642
        %v3667 = vunpack.c.l.b16 %v3643
        %v3668 = vunpack.c.l.b16 %v3644
        %v3669 = vunpack.c.l.b16 %v3645
        %v3670 = vunpack.c.l.b16 %v3646
        %v3671 = vpack.c.b16 %v3664, %v3663
        %v3672 = vpack.c.b16 %v3666, %v3665
        %v3673 = vpack.c.b16 %v3668, %v3667
        %v3674 = vpack.c.b16 %v3670, %v3669
        %v3680 = vsel %vm1439, %v3647, 0
        %3682 = vmatprep.subr.bf16.mxu0 0
        %3683 = vmatpush1.bf16.msra.mxu0 %v3671
        %3684 = vmatprep.subr.bf16.mxu0 0
        %3685 = vmatpush1.bf16.msra.mxu0 %v3672
        %3686 = vmatprep.subr.bf16.mxu0 0
        %3687 = vmatpush1.bf16.msra.mxu0 %v3673
        %3688 = vmatprep.subr.bf16.mxu0 0
        %3689 = vmatpush1.bf16.msra.mxu0 %v3674
        %3690 = vmatprep.subr.bf16.mxu0 0
        %3691 = vmatpush1.bf16.msra.mxu0 0
        %3692 = vmatprep.subr.bf16.mxu0 0
        %3693 = vmatpush1.bf16.msra.mxu0 0
        %3694 = vmatprep.subr.bf16.mxu0 0
        %3695 = vmatpush1.bf16.msra.mxu0 0
        %3696 = vmatprep.subr.bf16.mxu0 0
        %3697 = vmatpush1.bf16.msra.mxu0 0
        %3698 = vmatprep.subr.bf16.mxu0 0
        %3699 = vmatpush1.bf16.msra.mxu0 0
        %3700 = vmatprep.subr.bf16.mxu0 0
        %3701 = vmatpush1.bf16.msra.mxu0 0
        %3702 = vmatprep.subr.bf16.mxu0 0
        %3703 = vmatpush1.bf16.msra.mxu0 0
        %3704 = vmatprep.subr.bf16.mxu0 0
        %3705 = vmatpush1.bf16.msra.mxu0 0
        %3706 = vmatprep.subr.bf16.mxu0 0
        %3707 = vmatpush1.bf16.msra.mxu0 0
        %3708 = vmatprep.subr.bf16.mxu0 0
        %3709 = vmatpush1.bf16.msra.mxu0 0
        %3710 = vmatprep.subr.bf16.mxu0 0
        %3711 = vmatpush1.bf16.msra.mxu0 0
        %3712 = vmatprep.subr.bf16.mxu0 0
        %3713 = vmatpush1.bf16.msra.mxu0 0
        %3714 = vmatprep.mubr.bf16.mxu0 0
        %3715 = vmatmul.mubr.bf16.gmra.mrb[0].mxu0 %v3680
        %v3716 = vpop.f32.mrb[0].mxu0
        %v3717 = vadd.f32 %v3653, %v3716
        %v3718 = vpop.f32.mrb[0].mxu0
        %v3719 = vpop.f32.mrb[0].mxu0
        %v3720 = vpop.f32.mrb[0].mxu0
        %3721 = vdwg.mxu0
        %v3722 = vmul.f32 %v3717, 0.1
        %v3723 = vmax.f32 %v3717, %v3722
        %v3724 = vld [vmem:[%s67] sm:$0xf]
        %v3725 = vld [vmem:[%s67 + $0x4] sm:$0xf]
        %v3726 = vld [vmem:[%s67 + $0x8] sm:$0xf]
        %v3727 = vld [vmem:[%s67 + $0xc] sm:$0xf]
        %v3728 = vpack.c.bf16 %v3723, %v3723
        %v3729 = vld [vmem:[%s69] sm:$0x1]
        %v3731 = vlaneseq
        %v3732 = vshrl.u32 %v3731, 7
        %v3733 = vsub.s32 0, %v3732
        %v3734 = vrot.slane %v3729, %v3733
        %v3740 = vunpack.c.l.b16 %v3724
        %v3741 = vunpack.c.l.b16 %v3725
        %v3742 = vunpack.c.l.b16 %v3726
        %v3743 = vunpack.c.l.b16 %v3727
        %v3744 = vpack.c.b16 %v3741, %v3740
        %v3745 = vpack.c.b16 %v3743, %v3742
        %v3749 = vsel %vm1384, %v3728, 0
        %3751 = vmatprep.subr.bf16.mxu0 0
        %3752 = vmatpush1.bf16.msra.mxu0 %v3744
        %3753 = vmatprep.subr.bf16.mxu0 0
        %3754 = vmatpush1.bf16.msra.mxu0 %v3745
        %3755 = vmatprep.subr.bf16.mxu0 0
        %3756 = vmatpush1.bf16.msra.mxu0 0
        %3757 = vmatprep.subr.bf16.mxu0 0
        %3758 = vmatpush1.bf16.msra.mxu0 0
        %3759 = vmatprep.subr.bf16.mxu0 0
        %3760 = vmatpush1.bf16.msra.mxu0 0
        %3761 = vmatprep.subr.bf16.mxu0 0
        %3762 = vmatpush1.bf16.msra.mxu0 0
        %3763 = vmatprep.subr.bf16.mxu0 0
        %3764 = vmatpush1.bf16.msra.mxu0 0
        %3765 = vmatprep.subr.bf16.mxu0 0
        %3766 = vmatpush1.bf16.msra.mxu0 0
        %3767 = vmatprep.subr.bf16.mxu0 0
        %3768 = vmatpush1.bf16.msra.mxu0 0
        %3769 = vmatprep.subr.bf16.mxu0 0
        %3770 = vmatpush1.bf16.msra.mxu0 0
        %3771 = vmatprep.subr.bf16.mxu0 0
        %3772 = vmatpush1.bf16.msra.mxu0 0
        %3773 = vmatprep.subr.bf16.mxu0 0
        %3774 = vmatpush1.bf16.msra.mxu0 0
        %3775 = vmatprep.subr.bf16.mxu0 0
        %3776 = vmatpush1.bf16.msra.mxu0 0
        %3777 = vmatprep.subr.bf16.mxu0 0
        %3778 = vmatpush1.bf16.msra.mxu0 0
        %3779 = vmatprep.subr.bf16.mxu0 0
        %3780 = vmatpush1.bf16.msra.mxu0 0
        %3781 = vmatprep.subr.bf16.mxu0 0
        %3782 = vmatpush1.bf16.msra.mxu0 0
        %3783 = vmatprep.mubr.bf16.mxu0 0
        %3784 = vmatmul.mubr.bf16.gmra.mrb[0].mxu0 %v3749
        %v3785 = vpop.f32.mrb[0].mxu0
        %v3786 = vadd.f32 %v3734, %v3785
        %v3787 = vpop.f32.mrb[0].mxu0
        %v3788 = vpop.f32.mrb[0].mxu0
        %v3789 = vpop.f32.mrb[0].mxu0
        %3790 = vdwg.mxu0
        %v3791 = vmul.f32 %v3786, %v1433
        %vm3792 = vcmask 48128
        %3793 = vst.msk [vmem:[%s1304] sm:$0xff] %vm3792, %v3791
        %p3794 = scmp.lt.s32.totalorder %s90, 1
        %s3795 = scalar_select %p3794, %s90, 1
        %s3796 = smul.addr %s3795, 8
        %s3797 = scalar_lea.vmem %s71, %s3796
        // Predicated region
        $region205: #{full_transformer_vector_decoder.1} parent=159 // pred_check
          %p3798 = pneg %p873
        $region206: #{full_transformer_vector_decoder.1} parent=159 // pred_check_branch
          %3800 = sbr.rel (%p3798) target = $region208
        $region207: #{full_transformer_vector_decoder.1} parent=159 // pred_region
          _
        $region208: #{full_transformer_vector_decoder.1} parent=159 // pred_fallthru
          _
      $region160: #{full_transformer_vector_decoder.1} parent=5 // pred_fallthru
        _
      %p3801 = scmp.le.s32.totalorder 2, %s85
      // Predicated region
      $region209: #{full_transformer_vector_decoder.1} parent=5 // pred_check
        %p3802 = pneg %p3801
      $region210: #{full_transformer_vector_decoder.1} parent=5 // pred_check_branch
        %3804 = sbr.rel (%p3802) target = $region212
      $region211: #{full_transformer_vector_decoder.1} parent=5 // pred_region
        %s3805 = ssub.s32 %s85, 2
        // Predicated region
        $region213: #{full_transformer_vector_decoder.1} parent=211 // pred_check
          %p3806 = pneg %p879
        $region214: #{full_transformer_vector_decoder.1} parent=211 // pred_check_branch
          %3808 = sbr.rel (%p3806) target = $region216
        $region215: #{full_transformer_vector_decoder.1} parent=211 // pred_region
          %p3809 = scmp.lt.s32.totalorder %s91, 1
          %s3810 = scalar_select %p3809, %s91, 1
          %s3811 = smul.addr %s3810, 8
          %s3812 = scalar_lea.vmem %s71, %s3811
        $region216: #{full_transformer_vector_decoder.1} parent=211 // pred_fallthru
          _
      $region212: #{full_transformer_vector_decoder.1} parent=5 // pred_fallthru
        _
    $region6: #{full_transformer_vector_decoder.1} parent=1 // loop_footer
      %s89 = sadd.s32 1, %s85
    $region7: #{full_transformer_vector_decoder.1} parent=1 // loop_footer_branch
      %84 = sbr.rel target = $region3
    $region8: #{full_transformer_vector_decoder.1} parent=1 // loop_exit
      _
    %3813 = vsyncpa [#allocation3], 1
    %s3814 = scalar_lea.sflag [#allocation3], 1
    %3815 = vsyncpa %s3814, 1
    %3816 = vsyncpa [#allocation5], 1
    %3817 = vsyncpa [#allocation8], 1
    %3818 = vsyncpa [#allocation11], 1
    %3819 = vsyncpa [#allocation14], 1
    %3820 = vsyncpa [#allocation17], 1

</llo_original>
